<compile_context>
chip_gen: v7x
topology: tpu7x:2x2x1
jax: 0.10.0
libtpu: 0.0.40
codegen_flags: <defaults>
</compile_context>

<pallas_src>
import jax
import jax.numpy as jnp
import numpy as np
from jax import lax
from jax.experimental import pallas as pl
from jax.experimental.pallas import tpu as pltpu


# ----------------------------------------------------------------------------
# Pallas kernel
# ----------------------------------------------------------------------------
def _one_conv_kernel(x_ref, w_ref, b_ref, a_ref, o_ref):
    """3x3 conv (9 shifted MXU matmuls) + bias + PReLU + channel concat.

    x_ref: (1, H+2, W+2, G0)   zero-padded input, one batch element (NHWC)
    w_ref: (9, G0, G)          conv taps, tap (dy, dx) at index dy*3+dx
    b_ref: (1, G)              conv bias
    a_ref: (1,)                PReLU alpha (scalar, SMEM)
    o_ref: (1, TR, W, G0+G)    output row block: [x | PReLU(conv(x))]
    """
    TR, W = o_ref.shape[1], o_ref.shape[2]
    G0 = x_ref.shape[3]
    G = w_ref.shape[2]
    r0 = pl.program_id(1) * TR            # first output row of this block

    # --- concat part 1: pass x through unchanged -----------------------------
    # padded rows [r0+1, r0+1+TR), cols [1, 1+W) == original x rows of block.
    o_ref[0, :, :, :G0] = x_ref[0, pl.ds(r0 + 1, TR), pl.ds(1, W), :]

    # --- concat part 2: 3x3 conv + bias + PReLU -------------------------------
    # one (TR*W, G0) x (G0, G) MXU matmul per tap; acc initialized by tap 0.
    acc = None
    for dy in range(3):
        for dx in range(3):
            patch = x_ref[0, pl.ds(r0 + dy, TR), pl.ds(dx, W), :]    # (TR, W, G0)
            t = jnp.dot(patch.reshape(TR * W, G0), w_ref[dy * 3 + dx],
                        preferred_element_type=jnp.float32)
            acc = t if acc is None else acc + t                      # (TR*W, G)

    y = acc + b_ref[...]                                             # bias
    y = jnp.where(y > 0.0, y, y * a_ref[0])                          # PReLU (scalar alpha)
    o_ref[0, :, :, G0:] = y.reshape(TR, W, G).astype(o_ref.dtype)


# ----------------------------------------------------------------------------
# Wrapper (NCHW in / NCHW out, PyTorch parameter layout)
# ----------------------------------------------------------------------------
def one_conv_forward(x_nchw, conv_w_oihw, conv_b, prelu_alpha, *, row_block=8):
    n, g0, h, w = x_nchw.shape
    g = conv_w_oihw.shape[0]

    x = jnp.transpose(x_nchw, (0, 2, 3, 1)).astype(jnp.float32)      # NCHW -> NHWC
    xpad = jnp.pad(x, ((0, 0), (1, 1), (1, 1), (0, 0)))              # zero pad = 1
    w9 = jnp.transpose(conv_w_oihw, (2, 3, 1, 0)).reshape(9, g0, g)  # OIHW -> (9, I, O)
    w9 = w9.astype(jnp.float32)

    tr = min(row_block, h)                 # largest row block that divides H
    while h % tr:
        tr -= 1
    ctot = g0 + g

    out_nhwc = pl.pallas_call(
        _one_conv_kernel,
        out_shape=jax.ShapeDtypeStruct((n, h, w, ctot), jnp.float32),
        grid=(n, h // tr),
        in_specs=[
            pl.BlockSpec((1, h + 2, w + 2, g0), lambda i, j: (i, 0, 0, 0)),
            pl.BlockSpec((9, g0, g), lambda i, j: (0, 0, 0)),
            pl.BlockSpec((1, g), lambda i, j: (0, 0)),
            pl.BlockSpec(memory_space=pltpu.MemorySpace.SMEM),       # scalar alpha
        ],
        out_specs=pl.BlockSpec((1, tr, w, ctot), lambda i, j: (i, j, 0, 0)),
        compiler_params=pltpu.CompilerParams(
            dimension_semantics=("parallel", "parallel")),
    )(xpad, w9,
      conv_b.reshape(1, g).astype(jnp.float32),
      jnp.asarray(prelu_alpha, jnp.float32).reshape(1))

    return jnp.transpose(out_nhwc, (0, 3, 1, 2))                     # back to NCHW


# ----------------------------------------------------------------------------
# Pure-JAX reference (XLA conv) for correctness check
# ----------------------------------------------------------------------------
def reference_forward(x_nchw, conv_w_oihw, conv_b, prelu_alpha):
    y = lax.conv_general_dilated(
        x_nchw, conv_w_oihw, window_strides=(1, 1), padding=((1, 1), (1, 1)),
        dimension_numbers=("NCHW", "OIHW", "NCHW"),
        precision=lax.Precision.HIGHEST)
    y = y + conv_b.reshape(1, -1, 1, 1)
    y = jnp.where(y > 0.0, y, prelu_alpha * y)
    return jnp.concatenate([x_nchw, y], axis=1)


# ----------------------------------------------------------------------------
if __name__ == "__main__":
    key = jax.random.PRNGKey(0)
    kx, kw, kb = jax.random.split(key, 3)

    # one_conv(G0=128, G=32) on a small 32x32 feature map, batch 2.
    N, G0, G, H, W = 2, 128, 32, 32, 32
    x = 0.5 * jax.random.normal(kx, (N, G0, H, W), jnp.float32)
    conv_w = 0.1 * jax.random.normal(kw, (G, G0, 3, 3), jnp.float32)  # OIHW
    conv_b = 0.1 * jax.random.normal(kb, (G,), jnp.float32)
    prelu_alpha = jnp.float32(0.25)        # nn.PReLU() default: single alpha

    out = jax.block_until_ready(one_conv_forward(x, conv_w, conv_b, prelu_alpha))
    ref = jax.block_until_ready(reference_forward(x, conv_w, conv_b, prelu_alpha))

    assert out.shape == (N, G0 + G, H, W)
    np.testing.assert_allclose(np.asarray(out), np.asarray(ref),
                               rtol=1e-3, atol=1e-3)
    print("KERNEL_OK")
</pallas_src>

<mosaic_0001>
module attributes {stable_mosaic.version = 11 : i64} {
  func.func @_one_conv_kernel(%arg0: i32, %arg1: i32, %arg2: memref<1x34x34x128xf32, #tpu.memory_space<vmem>>, %arg3: memref<9x128x32xf32, #tpu.memory_space<vmem>>, %arg4: memref<1x32xf32, #tpu.memory_space<vmem>>, %arg5: memref<1xf32, #tpu.memory_space<smem>>, %arg6: memref<1x8x32x160xf32, #tpu.memory_space<vmem>>) attributes {dimension_semantics = [#tpu.dimension_semantics<parallel>, #tpu.dimension_semantics<parallel>], iteration_bounds = array<i64: 2, 4>, scalar_prefetch = 0 : i64, scratch_operands = 0 : i64, tpu.core_type = #tpu.core_type<tc>, window_params = [{transform_indices = @transform_0, window_bounds = array<i64: 1, 34, 34, 128>}, {pipeline_mode = #tpu.pipeline_mode<synchronous>, transform_indices = @transform_1, window_bounds = array<i64: 9, 128, 32>}, {pipeline_mode = #tpu.pipeline_mode<synchronous>, transform_indices = @transform_2, window_bounds = array<i64: 1, 32>}, {transform_indices = @transform_3, window_bounds = array<i64: 1>}, {transform_indices = @transform_4, window_bounds = array<i64: 1, 8, 32, 160>}]} {
    %c8_i32 = arith.constant 8 : i32
    %0 = arith.muli %arg1, %c8_i32 : i32
    %c1_i32 = arith.constant 1 : i32
    %1 = arith.addi %0, %c1_i32 : i32
    %c0 = arith.constant 0 : index
    %2 = arith.index_cast %1 : i32 to index
    %c1 = arith.constant 1 : index
    %c0_0 = arith.constant 0 : index
    %3 = vector.load %arg2[%c0, %2, %c1, %c0_0] : memref<1x34x34x128xf32, #tpu.memory_space<vmem>>, vector<1x8x32x128xf32>
    %4 = vector.shape_cast %3 : vector<1x8x32x128xf32> to vector<8x32x128xf32>
    %c0_1 = arith.constant 0 : index
    %c0_2 = arith.constant 0 : index
    %c0_3 = arith.constant 0 : index
    %c0_4 = arith.constant 0 : index
    %5 = vector.load %arg6[%c0_1, %c0_2, %c0_3, %c0_4] : memref<1x8x32x160xf32, #tpu.memory_space<vmem>>, vector<1x8x32x128xf32>
    %6 = vector.shape_cast %5 : vector<1x8x32x128xf32> to vector<8x32x128xf32>
    %7 = vector.shape_cast %4 : vector<8x32x128xf32> to vector<1x8x32x128xf32>
    tpu.vector_store %arg6[%c0_1, %c0_2, %c0_3, %c0_4], %7 {strides = array<i32>} : memref<1x8x32x160xf32, #tpu.memory_space<vmem>>, vector<1x8x32x128xf32>,
    %c0_i32 = arith.constant 0 : i32
    %8 = arith.addi %0, %c0_i32 : i32
    %c0_5 = arith.constant 0 : index
    %9 = arith.index_cast %8 : i32 to index
    %c0_6 = arith.constant 0 : index
    %c0_7 = arith.constant 0 : index
    %10 = vector.load %arg2[%c0_5, %9, %c0_6, %c0_7] : memref<1x34x34x128xf32, #tpu.memory_space<vmem>>, vector<1x8x32x128xf32>
    %11 = vector.shape_cast %10 : vector<1x8x32x128xf32> to vector<8x32x128xf32>
    %12 = vector.shape_cast %11 : vector<8x32x128xf32> to vector<256x128xf32>
    %c0_8 = arith.constant 0 : index
    %c0_9 = arith.constant 0 : index
    %c0_10 = arith.constant 0 : index
    %13 = vector.load %arg3[%c0_8, %c0_9, %c0_10] : memref<9x128x32xf32, #tpu.memory_space<vmem>>, vector<1x128x32xf32>
    %14 = vector.shape_cast %13 : vector<1x128x32xf32> to vector<128x32xf32>
    %cst = arith.constant dense<0.000000e+00> : vector<256x32xf32>
    %15 = tpu.matmul %12, %14, %cst {dimension_numbers = #tpu.dot_dimension_numbers<[1], [0], [0], [1], [0, 0, 1, 1], [], []>} : vector<256x128xf32>, vector<128x32xf32>, vector<256x32xf32> -> vector<256x32xf32>
    %c0_i32_11 = arith.constant 0 : i32
    %16 = arith.addi %0, %c0_i32_11 : i32
    %c0_12 = arith.constant 0 : index
    %17 = arith.index_cast %16 : i32 to index
    %c1_13 = arith.constant 1 : index
    %c0_14 = arith.constant 0 : index
    %18 = vector.load %arg2[%c0_12, %17, %c1_13, %c0_14] : memref<1x34x34x128xf32, #tpu.memory_space<vmem>>, vector<1x8x32x128xf32>
    %19 = vector.shape_cast %18 : vector<1x8x32x128xf32> to vector<8x32x128xf32>
    %20 = vector.shape_cast %19 : vector<8x32x128xf32> to vector<256x128xf32>
    %c1_15 = arith.constant 1 : index
    %c0_16 = arith.constant 0 : index
    %c0_17 = arith.constant 0 : index
    %21 = vector.load %arg3[%c1_15, %c0_16, %c0_17] : memref<9x128x32xf32, #tpu.memory_space<vmem>>, vector<1x128x32xf32>
    %22 = vector.shape_cast %21 : vector<1x128x32xf32> to vector<128x32xf32>
    %cst_18 = arith.constant dense<0.000000e+00> : vector<256x32xf32>
    %23 = tpu.matmul %20, %22, %cst_18 {dimension_numbers = #tpu.dot_dimension_numbers<[1], [0], [0], [1], [0, 0, 1, 1], [], []>} : vector<256x128xf32>, vector<128x32xf32>, vector<256x32xf32> -> vector<256x32xf32>
    %24 = arith.addf %15, %23 : vector<256x32xf32>
    %c0_i32_19 = arith.constant 0 : i32
    %25 = arith.addi %0, %c0_i32_19 : i32
    %c0_20 = arith.constant 0 : index
    %26 = arith.index_cast %25 : i32 to index
    %c2 = arith.constant 2 : index
    %c0_21 = arith.constant 0 : index
    %27 = vector.load %arg2[%c0_20, %26, %c2, %c0_21] : memref<1x34x34x128xf32, #tpu.memory_space<vmem>>, vector<1x8x32x128xf32>
    %28 = vector.shape_cast %27 : vector<1x8x32x128xf32> to vector<8x32x128xf32>
    %29 = vector.shape_cast %28 : vector<8x32x128xf32> to vector<256x128xf32>
    %c2_22 = arith.constant 2 : index
    %c0_23 = arith.constant 0 : index
    %c0_24 = arith.constant 0 : index
    %30 = vector.load %arg3[%c2_22, %c0_23, %c0_24] : memref<9x128x32xf32, #tpu.memory_space<vmem>>, vector<1x128x32xf32>
    %31 = vector.shape_cast %30 : vector<1x128x32xf32> to vector<128x32xf32>
    %cst_25 = arith.constant dense<0.000000e+00> : vector<256x32xf32>
    %32 = tpu.matmul %29, %31, %cst_25 {dimension_numbers = #tpu.dot_dimension_numbers<[1], [0], [0], [1], [0, 0, 1, 1], [], []>} : vector<256x128xf32>, vector<128x32xf32>, vector<256x32xf32> -> vector<256x32xf32>
    %33 = arith.addf %24, %32 : vector<256x32xf32>
    %c1_i32_26 = arith.constant 1 : i32
    %34 = arith.addi %0, %c1_i32_26 : i32
    %c0_27 = arith.constant 0 : index
    %35 = arith.index_cast %34 : i32 to index
    %c0_28 = arith.constant 0 : index
    %c0_29 = arith.constant 0 : index
    %36 = vector.load %arg2[%c0_27, %35, %c0_28, %c0_29] : memref<1x34x34x128xf32, #tpu.memory_space<vmem>>, vector<1x8x32x128xf32>
    %37 = vector.shape_cast %36 : vector<1x8x32x128xf32> to vector<8x32x128xf32>
    %38 = vector.shape_cast %37 : vector<8x32x128xf32> to vector<256x128xf32>
    %c3 = arith.constant 3 : index
    %c0_30 = arith.constant 0 : index
    %c0_31 = arith.constant 0 : index
    %39 = vector.load %arg3[%c3, %c0_30, %c0_31] : memref<9x128x32xf32, #tpu.memory_space<vmem>>, vector<1x128x32xf32>
    %40 = vector.shape_cast %39 : vector<1x128x32xf32> to vector<128x32xf32>
    %cst_32 = arith.constant dense<0.000000e+00> : vector<256x32xf32>
    %41 = tpu.matmul %38, %40, %cst_32 {dimension_numbers = #tpu.dot_dimension_numbers<[1], [0], [0], [1], [0, 0, 1, 1], [], []>} : vector<256x128xf32>, vector<128x32xf32>, vector<256x32xf32> -> vector<256x32xf32>
    %42 = arith.addf %33, %41 : vector<256x32xf32>
    %c1_i32_33 = arith.constant 1 : i32
    %43 = arith.addi %0, %c1_i32_33 : i32
    %c0_34 = arith.constant 0 : index
    %44 = arith.index_cast %43 : i32 to index
    %c1_35 = arith.constant 1 : index
    %c0_36 = arith.constant 0 : index
    %45 = vector.load %arg2[%c0_34, %44, %c1_35, %c0_36] : memref<1x34x34x128xf32, #tpu.memory_space<vmem>>, vector<1x8x32x128xf32>
    %46 = vector.shape_cast %45 : vector<1x8x32x128xf32> to vector<8x32x128xf32>
    %47 = vector.shape_cast %46 : vector<8x32x128xf32> to vector<256x128xf32>
    %c4 = arith.constant 4 : index
    %c0_37 = arith.constant 0 : index
    %c0_38 = arith.constant 0 : index
    %48 = vector.load %arg3[%c4, %c0_37, %c0_38] : memref<9x128x32xf32, #tpu.memory_space<vmem>>, vector<1x128x32xf32>
    %49 = vector.shape_cast %48 : vector<1x128x32xf32> to vector<128x32xf32>
    %cst_39 = arith.constant dense<0.000000e+00> : vector<256x32xf32>
    %50 = tpu.matmul %47, %49, %cst_39 {dimension_numbers = #tpu.dot_dimension_numbers<[1], [0], [0], [1], [0, 0, 1, 1], [], []>} : vector<256x128xf32>, vector<128x32xf32>, vector<256x32xf32> -> vector<256x32xf32>
    %51 = arith.addf %42, %50 : vector<256x32xf32>
    %c1_i32_40 = arith.constant 1 : i32
    %52 = arith.addi %0, %c1_i32_40 : i32
    %c0_41 = arith.constant 0 : index
    %53 = arith.index_cast %52 : i32 to index
    %c2_42 = arith.constant 2 : index
    %c0_43 = arith.constant 0 : index
    %54 = vector.load %arg2[%c0_41, %53, %c2_42, %c0_43] : memref<1x34x34x128xf32, #tpu.memory_space<vmem>>, vector<1x8x32x128xf32>
    %55 = vector.shape_cast %54 : vector<1x8x32x128xf32> to vector<8x32x128xf32>
    %56 = vector.shape_cast %55 : vector<8x32x128xf32> to vector<256x128xf32>
    %c5 = arith.constant 5 : index
    %c0_44 = arith.constant 0 : index
    %c0_45 = arith.constant 0 : index
    %57 = vector.load %arg3[%c5, %c0_44, %c0_45] : memref<9x128x32xf32, #tpu.memory_space<vmem>>, vector<1x128x32xf32>
    %58 = vector.shape_cast %57 : vector<1x128x32xf32> to vector<128x32xf32>
    %cst_46 = arith.constant dense<0.000000e+00> : vector<256x32xf32>
    %59 = tpu.matmul %56, %58, %cst_46 {dimension_numbers = #tpu.dot_dimension_numbers<[1], [0], [0], [1], [0, 0, 1, 1], [], []>} : vector<256x128xf32>, vector<128x32xf32>, vector<256x32xf32> -> vector<256x32xf32>
    %60 = arith.addf %51, %59 : vector<256x32xf32>
    %c2_i32 = arith.constant 2 : i32
    %61 = arith.addi %0, %c2_i32 : i32
    %c0_47 = arith.constant 0 : index
    %62 = arith.index_cast %61 : i32 to index
    %c0_48 = arith.constant 0 : index
    %c0_49 = arith.constant 0 : index
    %63 = vector.load %arg2[%c0_47, %62, %c0_48, %c0_49] : memref<1x34x34x128xf32, #tpu.memory_space<vmem>>, vector<1x8x32x128xf32>
    %64 = vector.shape_cast %63 : vector<1x8x32x128xf32> to vector<8x32x128xf32>
    %65 = vector.shape_cast %64 : vector<8x32x128xf32> to vector<256x128xf32>
    %c6 = arith.constant 6 : index
    %c0_50 = arith.constant 0 : index
    %c0_51 = arith.constant 0 : index
    %66 = vector.load %arg3[%c6, %c0_50, %c0_51] : memref<9x128x32xf32, #tpu.memory_space<vmem>>, vector<1x128x32xf32>
    %67 = vector.shape_cast %66 : vector<1x128x32xf32> to vector<128x32xf32>
    %cst_52 = arith.constant dense<0.000000e+00> : vector<256x32xf32>
    %68 = tpu.matmul %65, %67, %cst_52 {dimension_numbers = #tpu.dot_dimension_numbers<[1], [0], [0], [1], [0, 0, 1, 1], [], []>} : vector<256x128xf32>, vector<128x32xf32>, vector<256x32xf32> -> vector<256x32xf32>
    %69 = arith.addf %60, %68 : vector<256x32xf32>
    %c2_i32_53 = arith.constant 2 : i32
    %70 = arith.addi %0, %c2_i32_53 : i32
    %c0_54 = arith.constant 0 : index
    %71 = arith.index_cast %70 : i32 to index
    %c1_55 = arith.constant 1 : index
    %c0_56 = arith.constant 0 : index
    %72 = vector.load %arg2[%c0_54, %71, %c1_55, %c0_56] : memref<1x34x34x128xf32, #tpu.memory_space<vmem>>, vector<1x8x32x128xf32>
    %73 = vector.shape_cast %72 : vector<1x8x32x128xf32> to vector<8x32x128xf32>
    %74 = vector.shape_cast %73 : vector<8x32x128xf32> to vector<256x128xf32>
    %c7 = arith.constant 7 : index
    %c0_57 = arith.constant 0 : index
    %c0_58 = arith.constant 0 : index
    %75 = vector.load %arg3[%c7, %c0_57, %c0_58] : memref<9x128x32xf32, #tpu.memory_space<vmem>>, vector<1x128x32xf32>
    %76 = vector.shape_cast %75 : vector<1x128x32xf32> to vector<128x32xf32>
    %cst_59 = arith.constant dense<0.000000e+00> : vector<256x32xf32>
    %77 = tpu.matmul %74, %76, %cst_59 {dimension_numbers = #tpu.dot_dimension_numbers<[1], [0], [0], [1], [0, 0, 1, 1], [], []>} : vector<256x128xf32>, vector<128x32xf32>, vector<256x32xf32> -> vector<256x32xf32>
    %78 = arith.addf %69, %77 : vector<256x32xf32>
    %c2_i32_60 = arith.constant 2 : i32
    %79 = arith.addi %0, %c2_i32_60 : i32
    %c0_61 = arith.constant 0 : index
    %80 = arith.index_cast %79 : i32 to index
    %c2_62 = arith.constant 2 : index
    %c0_63 = arith.constant 0 : index
    %81 = vector.load %arg2[%c0_61, %80, %c2_62, %c0_63] : memref<1x34x34x128xf32, #tpu.memory_space<vmem>>, vector<1x8x32x128xf32>
    %82 = vector.shape_cast %81 : vector<1x8x32x128xf32> to vector<8x32x128xf32>
    %83 = vector.shape_cast %82 : vector<8x32x128xf32> to vector<256x128xf32>
    %c8 = arith.constant 8 : index
    %c0_64 = arith.constant 0 : index
    %c0_65 = arith.constant 0 : index
    %84 = vector.load %arg3[%c8, %c0_64, %c0_65] : memref<9x128x32xf32, #tpu.memory_space<vmem>>, vector<1x128x32xf32>
    %85 = vector.shape_cast %84 : vector<1x128x32xf32> to vector<128x32xf32>
    %cst_66 = arith.constant dense<0.000000e+00> : vector<256x32xf32>
    %86 = tpu.matmul %83, %85, %cst_66 {dimension_numbers = #tpu.dot_dimension_numbers<[1], [0], [0], [1], [0, 0, 1, 1], [], []>} : vector<256x128xf32>, vector<128x32xf32>, vector<256x32xf32> -> vector<256x32xf32>
    %87 = arith.addf %78, %86 : vector<256x32xf32>
    %c0_67 = arith.constant 0 : index
    %c0_68 = arith.constant 0 : index
    %88 = vector.load %arg4[%c0_67, %c0_68] : memref<1x32xf32, #tpu.memory_space<vmem>>, vector<1x32xf32>
    %89 = vector.broadcast %88 : vector<1x32xf32> to vector<256x32xf32>
    %90 = arith.addf %87, %89 : vector<256x32xf32>
    %cst_69 = arith.constant 0.000000e+00 : f32
    %91 = vector.broadcast %cst_69 : f32 to vector<256x32xf32>
    %92 = arith.cmpf ogt, %90, %91 : vector<256x32xf32>
    %c0_70 = arith.constant 0 : index
    %93 = memref.load %arg5[%c0_70] : memref<1xf32, #tpu.memory_space<smem>>
    %94 = vector.broadcast %93 : f32 to vector<256x32xf32>
    %95 = arith.mulf %90, %94 : vector<256x32xf32>
    %96 = arith.select %92, %90, %95 : vector<256x32xi1>, vector<256x32xf32>
    %97 = vector.shape_cast %96 : vector<256x32xf32> to vector<8x32x32xf32>
    %c0_71 = arith.constant 0 : index
    %c0_72 = arith.constant 0 : index
    %c0_73 = arith.constant 0 : index
    %c128 = arith.constant 128 : index
    %98 = vector.load %arg6[%c0_71, %c0_72, %c0_73, %c128] : memref<1x8x32x160xf32, #tpu.memory_space<vmem>>, vector<1x8x32x32xf32>
    %99 = vector.shape_cast %98 : vector<1x8x32x32xf32> to vector<8x32x32xf32>
    %100 = vector.shape_cast %97 : vector<8x32x32xf32> to vector<1x8x32x32xf32>
    tpu.vector_store %arg6[%c0_71, %c0_72, %c0_73, %c128], %100 {strides = array<i32>} : memref<1x8x32x160xf32, #tpu.memory_space<vmem>>, vector<1x8x32x32xf32>,
    return
  }
  func.func @transform_0(%arg0: i32, %arg1: i32) -> (i32, i32, i32, i32) {
    %c0_i32 = arith.constant 0 : i32
    %c0_i32_0 = arith.constant 0 : i32
    %c0_i32_1 = arith.constant 0 : i32
    %c0_i32_2 = arith.constant 0 : i32
    return %arg0, %c0_i32, %c0_i32_0, %c0_i32_1 : i32, i32, i32, i32
  }
  func.func @transform_1(%arg0: i32, %arg1: i32) -> (i32, i32, i32) {
    %c0_i32 = arith.constant 0 : i32
    %c0_i32_0 = arith.constant 0 : i32
    %c0_i32_1 = arith.constant 0 : i32
    %c0_i32_2 = arith.constant 0 : i32
    return %c0_i32, %c0_i32_0, %c0_i32_1 : i32, i32, i32
  }
  func.func @transform_2(%arg0: i32, %arg1: i32) -> (i32, i32) {
    %c0_i32 = arith.constant 0 : i32
    %c0_i32_0 = arith.constant 0 : i32
    %c0_i32_1 = arith.constant 0 : i32
    return %c0_i32, %c0_i32_0 : i32, i32
  }
  func.func @transform_3(%arg0: i32, %arg1: i32) -> i32 {
    %c0_i32 = arith.constant 0 : i32
    %c0_i32_0 = arith.constant 0 : i32
    return %c0_i32 : i32
  }
  func.func @transform_4(%arg0: i32, %arg1: i32) -> (i32, i32, i32, i32) {
    %c0_i32 = arith.constant 0 : i32
    %c0_i32_0 = arith.constant 0 : i32
    %c0_i32_1 = arith.constant 0 : i32
    return %arg0, %arg1, %c0_i32, %c0_i32_0 : i32, i32, i32, i32
  }
}

</mosaic_0001>

<llo_original>
// kernel: tpu_custom_call.1
$region0: #{tpu_custom_call.1}
  #allocation0 [shape = 'u32[]', space=smem, size = 0x4, offset = 0x4, fixed_abs, tag = 'smem constant byte address 0x4 - core index']
  #allocation1 [shape = 'u32[144,128]{1,0:T(1,128)}', space=vmem, size = 0x12000, scoped, tag = 'internal scratch']
  #allocation2 [shape = 'f32[1]{0:T(128)S(6)}', space=smem, size = 0x200, scoped, tag = 'scoped memory for tpu_custom_call.1']
  %s0 = inlined_call_operand.vmem [shape: f32[2,34,34,128], index: 0, kind: input, shape index: {}]
  %s1 = inlined_call_operand.vmem [shape: f32[9,128,32], index: 1, kind: input, shape index: {}]
  %s2 = inlined_call_operand.vmem [shape: f32[1,32], index: 2, kind: input, shape index: {}]
  %s3 = inlined_call_operand.<no memory space> [shape: f32[1], index: 3, kind: input, shape index: {}]
  %s4 = inlined_call_operand.hbm [shape: f32[2,32,32,160], index: 4, kind: output, shape index: {}]
  %s5 = sld [smem:[#allocation0]]
  $region49: #{tpu_custom_call.1} parent=0
    _
  %s7 = ssub.s32 1, %s5
  %s8 = scalar_select 0, %s7, %s5
  %9 = sst [smem:[#allocation2]] %s3
  $region1: #{tpu_custom_call.1} parent=0
    #allocation3 [shape = 'u8[524288]{0}', space=vmem, size = 0x80000, scoped, tag = 'output window, operand 0']
    #allocation4 [shape = 's32[2]{0}', space=sflag, size = 0x8, scoped, tag = 'scoped memory for tpu_custom_call.1']
    %10 = vsyncpa [#allocation4], 0
    %s11 = scalar_lea.sflag [#allocation4], 1
    %12 = vsyncpa %s11, 0
    loop: start=0, step=1, limit=10
    $region2: #{tpu_custom_call.1} parent=1 // loop_pre_header
      _
    $region3: #{tpu_custom_call.1} parent=1 // loop_header
      %s14 = sphi 0, %s18
      %p15 = scmp.ge.s32.totalorder %s14, 10
      %s21 = sphi 0, %s33
      %s22 = sphi 0, %s29
      %s23 = sphi 0, %s21
      %s24 = sphi 0, %s22
      %s25 = sphi 0, %s23
      %s26 = sphi 0, %s24
      %s36 = sphi 0, %s38
      %s39 = sphi 0, %s36
      %s40 = sphi 0, %s39
      %s56 = sphi 0, %s40
      %s60 = sphi 0, %s60
      %s62 = sphi 0, %s60
      %s63 = sphi 0, %s62
      %s77 = sphi 0, %s63
      %s81 = sphi 0, %s81
      %s83 = sphi 0, %s81
      %s84 = sphi 0, %s83
      %s98 = sphi 0, %s84
      %s102 = sphi 0, %s102
      %s104 = sphi 0, %s102
      %s105 = sphi 0, %s104
      %s119 = sphi 0, %s105
      %s127 = sphi 0, %s129
      %s130 = sphi 0, %s127
      %s131 = sphi 0, %s130
      %s147 = sphi 0, %s131
    $region4: #{tpu_custom_call.1} parent=1 // loop_header_branch
      %17 = sbr.rel (%p15) target = $region8
    $region5: #{tpu_custom_call.1} parent=1 // loop_body
      %s19 = ssub.s32 %s14, 1
      %s20 = ssub.s32 %s14, 2
      %s27 = sadd.s32 1, %s22
      %p28 = scmp.ge.s32.totalorder %s27, 4
      %s29 = scalar_select %p28, 0, %s27
      %s30 = sadd.s32 1, %s21
      %s31 = scalar_select %p28, %s30, %s21
      %p32 = scmp.ge.s32.totalorder %s31, 2
      %s33 = scalar_select %p32, 0, %s31
      %s34 = ssub.s32 %s21, %s33
      %p35 = scmp.eq.s32.totalorder %s34, 0
      %s37 = sadd.s32 %s36, 1
      %s38 = scalar_select %p35, %s36, %s37
      %p41 = pneg %p35
      %p42 = scmp.eq.s32.totalorder %s14, 7
      %p43 = por %p41, %p42
      %p44 = scmp.ne.s32.totalorder %s36, %s39
      %p45 = scmp.eq.s32.totalorder %s14, 0
      %p46 = por %p44, %p45
      %p47 = scmp.ne.s32.totalorder %s36, %s39
      %p48 = scmp.eq.s32.totalorder %s19, 7
      %p49 = por %p47, %p48
      %p50 = scmp.ne.s32.totalorder %s39, %s40
      %p51 = scmp.eq.s32.totalorder %s19, 0
      %p52 = por %p50, %p51
      %p53 = scmp.ne.s32.totalorder %s39, %s40
      %p54 = scmp.eq.s32.totalorder %s20, 7
      %p55 = por %p53, %p54
      %p57 = scmp.ne.s32.totalorder %s40, %s56
      %p58 = scmp.eq.s32.totalorder %s20, 0
      %p59 = por %p57, %p58
      %s61 = sadd.s32 %s60, 1
      %p64 = scmp.eq.s32.totalorder %s14, 7
      %p65 = scmp.ne.s32.totalorder %s60, %s62
      %p66 = scmp.eq.s32.totalorder %s14, 0
      %p67 = por %p65, %p66
      %p68 = scmp.ne.s32.totalorder %s60, %s62
      %p69 = scmp.eq.s32.totalorder %s19, 7
      %p70 = por %p68, %p69
      %p71 = scmp.ne.s32.totalorder %s62, %s63
      %p72 = scmp.eq.s32.totalorder %s19, 0
      %p73 = por %p71, %p72
      %p74 = scmp.ne.s32.totalorder %s62, %s63
      %p75 = scmp.eq.s32.totalorder %s20, 7
      %p76 = por %p74, %p75
      %p78 = scmp.ne.s32.totalorder %s63, %s77
      %p79 = scmp.eq.s32.totalorder %s20, 0
      %p80 = por %p78, %p79
      %s82 = sadd.s32 %s81, 1
      %p85 = scmp.eq.s32.totalorder %s14, 7
      %p86 = scmp.ne.s32.totalorder %s81, %s83
      %p87 = scmp.eq.s32.totalorder %s14, 0
      %p88 = por %p86, %p87
      %p89 = scmp.ne.s32.totalorder %s81, %s83
      %p90 = scmp.eq.s32.totalorder %s19, 7
      %p91 = por %p89, %p90
      %p92 = scmp.ne.s32.totalorder %s83, %s84
      %p93 = scmp.eq.s32.totalorder %s19, 0
      %p94 = por %p92, %p93
      %p95 = scmp.ne.s32.totalorder %s83, %s84
      %p96 = scmp.eq.s32.totalorder %s20, 7
      %p97 = por %p95, %p96
      %p99 = scmp.ne.s32.totalorder %s84, %s98
      %p100 = scmp.eq.s32.totalorder %s20, 0
      %p101 = por %p99, %p100
      %s103 = sadd.s32 %s102, 1
      %p106 = scmp.eq.s32.totalorder %s14, 7
      %p107 = scmp.ne.s32.totalorder %s102, %s104
      %p108 = scmp.eq.s32.totalorder %s14, 0
      %p109 = por %p107, %p108
      %p110 = scmp.ne.s32.totalorder %s102, %s104
      %p111 = scmp.eq.s32.totalorder %s19, 7
      %p112 = por %p110, %p111
      %p113 = scmp.ne.s32.totalorder %s104, %s105
      %p114 = scmp.eq.s32.totalorder %s19, 0
      %p115 = por %p113, %p114
      %p116 = scmp.ne.s32.totalorder %s104, %s105
      %p117 = scmp.eq.s32.totalorder %s20, 7
      %p118 = por %p116, %p117
      %p120 = scmp.ne.s32.totalorder %s105, %s119
      %p121 = scmp.eq.s32.totalorder %s20, 0
      %p122 = por %p120, %p121
      %s123 = ssub.s32 %s21, %s33
      %s124 = ssub.s32 %s22, %s29
      %s125 = sor.u32 %s123, %s124
      %p126 = scmp.eq.s32.totalorder %s125, 0
      %s128 = sadd.s32 %s127, 1
      %s129 = scalar_select %p126, %s127, %s128
      %p132 = pneg %p126
      %p133 = scmp.eq.s32.totalorder %s14, 7
      %p134 = por %p132, %p133
      %p135 = scmp.ne.s32.totalorder %s127, %s130
      %p136 = scmp.eq.s32.totalorder %s14, 0
      %p137 = por %p135, %p136
      %p138 = scmp.ne.s32.totalorder %s127, %s130
      %p139 = scmp.eq.s32.totalorder %s19, 7
      %p140 = por %p138, %p139
      %p141 = scmp.ne.s32.totalorder %s130, %s131
      %p142 = scmp.eq.s32.totalorder %s19, 0
      %p143 = por %p141, %p142
      %p144 = scmp.ne.s32.totalorder %s130, %s131
      %p145 = scmp.eq.s32.totalorder %s20, 7
      %p146 = por %p144, %p145
      %p148 = scmp.ne.s32.totalorder %s131, %s147
      %p149 = scmp.eq.s32.totalorder %s20, 0
      %p150 = por %p148, %p149
      %p151 = scmp.le.s32.totalorder 1, %s14
      %p152 = scmp.lt.s32.totalorder %s14, 9
      %p153 = pnand %p151, %p152
      %p154 = pneg %p153
      // Predicated region
      $region9: #{tpu_custom_call.1} parent=5 // pred_check
        _
      $region10: #{tpu_custom_call.1} parent=5 // pred_check_branch
        %156 = sbr.rel (%p153) target = $region12
      $region11: #{tpu_custom_call.1} parent=5 // pred_region
        %s157 = ssub.s32 %s14, 1
        // Predicated region
        $region13: #{tpu_custom_call.1} parent=11 // pred_check
          %p158 = pneg %p73
        $region14: #{tpu_custom_call.1} parent=11 // pred_check_branch
          %160 = sbr.rel (%p158) target = $region16
        $region15: #{tpu_custom_call.1} parent=11 // pred_region
          _
        $region16: #{tpu_custom_call.1} parent=11 // pred_fallthru
          _
        // Predicated region
        $region17: #{tpu_custom_call.1} parent=11 // pred_check
          %p161 = pneg %p94
        $region18: #{tpu_custom_call.1} parent=11 // pred_check_branch
          %163 = sbr.rel (%p161) target = $region20
        $region19: #{tpu_custom_call.1} parent=11 // pred_region
          _
        $region20: #{tpu_custom_call.1} parent=11 // pred_fallthru
          _
        // Predicated region
        $region21: #{tpu_custom_call.1} parent=11 // pred_check
          %p164 = pneg %p115
        $region22: #{tpu_custom_call.1} parent=11 // pred_check_branch
          %166 = sbr.rel (%p164) target = $region24
        $region23: #{tpu_custom_call.1} parent=11 // pred_region
          _
        $region24: #{tpu_custom_call.1} parent=11 // pred_fallthru
          _
      $region12: #{tpu_custom_call.1} parent=5 // pred_fallthru
        _
      %p167 = scmp.lt.s32.totalorder %s14, 8
      // Predicated region
      $region25: #{tpu_custom_call.1} parent=5 // pred_check
        %p168 = pneg %p167
      $region26: #{tpu_custom_call.1} parent=5 // pred_check_branch
        %170 = sbr.rel (%p168) target = $region28
      $region27: #{tpu_custom_call.1} parent=5 // pred_region
        // Predicated region
        $region29: #{tpu_custom_call.1} parent=27 // pred_check
          %p171 = pneg %p46
        $region30: #{tpu_custom_call.1} parent=27 // pred_check_branch
          %173 = sbr.rel (%p171) target = $region32
        $region31: #{tpu_custom_call.1} parent=27 // pred_region
          %p174 = scmp.lt.s32.totalorder %s21, 1
          %s175 = scalar_select %p174, %s21, 1
          %s176 = smul.addr %s175, 170
          %s177 = smul.addr %s176, 8
          %s178 = scalar_lea.vmem %s0, %s177
        $region32: #{tpu_custom_call.1} parent=27 // pred_fallthru
          _
      $region28: #{tpu_custom_call.1} parent=5 // pred_fallthru
        _
      %p179 = scmp.le.s32.totalorder 1, %s14
      %p180 = scmp.lt.s32.totalorder %s14, 9
      %p181 = pnand %p179, %p180
      %p182 = pneg %p181
      // Predicated region
      $region33: #{tpu_custom_call.1} parent=5 // pred_check
        _
      $region34: #{tpu_custom_call.1} parent=5 // pred_check_branch
        %184 = sbr.rel (%p181) target = $region36
      $region35: #{tpu_custom_call.1} parent=5 // pred_region
        %s185 = ssub.s32 %s14, 1
        %p186 = scmp.lt.s32.totalorder %s23, 1
        %s187 = scalar_select %p186, %s23, 1
        %s188 = smul.addr %s187, 170
        %s189 = smul.addr %s188, 8
        %s190 = scalar_lea.vmem %s0, %s189
        %p191 = pneg %p52
        %p192 = pneg %p49
        %p193 = pneg %p73
        %p194 = pneg %p70
        %p195 = pneg %p94
        %p196 = pneg %p91
        %p197 = pneg %p115
        %p198 = pneg %p112
        %p199 = pneg %p143
        %p200 = pneg %p140
        %s201 = sand.u32 %s130, 1
        %s202 = scalar_lea.sflag [#allocation4], %s201
        %s203 = sand.u32 %s130, 1
        %s204 = smul.addr %s203, 512
        %s205 = scalar_lea.vmem [#allocation3], %s204
        %p206 = scmp.lt.s32.totalorder %s23, 1
        %s207 = scalar_select %p206, %s23, 1
        %s208 = smul.addr %s207, 170
        %s209 = smul.addr %s208, 8
        %s210 = scalar_lea.vmem %s0, %s209
        %s211 = smul.u32 8, %s24
        %s212 = smul.u32 %s24, 8
        %s213 = sadd.s32 %s212, 1
        %s214 = smul.u32 %s213, 40
        %s215 = scalar_lea.vmem %s210, %s214
        %v216 = vld [vmem:[%s215 + $0x1] sm:$0xff]
        %v217 = vld [vmem:[%s215 + $0x9] sm:$0xff]
        %v218 = vld [vmem:[%s215 + $0x11] sm:$0xff]
        %v219 = vld [vmem:[%s215 + $0x19] sm:$0xff]
        %v220 = vld [vmem:[%s215 + $0x29] sm:$0xff]
        %v221 = vld [vmem:[%s215 + $0x31] sm:$0xff]
        %v222 = vld [vmem:[%s215 + $0x39] sm:$0xff]
        %v223 = vld [vmem:[%s215 + $0x41] sm:$0xff]
        %v224 = vld [vmem:[%s215 + $0x51] sm:$0xff]
        %v225 = vld [vmem:[%s215 + $0x59] sm:$0xff]
        %v226 = vld [vmem:[%s215 + $0x61] sm:$0xff]
        %v227 = vld [vmem:[%s215 + $0x69] sm:$0xff]
        %v228 = vld [vmem:[%s215 + $0x79] sm:$0xff]
        %v229 = vld [vmem:[%s215 + $0x81] sm:$0xff]
        %v230 = vld [vmem:[%s215 + $0x89] sm:$0xff]
        %v231 = vld [vmem:[%s215 + $0x91] sm:$0xff]
        %v232 = vld [vmem:[%s215 + $0xa1] sm:$0xff]
        %v233 = vld [vmem:[%s215 + $0xa9] sm:$0xff]
        %v234 = vld [vmem:[%s215 + $0xb1] sm:$0xff]
        %v235 = vld [vmem:[%s215 + $0xb9] sm:$0xff]
        %v236 = vld [vmem:[%s215 + $0xc9] sm:$0xff]
        %v237 = vld [vmem:[%s215 + $0xd1] sm:$0xff]
        %v238 = vld [vmem:[%s215 + $0xd9] sm:$0xff]
        %v239 = vld [vmem:[%s215 + $0xe1] sm:$0xff]
        %v240 = vld [vmem:[%s215 + $0xf1] sm:$0xff]
        %v241 = vld [vmem:[%s215 + $0xf9] sm:$0xff]
        %v242 = vld [vmem:[%s215 + $0x101] sm:$0xff]
        %v243 = vld [vmem:[%s215 + $0x109] sm:$0xff]
        %v244 = vld [vmem:[%s215 + $0x119] sm:$0xff]
        %v245 = vld [vmem:[%s215 + $0x121] sm:$0xff]
        %v246 = vld [vmem:[%s215 + $0x129] sm:$0xff]
        %v247 = vld [vmem:[%s215 + $0x131] sm:$0xff]
        %248 = vst [vmem:[%s205] sm:$0xff] %v216
        %249 = vst [vmem:[%s205 + $0x10] sm:$0xff] %v217
        %250 = vst [vmem:[%s205 + $0x20] sm:$0xff] %v218
        %251 = vst [vmem:[%s205 + $0x30] sm:$0xff] %v219
        %252 = vst [vmem:[%s205 + $0x40] sm:$0xff] %v220
        %253 = vst [vmem:[%s205 + $0x50] sm:$0xff] %v221
        %254 = vst [vmem:[%s205 + $0x60] sm:$0xff] %v222
        %255 = vst [vmem:[%s205 + $0x70] sm:$0xff] %v223
        %256 = vst [vmem:[%s205 + $0x80] sm:$0xff] %v224
        %257 = vst [vmem:[%s205 + $0x90] sm:$0xff] %v225
        %258 = vst [vmem:[%s205 + $0xa0] sm:$0xff] %v226
        %259 = vst [vmem:[%s205 + $0xb0] sm:$0xff] %v227
        %260 = vst [vmem:[%s205 + $0xc0] sm:$0xff] %v228
        %261 = vst [vmem:[%s205 + $0xd0] sm:$0xff] %v229
        %262 = vst [vmem:[%s205 + $0xe0] sm:$0xff] %v230
        %263 = vst [vmem:[%s205 + $0xf0] sm:$0xff] %v231
        %264 = vst [vmem:[%s205 + $0x100] sm:$0xff] %v232
        %265 = vst [vmem:[%s205 + $0x110] sm:$0xff] %v233
        %266 = vst [vmem:[%s205 + $0x120] sm:$0xff] %v234
        %267 = vst [vmem:[%s205 + $0x130] sm:$0xff] %v235
        %268 = vst [vmem:[%s205 + $0x140] sm:$0xff] %v236
        %269 = vst [vmem:[%s205 + $0x150] sm:$0xff] %v237
        %270 = vst [vmem:[%s205 + $0x160] sm:$0xff] %v238
        %271 = vst [vmem:[%s205 + $0x170] sm:$0xff] %v239
        %272 = vst [vmem:[%s205 + $0x180] sm:$0xff] %v240
        %273 = vst [vmem:[%s205 + $0x190] sm:$0xff] %v241
        %274 = vst [vmem:[%s205 + $0x1a0] sm:$0xff] %v242
        %275 = vst [vmem:[%s205 + $0x1b0] sm:$0xff] %v243
        %276 = vst [vmem:[%s205 + $0x1c0] sm:$0xff] %v244
        %277 = vst [vmem:[%s205 + $0x1d0] sm:$0xff] %v245
        %278 = vst [vmem:[%s205 + $0x1e0] sm:$0xff] %v246
        %279 = vst [vmem:[%s205 + $0x1f0] sm:$0xff] %v247
        %s280 = smul.u32 %s212, 40
        %s281 = scalar_lea.vmem %s210, %s280
        %v282 = vld [vmem:[%s281] sm:$0xff]
        %v283 = vld [vmem:[%s281 + $0x8] sm:$0xff]
        %v284 = vld [vmem:[%s281 + $0x10] sm:$0xff]
        %v285 = vld [vmem:[%s281 + $0x18] sm:$0xff]
        %v286 = vld [vmem:[%s281 + $0x28] sm:$0xff]
        %v287 = vld [vmem:[%s281 + $0x30] sm:$0xff]
        %v288 = vld [vmem:[%s281 + $0x38] sm:$0xff]
        %v289 = vld [vmem:[%s281 + $0x40] sm:$0xff]
        %v290 = vld [vmem:[%s281 + $0x50] sm:$0xff]
        %v291 = vld [vmem:[%s281 + $0x58] sm:$0xff]
        %v292 = vld [vmem:[%s281 + $0x60] sm:$0xff]
        %v293 = vld [vmem:[%s281 + $0x68] sm:$0xff]
        %v294 = vld [vmem:[%s281 + $0x78] sm:$0xff]
        %v295 = vld [vmem:[%s281 + $0x80] sm:$0xff]
        %v296 = vld [vmem:[%s281 + $0x88] sm:$0xff]
        %v297 = vld [vmem:[%s281 + $0x90] sm:$0xff]
        %v298 = vld [vmem:[%s281 + $0xa0] sm:$0xff]
        %v299 = vld [vmem:[%s281 + $0xa8] sm:$0xff]
        %v300 = vld [vmem:[%s281 + $0xb0] sm:$0xff]
        %v301 = vld [vmem:[%s281 + $0xb8] sm:$0xff]
        %v302 = vld [vmem:[%s281 + $0xc8] sm:$0xff]
        %v303 = vld [vmem:[%s281 + $0xd0] sm:$0xff]
        %v304 = vld [vmem:[%s281 + $0xd8] sm:$0xff]
        %v305 = vld [vmem:[%s281 + $0xe0] sm:$0xff]
        %v306 = vld [vmem:[%s281 + $0xf0] sm:$0xff]
        %v307 = vld [vmem:[%s281 + $0xf8] sm:$0xff]
        %v308 = vld [vmem:[%s281 + $0x100] sm:$0xff]
        %v309 = vld [vmem:[%s281 + $0x108] sm:$0xff]
        %v310 = vld [vmem:[%s281 + $0x118] sm:$0xff]
        %v311 = vld [vmem:[%s281 + $0x120] sm:$0xff]
        %v312 = vld [vmem:[%s281 + $0x128] sm:$0xff]
        %v313 = vld [vmem:[%s281 + $0x130] sm:$0xff]
        %v314 = vld [vmem:[%s1] sm:$0xff]
        %v315 = vld [vmem:[%s1 + $0x8] sm:$0xff]
        %v316 = vld [vmem:[%s1 + $0x10] sm:$0xff]
        %v317 = vld [vmem:[%s1 + $0x18] sm:$0xff]
        %v318 = vld [vmem:[%s1 + $0x20] sm:$0xff]
        %v319 = vld [vmem:[%s1 + $0x28] sm:$0xff]
        %v320 = vld [vmem:[%s1 + $0x30] sm:$0xff]
        %v321 = vld [vmem:[%s1 + $0x38] sm:$0xff]
        %v322 = vld [vmem:[%s1 + $0x40] sm:$0xff]
        %v323 = vld [vmem:[%s1 + $0x48] sm:$0xff]
        %v324 = vld [vmem:[%s1 + $0x50] sm:$0xff]
        %v325 = vld [vmem:[%s1 + $0x58] sm:$0xff]
        %v326 = vld [vmem:[%s1 + $0x60] sm:$0xff]
        %v327 = vld [vmem:[%s1 + $0x68] sm:$0xff]
        %v328 = vld [vmem:[%s1 + $0x70] sm:$0xff]
        %v329 = vld [vmem:[%s1 + $0x78] sm:$0xff]
        %v330 = vld [vmem:[%s281 + $0x1] sm:$0xff]
        %v331 = vld [vmem:[%s281 + $0x9] sm:$0xff]
        %v332 = vld [vmem:[%s281 + $0x11] sm:$0xff]
        %v333 = vld [vmem:[%s281 + $0x19] sm:$0xff]
        %v334 = vld [vmem:[%s281 + $0x29] sm:$0xff]
        %v335 = vld [vmem:[%s281 + $0x31] sm:$0xff]
        %v336 = vld [vmem:[%s281 + $0x39] sm:$0xff]
        %v337 = vld [vmem:[%s281 + $0x41] sm:$0xff]
        %v338 = vld [vmem:[%s281 + $0x51] sm:$0xff]
        %v339 = vld [vmem:[%s281 + $0x59] sm:$0xff]
        %v340 = vld [vmem:[%s281 + $0x61] sm:$0xff]
        %v341 = vld [vmem:[%s281 + $0x69] sm:$0xff]
        %v342 = vld [vmem:[%s281 + $0x79] sm:$0xff]
        %v343 = vld [vmem:[%s281 + $0x81] sm:$0xff]
        %v344 = vld [vmem:[%s281 + $0x89] sm:$0xff]
        %v345 = vld [vmem:[%s281 + $0x91] sm:$0xff]
        %v346 = vld [vmem:[%s281 + $0xa1] sm:$0xff]
        %v347 = vld [vmem:[%s281 + $0xa9] sm:$0xff]
        %v348 = vld [vmem:[%s281 + $0xb1] sm:$0xff]
        %v349 = vld [vmem:[%s281 + $0xb9] sm:$0xff]
        %v350 = vld [vmem:[%s281 + $0xc9] sm:$0xff]
        %v351 = vld [vmem:[%s281 + $0xd1] sm:$0xff]
        %v352 = vld [vmem:[%s281 + $0xd9] sm:$0xff]
        %v353 = vld [vmem:[%s281 + $0xe1] sm:$0xff]
        %v354 = vld [vmem:[%s281 + $0xf1] sm:$0xff]
        %v355 = vld [vmem:[%s281 + $0xf9] sm:$0xff]
        %v356 = vld [vmem:[%s281 + $0x101] sm:$0xff]
        %v357 = vld [vmem:[%s281 + $0x109] sm:$0xff]
        %v358 = vld [vmem:[%s281 + $0x119] sm:$0xff]
        %v359 = vld [vmem:[%s281 + $0x121] sm:$0xff]
        %v360 = vld [vmem:[%s281 + $0x129] sm:$0xff]
        %v361 = vld [vmem:[%s281 + $0x131] sm:$0xff]
        %s362 = scalar_lea.vmem %s1, 128
        %v363 = vld [vmem:[%s362] sm:$0xff]
        %v364 = vld [vmem:[%s362 + $0x8] sm:$0xff]
        %v365 = vld [vmem:[%s362 + $0x10] sm:$0xff]
        %v366 = vld [vmem:[%s362 + $0x18] sm:$0xff]
        %v367 = vld [vmem:[%s362 + $0x20] sm:$0xff]
        %v368 = vld [vmem:[%s362 + $0x28] sm:$0xff]
        %v369 = vld [vmem:[%s362 + $0x30] sm:$0xff]
        %v370 = vld [vmem:[%s362 + $0x38] sm:$0xff]
        %v371 = vld [vmem:[%s362 + $0x40] sm:$0xff]
        %v372 = vld [vmem:[%s362 + $0x48] sm:$0xff]
        %v373 = vld [vmem:[%s362 + $0x50] sm:$0xff]
        %v374 = vld [vmem:[%s362 + $0x58] sm:$0xff]
        %v375 = vld [vmem:[%s362 + $0x60] sm:$0xff]
        %v376 = vld [vmem:[%s362 + $0x68] sm:$0xff]
        %v377 = vld [vmem:[%s362 + $0x70] sm:$0xff]
        %v378 = vld [vmem:[%s362 + $0x78] sm:$0xff]
        %379 = vmatprep.subr.mxu0 0.0
        %380 = vmatpush1.msra.mxu0 %v363
        %381 = vmatprep.subr.mxu0 0.0
        %382 = vmatpush1.msra.mxu0 %v364
        %383 = vmatprep.subr.mxu0 0.0
        %384 = vmatpush1.msra.mxu0 %v365
        %385 = vmatprep.subr.mxu0 0.0
        %386 = vmatpush1.msra.mxu0 %v366
        %387 = vmatprep.subr.mxu0 0.0
        %388 = vmatpush1.msra.mxu0 %v367
        %389 = vmatprep.subr.mxu0 0.0
        %390 = vmatpush1.msra.mxu0 %v368
        %391 = vmatprep.subr.mxu0 0.0
        %392 = vmatpush1.msra.mxu0 %v369
        %393 = vmatprep.subr.mxu0 0.0
        %394 = vmatpush1.msra.mxu0 %v370
        %395 = vmatprep.subr.mxu0 0.0
        %396 = vmatpush1.msra.mxu0 %v371
        %397 = vmatprep.subr.mxu0 0.0
        %398 = vmatpush1.msra.mxu0 %v372
        %399 = vmatprep.subr.mxu0 0.0
        %400 = vmatpush1.msra.mxu0 %v373
        %401 = vmatprep.subr.mxu0 0.0
        %402 = vmatpush1.msra.mxu0 %v374
        %403 = vmatprep.subr.mxu0 0.0
        %404 = vmatpush1.msra.mxu0 %v375
        %405 = vmatprep.subr.mxu0 0.0
        %406 = vmatpush1.msra.mxu0 %v376
        %407 = vmatprep.subr.mxu0 0.0
        %408 = vmatpush1.msra.mxu0 %v377
        %409 = vmatprep.subr.mxu0 0.0
        %410 = vmatpush1.msra.mxu0 %v378
        %411 = vmatprep.subr.mxu0 0.0
        %412 = vmatpush1.msra.mxu0 0.0
        %413 = vmatprep.subr.mxu0 0.0
        %414 = vmatpush1.msra.mxu0 0.0
        %415 = vmatprep.subr.mxu0 0.0
        %416 = vmatpush1.msra.mxu0 0.0
        %417 = vmatprep.subr.mxu0 0.0
        %418 = vmatpush1.msra.mxu0 0.0
        %419 = vmatprep.subr.mxu0 0.0
        %420 = vmatpush1.msra.mxu0 0.0
        %421 = vmatprep.subr.mxu0 0.0
        %422 = vmatpush1.msra.mxu0 0.0
        %423 = vmatprep.subr.mxu0 0.0
        %424 = vmatpush1.msra.mxu0 0.0
        %425 = vmatprep.subr.mxu0 0.0
        %426 = vmatpush1.msra.mxu0 0.0
        %427 = vmatprep.subr.mxu0 0.0
        %428 = vmatpush1.msra.mxu0 0.0
        %429 = vmatprep.subr.mxu0 0.0
        %430 = vmatpush1.msra.mxu0 0.0
        %431 = vmatprep.subr.mxu0 0.0
        %432 = vmatpush1.msra.mxu0 0.0
        %433 = vmatprep.subr.mxu0 0.0
        %434 = vmatpush1.msra.mxu0 0.0
        %435 = vmatprep.subr.mxu0 0.0
        %436 = vmatpush1.msra.mxu0 0.0
        %437 = vmatprep.subr.mxu0 0.0
        %438 = vmatpush1.msra.mxu0 0.0
        %439 = vmatprep.subr.mxu0 0.0
        %440 = vmatpush1.msra.mxu0 0.0
        %441 = vmatprep.subr.mxu0 0.0
        %442 = vmatpush1.msra.mxu0 0.0
        %443 = vmatprep.mubr.f32.mxu0 0.0
        %444 = vmatmul.mubr.f32.gmra.mrb[0].mxu0 %v330
        %v445 = vpop.f32.mrb[0].mxu0
        %v446 = vadd.f32 0.0, %v445
        %v447 = vpop.f32.mrb[0].mxu0
        %448 = vmatprep.mubr.f32.mxu0 0.0
        %449 = vmatmul.mubr.f32.gmra.mrb[0].mxu0 %v331
        %v450 = vpop.f32.mrb[0].mxu0
        %v451 = vadd.f32 0.0, %v450
        %v452 = vpop.f32.mrb[0].mxu0
        %453 = vmatprep.mubr.f32.mxu0 0.0
        %454 = vmatmul.mubr.f32.gmra.mrb[0].mxu0 %v332
        %v455 = vpop.f32.mrb[0].mxu0
        %v456 = vadd.f32 0.0, %v455
        %v457 = vpop.f32.mrb[0].mxu0
        %458 = vmatprep.mubr.f32.mxu0 0.0
        %459 = vmatmul.mubr.f32.gmra.mrb[0].mxu0 %v333
        %v460 = vpop.f32.mrb[0].mxu0
        %v461 = vadd.f32 0.0, %v460
        %v462 = vpop.f32.mrb[0].mxu0
        %463 = vmatprep.mubr.f32.mxu0 0.0
        %464 = vmatmul.mubr.f32.gmra.mrb[0].mxu0 %v334
        %v465 = vpop.f32.mrb[0].mxu0
        %v466 = vadd.f32 0.0, %v465
        %v467 = vpop.f32.mrb[0].mxu0
        %468 = vmatprep.mubr.f32.mxu0 0.0
        %469 = vmatmul.mubr.f32.gmra.mrb[0].mxu0 %v335
        %v470 = vpop.f32.mrb[0].mxu0
        %v471 = vadd.f32 0.0, %v470
        %v472 = vpop.f32.mrb[0].mxu0
        %473 = vmatprep.mubr.f32.mxu0 0.0
        %474 = vmatmul.mubr.f32.gmra.mrb[0].mxu0 %v336
        %v475 = vpop.f32.mrb[0].mxu0
        %v476 = vadd.f32 0.0, %v475
        %v477 = vpop.f32.mrb[0].mxu0
        %478 = vmatprep.mubr.f32.mxu0 0.0
        %479 = vmatmul.mubr.f32.gmra.mrb[0].mxu0 %v337
        %v480 = vpop.f32.mrb[0].mxu0
        %v481 = vadd.f32 0.0, %v480
        %v482 = vpop.f32.mrb[0].mxu0
        %483 = vmatprep.mubr.f32.mxu0 0.0
        %484 = vmatmul.mubr.f32.gmra.mrb[0].mxu0 %v338
        %v485 = vpop.f32.mrb[0].mxu0
        %v486 = vadd.f32 0.0, %v485
        %v487 = vpop.f32.mrb[0].mxu0
        %488 = vmatprep.mubr.f32.mxu0 0.0
        %489 = vmatmul.mubr.f32.gmra.mrb[0].mxu0 %v339
        %v490 = vpop.f32.mrb[0].mxu0
        %v491 = vadd.f32 0.0, %v490
        %v492 = vpop.f32.mrb[0].mxu0
        %493 = vmatprep.mubr.f32.mxu0 0.0
        %494 = vmatmul.mubr.f32.gmra.mrb[0].mxu0 %v340
        %v495 = vpop.f32.mrb[0].mxu0
        %v496 = vadd.f32 0.0, %v495
        %v497 = vpop.f32.mrb[0].mxu0
        %498 = vmatprep.mubr.f32.mxu0 0.0
        %499 = vmatmul.mubr.f32.gmra.mrb[0].mxu0 %v341
        %v500 = vpop.f32.mrb[0].mxu0
        %v501 = vadd.f32 0.0, %v500
        %v502 = vpop.f32.mrb[0].mxu0
        %503 = vmatprep.mubr.f32.mxu0 0.0
        %504 = vmatmul.mubr.f32.gmra.mrb[0].mxu0 %v342
        %v505 = vpop.f32.mrb[0].mxu0
        %v506 = vadd.f32 0.0, %v505
        %v507 = vpop.f32.mrb[0].mxu0
        %508 = vmatprep.mubr.f32.mxu0 0.0
        %509 = vmatmul.mubr.f32.gmra.mrb[0].mxu0 %v343
        %v510 = vpop.f32.mrb[0].mxu0
        %v511 = vadd.f32 0.0, %v510
        %v512 = vpop.f32.mrb[0].mxu0
        %513 = vmatprep.mubr.f32.mxu0 0.0
        %514 = vmatmul.mubr.f32.gmra.mrb[0].mxu0 %v344
        %v515 = vpop.f32.mrb[0].mxu0
        %v516 = vadd.f32 0.0, %v515
        %v517 = vpop.f32.mrb[0].mxu0
        %518 = vmatprep.mubr.f32.mxu0 0.0
        %519 = vmatmul.mubr.f32.gmra.mrb[0].mxu0 %v345
        %v520 = vpop.f32.mrb[0].mxu0
        %v521 = vadd.f32 0.0, %v520
        %v522 = vpop.f32.mrb[0].mxu0
        %523 = vmatprep.mubr.f32.mxu0 0.0
        %524 = vmatmul.mubr.f32.gmra.mrb[0].mxu0 %v346
        %v525 = vpop.f32.mrb[0].mxu0
        %v526 = vadd.f32 0.0, %v525
        %v527 = vpop.f32.mrb[0].mxu0
        %528 = vmatprep.mubr.f32.mxu0 0.0
        %529 = vmatmul.mubr.f32.gmra.mrb[0].mxu0 %v347
        %v530 = vpop.f32.mrb[0].mxu0
        %v531 = vadd.f32 0.0, %v530
        %v532 = vpop.f32.mrb[0].mxu0
        %533 = vmatprep.mubr.f32.mxu0 0.0
        %534 = vmatmul.mubr.f32.gmra.mrb[0].mxu0 %v348
        %v535 = vpop.f32.mrb[0].mxu0
        %v536 = vadd.f32 0.0, %v535
        %v537 = vpop.f32.mrb[0].mxu0
        %538 = vmatprep.mubr.f32.mxu0 0.0
        %539 = vmatmul.mubr.f32.gmra.mrb[0].mxu0 %v349
        %v540 = vpop.f32.mrb[0].mxu0
        %v541 = vadd.f32 0.0, %v540
        %v542 = vpop.f32.mrb[0].mxu0
        %543 = vmatprep.mubr.f32.mxu0 0.0
        %544 = vmatmul.mubr.f32.gmra.mrb[0].mxu0 %v350
        %v545 = vpop.f32.mrb[0].mxu0
        %v546 = vadd.f32 0.0, %v545
        %v547 = vpop.f32.mrb[0].mxu0
        %548 = vmatprep.mubr.f32.mxu0 0.0
        %549 = vmatmul.mubr.f32.gmra.mrb[0].mxu0 %v351
        %v550 = vpop.f32.mrb[0].mxu0
        %v551 = vadd.f32 0.0, %v550
        %v552 = vpop.f32.mrb[0].mxu0
        %553 = vmatprep.mubr.f32.mxu0 0.0
        %554 = vmatmul.mubr.f32.gmra.mrb[0].mxu0 %v352
        %v555 = vpop.f32.mrb[0].mxu0
        %v556 = vadd.f32 0.0, %v555
        %v557 = vpop.f32.mrb[0].mxu0
        %558 = vmatprep.mubr.f32.mxu0 0.0
        %559 = vmatmul.mubr.f32.gmra.mrb[0].mxu0 %v353
        %v560 = vpop.f32.mrb[0].mxu0
        %v561 = vadd.f32 0.0, %v560
        %v562 = vpop.f32.mrb[0].mxu0
        %563 = vmatprep.mubr.f32.mxu0 0.0
        %564 = vmatmul.mubr.f32.gmra.mrb[0].mxu0 %v354
        %v565 = vpop.f32.mrb[0].mxu0
        %v566 = vadd.f32 0.0, %v565
        %v567 = vpop.f32.mrb[0].mxu0
        %568 = vmatprep.mubr.f32.mxu0 0.0
        %569 = vmatmul.mubr.f32.gmra.mrb[0].mxu0 %v355
        %v570 = vpop.f32.mrb[0].mxu0
        %v571 = vadd.f32 0.0, %v570
        %v572 = vpop.f32.mrb[0].mxu0
        %573 = vmatprep.mubr.f32.mxu0 0.0
        %574 = vmatmul.mubr.f32.gmra.mrb[0].mxu0 %v356
        %v575 = vpop.f32.mrb[0].mxu0
        %v576 = vadd.f32 0.0, %v575
        %v577 = vpop.f32.mrb[0].mxu0
        %578 = vmatprep.mubr.f32.mxu0 0.0
        %579 = vmatmul.mubr.f32.gmra.mrb[0].mxu0 %v357
        %v580 = vpop.f32.mrb[0].mxu0
        %v581 = vadd.f32 0.0, %v580
        %v582 = vpop.f32.mrb[0].mxu0
        %583 = vmatprep.mubr.f32.mxu0 0.0
        %584 = vmatmul.mubr.f32.gmra.mrb[0].mxu0 %v358
        %v585 = vpop.f32.mrb[0].mxu0
        %v586 = vadd.f32 0.0, %v585
        %v587 = vpop.f32.mrb[0].mxu0
        %588 = vmatprep.mubr.f32.mxu0 0.0
        %589 = vmatmul.mubr.f32.gmra.mrb[0].mxu0 %v359
        %v590 = vpop.f32.mrb[0].mxu0
        %v591 = vadd.f32 0.0, %v590
        %v592 = vpop.f32.mrb[0].mxu0
        %593 = vmatprep.mubr.f32.mxu0 0.0
        %594 = vmatmul.mubr.f32.gmra.mrb[0].mxu0 %v360
        %v595 = vpop.f32.mrb[0].mxu0
        %v596 = vadd.f32 0.0, %v595
        %v597 = vpop.f32.mrb[0].mxu0
        %598 = vmatprep.mubr.f32.mxu0 0.0
        %599 = vmatmul.mubr.f32.gmra.mrb[0].mxu0 %v361
        %v600 = vpop.f32.mrb[0].mxu0
        %v601 = vadd.f32 0.0, %v600
        %v602 = vpop.f32.mrb[0].mxu0
        %603 = vdwg.mxu0
        %604 = vmatprep.subr.mxu0 0.0
        %605 = vmatpush1.msra.mxu0 %v314
        %606 = vmatprep.subr.mxu0 0.0
        %607 = vmatpush1.msra.mxu0 %v315
        %608 = vmatprep.subr.mxu0 0.0
        %609 = vmatpush1.msra.mxu0 %v316
        %610 = vmatprep.subr.mxu0 0.0
        %611 = vmatpush1.msra.mxu0 %v317
        %612 = vmatprep.subr.mxu0 0.0
        %613 = vmatpush1.msra.mxu0 %v318
        %614 = vmatprep.subr.mxu0 0.0
        %615 = vmatpush1.msra.mxu0 %v319
        %616 = vmatprep.subr.mxu0 0.0
        %617 = vmatpush1.msra.mxu0 %v320
        %618 = vmatprep.subr.mxu0 0.0
        %619 = vmatpush1.msra.mxu0 %v321
        %620 = vmatprep.subr.mxu0 0.0
        %621 = vmatpush1.msra.mxu0 %v322
        %622 = vmatprep.subr.mxu0 0.0
        %623 = vmatpush1.msra.mxu0 %v323
        %624 = vmatprep.subr.mxu0 0.0
        %625 = vmatpush1.msra.mxu0 %v324
        %626 = vmatprep.subr.mxu0 0.0
        %627 = vmatpush1.msra.mxu0 %v325
        %628 = vmatprep.subr.mxu0 0.0
        %629 = vmatpush1.msra.mxu0 %v326
        %630 = vmatprep.subr.mxu0 0.0
        %631 = vmatpush1.msra.mxu0 %v327
        %632 = vmatprep.subr.mxu0 0.0
        %633 = vmatpush1.msra.mxu0 %v328
        %634 = vmatprep.subr.mxu0 0.0
        %635 = vmatpush1.msra.mxu0 %v329
        %636 = vmatprep.subr.mxu0 0.0
        %637 = vmatpush1.msra.mxu0 0.0
        %638 = vmatprep.subr.mxu0 0.0
        %639 = vmatpush1.msra.mxu0 0.0
        %640 = vmatprep.subr.mxu0 0.0
        %641 = vmatpush1.msra.mxu0 0.0
        %642 = vmatprep.subr.mxu0 0.0
        %643 = vmatpush1.msra.mxu0 0.0
        %644 = vmatprep.subr.mxu0 0.0
        %645 = vmatpush1.msra.mxu0 0.0
        %646 = vmatprep.subr.mxu0 0.0
        %647 = vmatpush1.msra.mxu0 0.0
        %648 = vmatprep.subr.mxu0 0.0
        %649 = vmatpush1.msra.mxu0 0.0
        %650 = vmatprep.subr.mxu0 0.0
        %651 = vmatpush1.msra.mxu0 0.0
        %652 = vmatprep.subr.mxu0 0.0
        %653 = vmatpush1.msra.mxu0 0.0
        %654 = vmatprep.subr.mxu0 0.0
        %655 = vmatpush1.msra.mxu0 0.0
        %656 = vmatprep.subr.mxu0 0.0
        %657 = vmatpush1.msra.mxu0 0.0
        %658 = vmatprep.subr.mxu0 0.0
        %659 = vmatpush1.msra.mxu0 0.0
        %660 = vmatprep.subr.mxu0 0.0
        %661 = vmatpush1.msra.mxu0 0.0
        %662 = vmatprep.subr.mxu0 0.0
        %663 = vmatpush1.msra.mxu0 0.0
        %664 = vmatprep.subr.mxu0 0.0
        %665 = vmatpush1.msra.mxu0 0.0
        %666 = vmatprep.subr.mxu0 0.0
        %667 = vmatpush1.msra.mxu0 0.0
        %668 = vmatprep.mubr.f32.mxu0 0.0
        %669 = vmatmul.mubr.f32.gmra.mrb[0].mxu0 %v282
        %v670 = vpop.f32.mrb[0].mxu0
        %v671 = vadd.f32 %v446, %v670
        %v672 = vpop.f32.mrb[0].mxu0
        %673 = vmatprep.mubr.f32.mxu0 0.0
        %674 = vmatmul.mubr.f32.gmra.mrb[0].mxu0 %v283
        %v675 = vpop.f32.mrb[0].mxu0
        %v676 = vadd.f32 %v451, %v675
        %v677 = vpop.f32.mrb[0].mxu0
        %678 = vmatprep.mubr.f32.mxu0 0.0
        %679 = vmatmul.mubr.f32.gmra.mrb[0].mxu0 %v284
        %v680 = vpop.f32.mrb[0].mxu0
        %v681 = vadd.f32 %v456, %v680
        %v682 = vpop.f32.mrb[0].mxu0
        %683 = vmatprep.mubr.f32.mxu0 0.0
        %684 = vmatmul.mubr.f32.gmra.mrb[0].mxu0 %v285
        %v685 = vpop.f32.mrb[0].mxu0
        %v686 = vadd.f32 %v461, %v685
        %v687 = vpop.f32.mrb[0].mxu0
        %688 = vmatprep.mubr.f32.mxu0 0.0
        %689 = vmatmul.mubr.f32.gmra.mrb[0].mxu0 %v286
        %v690 = vpop.f32.mrb[0].mxu0
        %v691 = vadd.f32 %v466, %v690
        %v692 = vpop.f32.mrb[0].mxu0
        %693 = vmatprep.mubr.f32.mxu0 0.0
        %694 = vmatmul.mubr.f32.gmra.mrb[0].mxu0 %v287
        %v695 = vpop.f32.mrb[0].mxu0
        %v696 = vadd.f32 %v471, %v695
        %v697 = vpop.f32.mrb[0].mxu0
        %698 = vmatprep.mubr.f32.mxu0 0.0
        %699 = vmatmul.mubr.f32.gmra.mrb[0].mxu0 %v288
        %v700 = vpop.f32.mrb[0].mxu0
        %v701 = vadd.f32 %v476, %v700
        %v702 = vpop.f32.mrb[0].mxu0
        %703 = vmatprep.mubr.f32.mxu0 0.0
        %704 = vmatmul.mubr.f32.gmra.mrb[0].mxu0 %v289
        %v705 = vpop.f32.mrb[0].mxu0
        %v706 = vadd.f32 %v481, %v705
        %v707 = vpop.f32.mrb[0].mxu0
        %708 = vmatprep.mubr.f32.mxu0 0.0
        %709 = vmatmul.mubr.f32.gmra.mrb[0].mxu0 %v290
        %v710 = vpop.f32.mrb[0].mxu0
        %v711 = vadd.f32 %v486, %v710
        %v712 = vpop.f32.mrb[0].mxu0
        %713 = vmatprep.mubr.f32.mxu0 0.0
        %714 = vmatmul.mubr.f32.gmra.mrb[0].mxu0 %v291
        %v715 = vpop.f32.mrb[0].mxu0
        %v716 = vadd.f32 %v491, %v715
        %v717 = vpop.f32.mrb[0].mxu0
        %718 = vmatprep.mubr.f32.mxu0 0.0
        %719 = vmatmul.mubr.f32.gmra.mrb[0].mxu0 %v292
        %v720 = vpop.f32.mrb[0].mxu0
        %v721 = vadd.f32 %v496, %v720
        %v722 = vpop.f32.mrb[0].mxu0
        %723 = vmatprep.mubr.f32.mxu0 0.0
        %724 = vmatmul.mubr.f32.gmra.mrb[0].mxu0 %v293
        %v725 = vpop.f32.mrb[0].mxu0
        %v726 = vadd.f32 %v501, %v725
        %v727 = vpop.f32.mrb[0].mxu0
        %728 = vmatprep.mubr.f32.mxu0 0.0
        %729 = vmatmul.mubr.f32.gmra.mrb[0].mxu0 %v294
        %v730 = vpop.f32.mrb[0].mxu0
        %v731 = vadd.f32 %v506, %v730
        %v732 = vpop.f32.mrb[0].mxu0
        %733 = vmatprep.mubr.f32.mxu0 0.0
        %734 = vmatmul.mubr.f32.gmra.mrb[0].mxu0 %v295
        %v735 = vpop.f32.mrb[0].mxu0
        %v736 = vadd.f32 %v511, %v735
        %v737 = vpop.f32.mrb[0].mxu0
        %738 = vmatprep.mubr.f32.mxu0 0.0
        %739 = vmatmul.mubr.f32.gmra.mrb[0].mxu0 %v296
        %v740 = vpop.f32.mrb[0].mxu0
        %v741 = vadd.f32 %v516, %v740
        %v742 = vpop.f32.mrb[0].mxu0
        %743 = vmatprep.mubr.f32.mxu0 0.0
        %744 = vmatmul.mubr.f32.gmra.mrb[0].mxu0 %v297
        %v745 = vpop.f32.mrb[0].mxu0
        %v746 = vadd.f32 %v521, %v745
        %v747 = vpop.f32.mrb[0].mxu0
        %748 = vmatprep.mubr.f32.mxu0 0.0
        %749 = vmatmul.mubr.f32.gmra.mrb[0].mxu0 %v298
        %v750 = vpop.f32.mrb[0].mxu0
        %v751 = vadd.f32 %v526, %v750
        %v752 = vpop.f32.mrb[0].mxu0
        %753 = vmatprep.mubr.f32.mxu0 0.0
        %754 = vmatmul.mubr.f32.gmra.mrb[0].mxu0 %v299
        %v755 = vpop.f32.mrb[0].mxu0
        %v756 = vadd.f32 %v531, %v755
        %v757 = vpop.f32.mrb[0].mxu0
        %758 = vmatprep.mubr.f32.mxu0 0.0
        %759 = vmatmul.mubr.f32.gmra.mrb[0].mxu0 %v300
        %v760 = vpop.f32.mrb[0].mxu0
        %v761 = vadd.f32 %v536, %v760
        %v762 = vpop.f32.mrb[0].mxu0
        %763 = vmatprep.mubr.f32.mxu0 0.0
        %764 = vmatmul.mubr.f32.gmra.mrb[0].mxu0 %v301
        %v765 = vpop.f32.mrb[0].mxu0
        %v766 = vadd.f32 %v541, %v765
        %v767 = vpop.f32.mrb[0].mxu0
        %768 = vmatprep.mubr.f32.mxu0 0.0
        %769 = vmatmul.mubr.f32.gmra.mrb[0].mxu0 %v302
        %v770 = vpop.f32.mrb[0].mxu0
        %v771 = vadd.f32 %v546, %v770
        %v772 = vpop.f32.mrb[0].mxu0
        %773 = vmatprep.mubr.f32.mxu0 0.0
        %774 = vmatmul.mubr.f32.gmra.mrb[0].mxu0 %v303
        %v775 = vpop.f32.mrb[0].mxu0
        %v776 = vadd.f32 %v551, %v775
        %v777 = vpop.f32.mrb[0].mxu0
        %778 = vmatprep.mubr.f32.mxu0 0.0
        %779 = vmatmul.mubr.f32.gmra.mrb[0].mxu0 %v304
        %v780 = vpop.f32.mrb[0].mxu0
        %v781 = vadd.f32 %v556, %v780
        %v782 = vpop.f32.mrb[0].mxu0
        %783 = vmatprep.mubr.f32.mxu0 0.0
        %784 = vmatmul.mubr.f32.gmra.mrb[0].mxu0 %v305
        %v785 = vpop.f32.mrb[0].mxu0
        %v786 = vadd.f32 %v561, %v785
        %v787 = vpop.f32.mrb[0].mxu0
        %788 = vmatprep.mubr.f32.mxu0 0.0
        %789 = vmatmul.mubr.f32.gmra.mrb[0].mxu0 %v306
        %v790 = vpop.f32.mrb[0].mxu0
        %v791 = vadd.f32 %v566, %v790
        %v792 = vpop.f32.mrb[0].mxu0
        %793 = vmatprep.mubr.f32.mxu0 0.0
        %794 = vmatmul.mubr.f32.gmra.mrb[0].mxu0 %v307
        %v795 = vpop.f32.mrb[0].mxu0
        %v796 = vadd.f32 %v571, %v795
        %v797 = vpop.f32.mrb[0].mxu0
        %798 = vmatprep.mubr.f32.mxu0 0.0
        %799 = vmatmul.mubr.f32.gmra.mrb[0].mxu0 %v308
        %v800 = vpop.f32.mrb[0].mxu0
        %v801 = vadd.f32 %v576, %v800
        %v802 = vpop.f32.mrb[0].mxu0
        %803 = vmatprep.mubr.f32.mxu0 0.0
        %804 = vmatmul.mubr.f32.gmra.mrb[0].mxu0 %v309
        %v805 = vpop.f32.mrb[0].mxu0
        %v806 = vadd.f32 %v581, %v805
        %v807 = vpop.f32.mrb[0].mxu0
        %808 = vmatprep.mubr.f32.mxu0 0.0
        %809 = vmatmul.mubr.f32.gmra.mrb[0].mxu0 %v310
        %v810 = vpop.f32.mrb[0].mxu0
        %v811 = vadd.f32 %v586, %v810
        %v812 = vpop.f32.mrb[0].mxu0
        %813 = vmatprep.mubr.f32.mxu0 0.0
        %814 = vmatmul.mubr.f32.gmra.mrb[0].mxu0 %v311
        %v815 = vpop.f32.mrb[0].mxu0
        %v816 = vadd.f32 %v591, %v815
        %v817 = vpop.f32.mrb[0].mxu0
        %818 = vmatprep.mubr.f32.mxu0 0.0
        %819 = vmatmul.mubr.f32.gmra.mrb[0].mxu0 %v312
        %v820 = vpop.f32.mrb[0].mxu0
        %v821 = vadd.f32 %v596, %v820
        %v822 = vpop.f32.mrb[0].mxu0
        %823 = vmatprep.mubr.f32.mxu0 0.0
        %824 = vmatmul.mubr.f32.gmra.mrb[0].mxu0 %v313
        %v825 = vpop.f32.mrb[0].mxu0
        %v826 = vadd.f32 %v601, %v825
        %v827 = vpop.f32.mrb[0].mxu0
        %828 = vdwg.mxu0
        %v829 = vld [vmem:[%s281 + $0x2] sm:$0xff]
        %v830 = vld [vmem:[%s281 + $0xa] sm:$0xff]
        %v831 = vld [vmem:[%s281 + $0x12] sm:$0xff]
        %v832 = vld [vmem:[%s281 + $0x1a] sm:$0xff]
        %v833 = vld [vmem:[%s281 + $0x2a] sm:$0xff]
        %v834 = vld [vmem:[%s281 + $0x32] sm:$0xff]
        %v835 = vld [vmem:[%s281 + $0x3a] sm:$0xff]
        %v836 = vld [vmem:[%s281 + $0x42] sm:$0xff]
        %v837 = vld [vmem:[%s281 + $0x52] sm:$0xff]
        %v838 = vld [vmem:[%s281 + $0x5a] sm:$0xff]
        %v839 = vld [vmem:[%s281 + $0x62] sm:$0xff]
        %v840 = vld [vmem:[%s281 + $0x6a] sm:$0xff]
        %v841 = vld [vmem:[%s281 + $0x7a] sm:$0xff]
        %v842 = vld [vmem:[%s281 + $0x82] sm:$0xff]
        %v843 = vld [vmem:[%s281 + $0x8a] sm:$0xff]
        %v844 = vld [vmem:[%s281 + $0x92] sm:$0xff]
        %v845 = vld [vmem:[%s281 + $0xa2] sm:$0xff]
        %v846 = vld [vmem:[%s281 + $0xaa] sm:$0xff]
        %v847 = vld [vmem:[%s281 + $0xb2] sm:$0xff]
        %v848 = vld [vmem:[%s281 + $0xba] sm:$0xff]
        %v849 = vld [vmem:[%s281 + $0xca] sm:$0xff]
        %v850 = vld [vmem:[%s281 + $0xd2] sm:$0xff]
        %v851 = vld [vmem:[%s281 + $0xda] sm:$0xff]
        %v852 = vld [vmem:[%s281 + $0xe2] sm:$0xff]
        %v853 = vld [vmem:[%s281 + $0xf2] sm:$0xff]
        %v854 = vld [vmem:[%s281 + $0xfa] sm:$0xff]
        %v855 = vld [vmem:[%s281 + $0x102] sm:$0xff]
        %v856 = vld [vmem:[%s281 + $0x10a] sm:$0xff]
        %v857 = vld [vmem:[%s281 + $0x11a] sm:$0xff]
        %v858 = vld [vmem:[%s281 + $0x122] sm:$0xff]
        %v859 = vld [vmem:[%s281 + $0x12a] sm:$0xff]
        %v860 = vld [vmem:[%s281 + $0x132] sm:$0xff]
        %s861 = scalar_lea.vmem %s1, 256
        %v862 = vld [vmem:[%s861] sm:$0xff]
        %v863 = vld [vmem:[%s861 + $0x8] sm:$0xff]
        %v864 = vld [vmem:[%s861 + $0x10] sm:$0xff]
        %v865 = vld [vmem:[%s861 + $0x18] sm:$0xff]
        %v866 = vld [vmem:[%s861 + $0x20] sm:$0xff]
        %v867 = vld [vmem:[%s861 + $0x28] sm:$0xff]
        %v868 = vld [vmem:[%s861 + $0x30] sm:$0xff]
        %v869 = vld [vmem:[%s861 + $0x38] sm:$0xff]
        %v870 = vld [vmem:[%s861 + $0x40] sm:$0xff]
        %v871 = vld [vmem:[%s861 + $0x48] sm:$0xff]
        %v872 = vld [vmem:[%s861 + $0x50] sm:$0xff]
        %v873 = vld [vmem:[%s861 + $0x58] sm:$0xff]
        %v874 = vld [vmem:[%s861 + $0x60] sm:$0xff]
        %v875 = vld [vmem:[%s861 + $0x68] sm:$0xff]
        %v876 = vld [vmem:[%s861 + $0x70] sm:$0xff]
        %v877 = vld [vmem:[%s861 + $0x78] sm:$0xff]
        %878 = vmatprep.subr.mxu0 0.0
        %879 = vmatpush1.msra.mxu0 %v862
        %880 = vmatprep.subr.mxu0 0.0
        %881 = vmatpush1.msra.mxu0 %v863
        %882 = vmatprep.subr.mxu0 0.0
        %883 = vmatpush1.msra.mxu0 %v864
        %884 = vmatprep.subr.mxu0 0.0
        %885 = vmatpush1.msra.mxu0 %v865
        %886 = vmatprep.subr.mxu0 0.0
        %887 = vmatpush1.msra.mxu0 %v866
        %888 = vmatprep.subr.mxu0 0.0
        %889 = vmatpush1.msra.mxu0 %v867
        %890 = vmatprep.subr.mxu0 0.0
        %891 = vmatpush1.msra.mxu0 %v868
        %892 = vmatprep.subr.mxu0 0.0
        %893 = vmatpush1.msra.mxu0 %v869
        %894 = vmatprep.subr.mxu0 0.0
        %895 = vmatpush1.msra.mxu0 %v870
        %896 = vmatprep.subr.mxu0 0.0
        %897 = vmatpush1.msra.mxu0 %v871
        %898 = vmatprep.subr.mxu0 0.0
        %899 = vmatpush1.msra.mxu0 %v872
        %900 = vmatprep.subr.mxu0 0.0
        %901 = vmatpush1.msra.mxu0 %v873
        %902 = vmatprep.subr.mxu0 0.0
        %903 = vmatpush1.msra.mxu0 %v874
        %904 = vmatprep.subr.mxu0 0.0
        %905 = vmatpush1.msra.mxu0 %v875
        %906 = vmatprep.subr.mxu0 0.0
        %907 = vmatpush1.msra.mxu0 %v876
        %908 = vmatprep.subr.mxu0 0.0
        %909 = vmatpush1.msra.mxu0 %v877
        %910 = vmatprep.subr.mxu0 0.0
        %911 = vmatpush1.msra.mxu0 0.0
        %912 = vmatprep.subr.mxu0 0.0
        %913 = vmatpush1.msra.mxu0 0.0
        %914 = vmatprep.subr.mxu0 0.0
        %915 = vmatpush1.msra.mxu0 0.0
        %916 = vmatprep.subr.mxu0 0.0
        %917 = vmatpush1.msra.mxu0 0.0
        %918 = vmatprep.subr.mxu0 0.0
        %919 = vmatpush1.msra.mxu0 0.0
        %920 = vmatprep.subr.mxu0 0.0
        %921 = vmatpush1.msra.mxu0 0.0
        %922 = vmatprep.subr.mxu0 0.0
        %923 = vmatpush1.msra.mxu0 0.0
        %924 = vmatprep.subr.mxu0 0.0
        %925 = vmatpush1.msra.mxu0 0.0
        %926 = vmatprep.subr.mxu0 0.0
        %927 = vmatpush1.msra.mxu0 0.0
        %928 = vmatprep.subr.mxu0 0.0
        %929 = vmatpush1.msra.mxu0 0.0
        %930 = vmatprep.subr.mxu0 0.0
        %931 = vmatpush1.msra.mxu0 0.0
        %932 = vmatprep.subr.mxu0 0.0
        %933 = vmatpush1.msra.mxu0 0.0
        %934 = vmatprep.subr.mxu0 0.0
        %935 = vmatpush1.msra.mxu0 0.0
        %936 = vmatprep.subr.mxu0 0.0
        %937 = vmatpush1.msra.mxu0 0.0
        %938 = vmatprep.subr.mxu0 0.0
        %939 = vmatpush1.msra.mxu0 0.0
        %940 = vmatprep.subr.mxu0 0.0
        %941 = vmatpush1.msra.mxu0 0.0
        %942 = vmatprep.mubr.f32.mxu0 0.0
        %943 = vmatmul.mubr.f32.gmra.mrb[0].mxu0 %v829
        %v944 = vpop.f32.mrb[0].mxu0
        %v945 = vadd.f32 0.0, %v944
        %v946 = vpop.f32.mrb[0].mxu0
        %947 = vmatprep.mubr.f32.mxu0 0.0
        %948 = vmatmul.mubr.f32.gmra.mrb[0].mxu0 %v830
        %v949 = vpop.f32.mrb[0].mxu0
        %v950 = vadd.f32 0.0, %v949
        %v951 = vpop.f32.mrb[0].mxu0
        %952 = vmatprep.mubr.f32.mxu0 0.0
        %953 = vmatmul.mubr.f32.gmra.mrb[0].mxu0 %v831
        %v954 = vpop.f32.mrb[0].mxu0
        %v955 = vadd.f32 0.0, %v954
        %v956 = vpop.f32.mrb[0].mxu0
        %957 = vmatprep.mubr.f32.mxu0 0.0
        %958 = vmatmul.mubr.f32.gmra.mrb[0].mxu0 %v832
        %v959 = vpop.f32.mrb[0].mxu0
        %v960 = vadd.f32 0.0, %v959
        %v961 = vpop.f32.mrb[0].mxu0
        %962 = vmatprep.mubr.f32.mxu0 0.0
        %963 = vmatmul.mubr.f32.gmra.mrb[0].mxu0 %v833
        %v964 = vpop.f32.mrb[0].mxu0
        %v965 = vadd.f32 0.0, %v964
        %v966 = vpop.f32.mrb[0].mxu0
        %967 = vmatprep.mubr.f32.mxu0 0.0
        %968 = vmatmul.mubr.f32.gmra.mrb[0].mxu0 %v834
        %v969 = vpop.f32.mrb[0].mxu0
        %v970 = vadd.f32 0.0, %v969
        %v971 = vpop.f32.mrb[0].mxu0
        %972 = vmatprep.mubr.f32.mxu0 0.0
        %973 = vmatmul.mubr.f32.gmra.mrb[0].mxu0 %v835
        %v974 = vpop.f32.mrb[0].mxu0
        %v975 = vadd.f32 0.0, %v974
        %v976 = vpop.f32.mrb[0].mxu0
        %977 = vmatprep.mubr.f32.mxu0 0.0
        %978 = vmatmul.mubr.f32.gmra.mrb[0].mxu0 %v836
        %v979 = vpop.f32.mrb[0].mxu0
        %v980 = vadd.f32 0.0, %v979
        %v981 = vpop.f32.mrb[0].mxu0
        %982 = vmatprep.mubr.f32.mxu0 0.0
        %983 = vmatmul.mubr.f32.gmra.mrb[0].mxu0 %v837
        %v984 = vpop.f32.mrb[0].mxu0
        %v985 = vadd.f32 0.0, %v984
        %v986 = vpop.f32.mrb[0].mxu0
        %987 = vmatprep.mubr.f32.mxu0 0.0
        %988 = vmatmul.mubr.f32.gmra.mrb[0].mxu0 %v838
        %v989 = vpop.f32.mrb[0].mxu0
        %v990 = vadd.f32 0.0, %v989
        %v991 = vpop.f32.mrb[0].mxu0
        %992 = vmatprep.mubr.f32.mxu0 0.0
        %993 = vmatmul.mubr.f32.gmra.mrb[0].mxu0 %v839
        %v994 = vpop.f32.mrb[0].mxu0
        %v995 = vadd.f32 0.0, %v994
        %v996 = vpop.f32.mrb[0].mxu0
        %997 = vmatprep.mubr.f32.mxu0 0.0
        %998 = vmatmul.mubr.f32.gmra.mrb[0].mxu0 %v840
        %v999 = vpop.f32.mrb[0].mxu0
        %v1000 = vadd.f32 0.0, %v999
        %v1001 = vpop.f32.mrb[0].mxu0
        %1002 = vmatprep.mubr.f32.mxu0 0.0
        %1003 = vmatmul.mubr.f32.gmra.mrb[0].mxu0 %v841
        %v1004 = vpop.f32.mrb[0].mxu0
        %v1005 = vadd.f32 0.0, %v1004
        %v1006 = vpop.f32.mrb[0].mxu0
        %1007 = vmatprep.mubr.f32.mxu0 0.0
        %1008 = vmatmul.mubr.f32.gmra.mrb[0].mxu0 %v842
        %v1009 = vpop.f32.mrb[0].mxu0
        %v1010 = vadd.f32 0.0, %v1009
        %v1011 = vpop.f32.mrb[0].mxu0
        %1012 = vmatprep.mubr.f32.mxu0 0.0
        %1013 = vmatmul.mubr.f32.gmra.mrb[0].mxu0 %v843
        %v1014 = vpop.f32.mrb[0].mxu0
        %v1015 = vadd.f32 0.0, %v1014
        %v1016 = vpop.f32.mrb[0].mxu0
        %1017 = vmatprep.mubr.f32.mxu0 0.0
        %1018 = vmatmul.mubr.f32.gmra.mrb[0].mxu0 %v844
        %v1019 = vpop.f32.mrb[0].mxu0
        %v1020 = vadd.f32 0.0, %v1019
        %v1021 = vpop.f32.mrb[0].mxu0
        %1022 = vmatprep.mubr.f32.mxu0 0.0
        %1023 = vmatmul.mubr.f32.gmra.mrb[0].mxu0 %v845
        %v1024 = vpop.f32.mrb[0].mxu0
        %v1025 = vadd.f32 0.0, %v1024
        %v1026 = vpop.f32.mrb[0].mxu0
        %1027 = vmatprep.mubr.f32.mxu0 0.0
        %1028 = vmatmul.mubr.f32.gmra.mrb[0].mxu0 %v846
        %v1029 = vpop.f32.mrb[0].mxu0
        %v1030 = vadd.f32 0.0, %v1029
        %v1031 = vpop.f32.mrb[0].mxu0
        %1032 = vmatprep.mubr.f32.mxu0 0.0
        %1033 = vmatmul.mubr.f32.gmra.mrb[0].mxu0 %v847
        %v1034 = vpop.f32.mrb[0].mxu0
        %v1035 = vadd.f32 0.0, %v1034
        %v1036 = vpop.f32.mrb[0].mxu0
        %1037 = vmatprep.mubr.f32.mxu0 0.0
        %1038 = vmatmul.mubr.f32.gmra.mrb[0].mxu0 %v848
        %v1039 = vpop.f32.mrb[0].mxu0
        %v1040 = vadd.f32 0.0, %v1039
        %v1041 = vpop.f32.mrb[0].mxu0
        %1042 = vmatprep.mubr.f32.mxu0 0.0
        %1043 = vmatmul.mubr.f32.gmra.mrb[0].mxu0 %v849
        %v1044 = vpop.f32.mrb[0].mxu0
        %v1045 = vadd.f32 0.0, %v1044
        %v1046 = vpop.f32.mrb[0].mxu0
        %1047 = vmatprep.mubr.f32.mxu0 0.0
        %1048 = vmatmul.mubr.f32.gmra.mrb[0].mxu0 %v850
        %v1049 = vpop.f32.mrb[0].mxu0
        %v1050 = vadd.f32 0.0, %v1049
        %v1051 = vpop.f32.mrb[0].mxu0
        %1052 = vmatprep.mubr.f32.mxu0 0.0
        %1053 = vmatmul.mubr.f32.gmra.mrb[0].mxu0 %v851
        %v1054 = vpop.f32.mrb[0].mxu0
        %v1055 = vadd.f32 0.0, %v1054
        %v1056 = vpop.f32.mrb[0].mxu0
        %1057 = vmatprep.mubr.f32.mxu0 0.0
        %1058 = vmatmul.mubr.f32.gmra.mrb[0].mxu0 %v852
        %v1059 = vpop.f32.mrb[0].mxu0
        %v1060 = vadd.f32 0.0, %v1059
        %v1061 = vpop.f32.mrb[0].mxu0
        %1062 = vmatprep.mubr.f32.mxu0 0.0
        %1063 = vmatmul.mubr.f32.gmra.mrb[0].mxu0 %v853
        %v1064 = vpop.f32.mrb[0].mxu0
        %v1065 = vadd.f32 0.0, %v1064
        %v1066 = vpop.f32.mrb[0].mxu0
        %1067 = vmatprep.mubr.f32.mxu0 0.0
        %1068 = vmatmul.mubr.f32.gmra.mrb[0].mxu0 %v854
        %v1069 = vpop.f32.mrb[0].mxu0
        %v1070 = vadd.f32 0.0, %v1069
        %v1071 = vpop.f32.mrb[0].mxu0
        %1072 = vmatprep.mubr.f32.mxu0 0.0
        %1073 = vmatmul.mubr.f32.gmra.mrb[0].mxu0 %v855
        %v1074 = vpop.f32.mrb[0].mxu0
        %v1075 = vadd.f32 0.0, %v1074
        %v1076 = vpop.f32.mrb[0].mxu0
        %1077 = vmatprep.mubr.f32.mxu0 0.0
        %1078 = vmatmul.mubr.f32.gmra.mrb[0].mxu0 %v856
        %v1079 = vpop.f32.mrb[0].mxu0
        %v1080 = vadd.f32 0.0, %v1079
        %v1081 = vpop.f32.mrb[0].mxu0
        %1082 = vmatprep.mubr.f32.mxu0 0.0
        %1083 = vmatmul.mubr.f32.gmra.mrb[0].mxu0 %v857
        %v1084 = vpop.f32.mrb[0].mxu0
        %v1085 = vadd.f32 0.0, %v1084
        %v1086 = vpop.f32.mrb[0].mxu0
        %1087 = vmatprep.mubr.f32.mxu0 0.0
        %1088 = vmatmul.mubr.f32.gmra.mrb[0].mxu0 %v858
        %v1089 = vpop.f32.mrb[0].mxu0
        %v1090 = vadd.f32 0.0, %v1089
        %v1091 = vpop.f32.mrb[0].mxu0
        %1092 = vmatprep.mubr.f32.mxu0 0.0
        %1093 = vmatmul.mubr.f32.gmra.mrb[0].mxu0 %v859
        %v1094 = vpop.f32.mrb[0].mxu0
        %v1095 = vadd.f32 0.0, %v1094
        %v1096 = vpop.f32.mrb[0].mxu0
        %1097 = vmatprep.mubr.f32.mxu0 0.0
        %1098 = vmatmul.mubr.f32.gmra.mrb[0].mxu0 %v860
        %v1099 = vpop.f32.mrb[0].mxu0
        %v1100 = vadd.f32 0.0, %v1099
        %v1101 = vpop.f32.mrb[0].mxu0
        %1102 = vdwg.mxu0
        %v1103 = vadd.f32 %v671, %v945
        %v1104 = vadd.f32 %v676, %v950
        %v1105 = vadd.f32 %v681, %v955
        %v1106 = vadd.f32 %v686, %v960
        %v1107 = vadd.f32 %v691, %v965
        %v1108 = vadd.f32 %v696, %v970
        %v1109 = vadd.f32 %v701, %v975
        %v1110 = vadd.f32 %v706, %v980
        %v1111 = vadd.f32 %v711, %v985
        %v1112 = vadd.f32 %v716, %v990
        %v1113 = vadd.f32 %v721, %v995
        %v1114 = vadd.f32 %v726, %v1000
        %v1115 = vadd.f32 %v731, %v1005
        %v1116 = vadd.f32 %v736, %v1010
        %v1117 = vadd.f32 %v741, %v1015
        %v1118 = vadd.f32 %v746, %v1020
        %v1119 = vadd.f32 %v751, %v1025
        %v1120 = vadd.f32 %v756, %v1030
        %v1121 = vadd.f32 %v761, %v1035
        %v1122 = vadd.f32 %v766, %v1040
        %v1123 = vadd.f32 %v771, %v1045
        %v1124 = vadd.f32 %v776, %v1050
        %v1125 = vadd.f32 %v781, %v1055
        %v1126 = vadd.f32 %v786, %v1060
        %v1127 = vadd.f32 %v791, %v1065
        %v1128 = vadd.f32 %v796, %v1070
        %v1129 = vadd.f32 %v801, %v1075
        %v1130 = vadd.f32 %v806, %v1080
        %v1131 = vadd.f32 %v811, %v1085
        %v1132 = vadd.f32 %v816, %v1090
        %v1133 = vadd.f32 %v821, %v1095
        %v1134 = vadd.f32 %v826, %v1100
        %v1135 = vld [vmem:[%s215] sm:$0xff]
        %v1136 = vld [vmem:[%s215 + $0x8] sm:$0xff]
        %v1137 = vld [vmem:[%s215 + $0x10] sm:$0xff]
        %v1138 = vld [vmem:[%s215 + $0x18] sm:$0xff]
        %v1139 = vld [vmem:[%s215 + $0x28] sm:$0xff]
        %v1140 = vld [vmem:[%s215 + $0x30] sm:$0xff]
        %v1141 = vld [vmem:[%s215 + $0x38] sm:$0xff]
        %v1142 = vld [vmem:[%s215 + $0x40] sm:$0xff]
        %v1143 = vld [vmem:[%s215 + $0x50] sm:$0xff]
        %v1144 = vld [vmem:[%s215 + $0x58] sm:$0xff]
        %v1145 = vld [vmem:[%s215 + $0x60] sm:$0xff]
        %v1146 = vld [vmem:[%s215 + $0x68] sm:$0xff]
        %v1147 = vld [vmem:[%s215 + $0x78] sm:$0xff]
        %v1148 = vld [vmem:[%s215 + $0x80] sm:$0xff]
        %v1149 = vld [vmem:[%s215 + $0x88] sm:$0xff]
        %v1150 = vld [vmem:[%s215 + $0x90] sm:$0xff]
        %v1151 = vld [vmem:[%s215 + $0xa0] sm:$0xff]
        %v1152 = vld [vmem:[%s215 + $0xa8] sm:$0xff]
        %v1153 = vld [vmem:[%s215 + $0xb0] sm:$0xff]
        %v1154 = vld [vmem:[%s215 + $0xb8] sm:$0xff]
        %v1155 = vld [vmem:[%s215 + $0xc8] sm:$0xff]
        %v1156 = vld [vmem:[%s215 + $0xd0] sm:$0xff]
        %v1157 = vld [vmem:[%s215 + $0xd8] sm:$0xff]
        %v1158 = vld [vmem:[%s215 + $0xe0] sm:$0xff]
        %v1159 = vld [vmem:[%s215 + $0xf0] sm:$0xff]
        %v1160 = vld [vmem:[%s215 + $0xf8] sm:$0xff]
        %v1161 = vld [vmem:[%s215 + $0x100] sm:$0xff]
        %v1162 = vld [vmem:[%s215 + $0x108] sm:$0xff]
        %v1163 = vld [vmem:[%s215 + $0x118] sm:$0xff]
        %v1164 = vld [vmem:[%s215 + $0x120] sm:$0xff]
        %v1165 = vld [vmem:[%s215 + $0x128] sm:$0xff]
        %v1166 = vld [vmem:[%s215 + $0x130] sm:$0xff]
        %s1167 = scalar_lea.vmem %s1, 384
        %v1168 = vld [vmem:[%s1167] sm:$0xff]
        %v1169 = vld [vmem:[%s1167 + $0x8] sm:$0xff]
        %v1170 = vld [vmem:[%s1167 + $0x10] sm:$0xff]
        %v1171 = vld [vmem:[%s1167 + $0x18] sm:$0xff]
        %v1172 = vld [vmem:[%s1167 + $0x20] sm:$0xff]
        %v1173 = vld [vmem:[%s1167 + $0x28] sm:$0xff]
        %v1174 = vld [vmem:[%s1167 + $0x30] sm:$0xff]
        %v1175 = vld [vmem:[%s1167 + $0x38] sm:$0xff]
        %v1176 = vld [vmem:[%s1167 + $0x40] sm:$0xff]
        %v1177 = vld [vmem:[%s1167 + $0x48] sm:$0xff]
        %v1178 = vld [vmem:[%s1167 + $0x50] sm:$0xff]
        %v1179 = vld [vmem:[%s1167 + $0x58] sm:$0xff]
        %v1180 = vld [vmem:[%s1167 + $0x60] sm:$0xff]
        %v1181 = vld [vmem:[%s1167 + $0x68] sm:$0xff]
        %v1182 = vld [vmem:[%s1167 + $0x70] sm:$0xff]
        %v1183 = vld [vmem:[%s1167 + $0x78] sm:$0xff]
        %1184 = vmatprep.subr.mxu0 0.0
        %1185 = vmatpush1.msra.mxu0 %v1168
        %1186 = vmatprep.subr.mxu0 0.0
        %1187 = vmatpush1.msra.mxu0 %v1169
        %1188 = vmatprep.subr.mxu0 0.0
        %1189 = vmatpush1.msra.mxu0 %v1170
        %1190 = vmatprep.subr.mxu0 0.0
        %1191 = vmatpush1.msra.mxu0 %v1171
        %1192 = vmatprep.subr.mxu0 0.0
        %1193 = vmatpush1.msra.mxu0 %v1172
        %1194 = vmatprep.subr.mxu0 0.0
        %1195 = vmatpush1.msra.mxu0 %v1173
        %1196 = vmatprep.subr.mxu0 0.0
        %1197 = vmatpush1.msra.mxu0 %v1174
        %1198 = vmatprep.subr.mxu0 0.0
        %1199 = vmatpush1.msra.mxu0 %v1175
        %1200 = vmatprep.subr.mxu0 0.0
        %1201 = vmatpush1.msra.mxu0 %v1176
        %1202 = vmatprep.subr.mxu0 0.0
        %1203 = vmatpush1.msra.mxu0 %v1177
        %1204 = vmatprep.subr.mxu0 0.0
        %1205 = vmatpush1.msra.mxu0 %v1178
        %1206 = vmatprep.subr.mxu0 0.0
        %1207 = vmatpush1.msra.mxu0 %v1179
        %1208 = vmatprep.subr.mxu0 0.0
        %1209 = vmatpush1.msra.mxu0 %v1180
        %1210 = vmatprep.subr.mxu0 0.0
        %1211 = vmatpush1.msra.mxu0 %v1181
        %1212 = vmatprep.subr.mxu0 0.0
        %1213 = vmatpush1.msra.mxu0 %v1182
        %1214 = vmatprep.subr.mxu0 0.0
        %1215 = vmatpush1.msra.mxu0 %v1183
        %1216 = vmatprep.subr.mxu0 0.0
        %1217 = vmatpush1.msra.mxu0 0.0
        %1218 = vmatprep.subr.mxu0 0.0
        %1219 = vmatpush1.msra.mxu0 0.0
        %1220 = vmatprep.subr.mxu0 0.0
        %1221 = vmatpush1.msra.mxu0 0.0
        %1222 = vmatprep.subr.mxu0 0.0
        %1223 = vmatpush1.msra.mxu0 0.0
        %1224 = vmatprep.subr.mxu0 0.0
        %1225 = vmatpush1.msra.mxu0 0.0
        %1226 = vmatprep.subr.mxu0 0.0
        %1227 = vmatpush1.msra.mxu0 0.0
        %1228 = vmatprep.subr.mxu0 0.0
        %1229 = vmatpush1.msra.mxu0 0.0
        %1230 = vmatprep.subr.mxu0 0.0
        %1231 = vmatpush1.msra.mxu0 0.0
        %1232 = vmatprep.subr.mxu0 0.0
        %1233 = vmatpush1.msra.mxu0 0.0
        %1234 = vmatprep.subr.mxu0 0.0
        %1235 = vmatpush1.msra.mxu0 0.0
        %1236 = vmatprep.subr.mxu0 0.0
        %1237 = vmatpush1.msra.mxu0 0.0
        %1238 = vmatprep.subr.mxu0 0.0
        %1239 = vmatpush1.msra.mxu0 0.0
        %1240 = vmatprep.subr.mxu0 0.0
        %1241 = vmatpush1.msra.mxu0 0.0
        %1242 = vmatprep.subr.mxu0 0.0
        %1243 = vmatpush1.msra.mxu0 0.0
        %1244 = vmatprep.subr.mxu0 0.0
        %1245 = vmatpush1.msra.mxu0 0.0
        %1246 = vmatprep.subr.mxu0 0.0
        %1247 = vmatpush1.msra.mxu0 0.0
        %1248 = vmatprep.mubr.f32.mxu0 0.0
        %1249 = vmatmul.mubr.f32.gmra.mrb[0].mxu0 %v1135
        %v1250 = vpop.f32.mrb[0].mxu0
        %v1251 = vadd.f32 0.0, %v1250
        %v1252 = vpop.f32.mrb[0].mxu0
        %1253 = vmatprep.mubr.f32.mxu0 0.0
        %1254 = vmatmul.mubr.f32.gmra.mrb[0].mxu0 %v1136
        %v1255 = vpop.f32.mrb[0].mxu0
        %v1256 = vadd.f32 0.0, %v1255
        %v1257 = vpop.f32.mrb[0].mxu0
        %1258 = vmatprep.mubr.f32.mxu0 0.0
        %1259 = vmatmul.mubr.f32.gmra.mrb[0].mxu0 %v1137
        %v1260 = vpop.f32.mrb[0].mxu0
        %v1261 = vadd.f32 0.0, %v1260
        %v1262 = vpop.f32.mrb[0].mxu0
        %1263 = vmatprep.mubr.f32.mxu0 0.0
        %1264 = vmatmul.mubr.f32.gmra.mrb[0].mxu0 %v1138
        %v1265 = vpop.f32.mrb[0].mxu0
        %v1266 = vadd.f32 0.0, %v1265
        %v1267 = vpop.f32.mrb[0].mxu0
        %1268 = vmatprep.mubr.f32.mxu0 0.0
        %1269 = vmatmul.mubr.f32.gmra.mrb[0].mxu0 %v1139
        %v1270 = vpop.f32.mrb[0].mxu0
        %v1271 = vadd.f32 0.0, %v1270
        %v1272 = vpop.f32.mrb[0].mxu0
        %1273 = vmatprep.mubr.f32.mxu0 0.0
        %1274 = vmatmul.mubr.f32.gmra.mrb[0].mxu0 %v1140
        %v1275 = vpop.f32.mrb[0].mxu0
        %v1276 = vadd.f32 0.0, %v1275
        %v1277 = vpop.f32.mrb[0].mxu0
        %1278 = vmatprep.mubr.f32.mxu0 0.0
        %1279 = vmatmul.mubr.f32.gmra.mrb[0].mxu0 %v1141
        %v1280 = vpop.f32.mrb[0].mxu0
        %v1281 = vadd.f32 0.0, %v1280
        %v1282 = vpop.f32.mrb[0].mxu0
        %1283 = vmatprep.mubr.f32.mxu0 0.0
        %1284 = vmatmul.mubr.f32.gmra.mrb[0].mxu0 %v1142
        %v1285 = vpop.f32.mrb[0].mxu0
        %v1286 = vadd.f32 0.0, %v1285
        %v1287 = vpop.f32.mrb[0].mxu0
        %1288 = vmatprep.mubr.f32.mxu0 0.0
        %1289 = vmatmul.mubr.f32.gmra.mrb[0].mxu0 %v1143
        %v1290 = vpop.f32.mrb[0].mxu0
        %v1291 = vadd.f32 0.0, %v1290
        %v1292 = vpop.f32.mrb[0].mxu0
        %1293 = vmatprep.mubr.f32.mxu0 0.0
        %1294 = vmatmul.mubr.f32.gmra.mrb[0].mxu0 %v1144
        %v1295 = vpop.f32.mrb[0].mxu0
        %v1296 = vadd.f32 0.0, %v1295
        %v1297 = vpop.f32.mrb[0].mxu0
        %1298 = vmatprep.mubr.f32.mxu0 0.0
        %1299 = vmatmul.mubr.f32.gmra.mrb[0].mxu0 %v1145
        %v1300 = vpop.f32.mrb[0].mxu0
        %v1301 = vadd.f32 0.0, %v1300
        %v1302 = vpop.f32.mrb[0].mxu0
        %1303 = vmatprep.mubr.f32.mxu0 0.0
        %1304 = vmatmul.mubr.f32.gmra.mrb[0].mxu0 %v1146
        %v1305 = vpop.f32.mrb[0].mxu0
        %v1306 = vadd.f32 0.0, %v1305
        %v1307 = vpop.f32.mrb[0].mxu0
        %1308 = vmatprep.mubr.f32.mxu0 0.0
        %1309 = vmatmul.mubr.f32.gmra.mrb[0].mxu0 %v1147
        %v1310 = vpop.f32.mrb[0].mxu0
        %v1311 = vadd.f32 0.0, %v1310
        %v1312 = vpop.f32.mrb[0].mxu0
        %1313 = vmatprep.mubr.f32.mxu0 0.0
        %1314 = vmatmul.mubr.f32.gmra.mrb[0].mxu0 %v1148
        %v1315 = vpop.f32.mrb[0].mxu0
        %v1316 = vadd.f32 0.0, %v1315
        %v1317 = vpop.f32.mrb[0].mxu0
        %1318 = vmatprep.mubr.f32.mxu0 0.0
        %1319 = vmatmul.mubr.f32.gmra.mrb[0].mxu0 %v1149
        %v1320 = vpop.f32.mrb[0].mxu0
        %v1321 = vadd.f32 0.0, %v1320
        %v1322 = vpop.f32.mrb[0].mxu0
        %1323 = vmatprep.mubr.f32.mxu0 0.0
        %1324 = vmatmul.mubr.f32.gmra.mrb[0].mxu0 %v1150
        %v1325 = vpop.f32.mrb[0].mxu0
        %v1326 = vadd.f32 0.0, %v1325
        %v1327 = vpop.f32.mrb[0].mxu0
        %1328 = vmatprep.mubr.f32.mxu0 0.0
        %1329 = vmatmul.mubr.f32.gmra.mrb[0].mxu0 %v1151
        %v1330 = vpop.f32.mrb[0].mxu0
        %v1331 = vadd.f32 0.0, %v1330
        %v1332 = vpop.f32.mrb[0].mxu0
        %1333 = vmatprep.mubr.f32.mxu0 0.0
        %1334 = vmatmul.mubr.f32.gmra.mrb[0].mxu0 %v1152
        %v1335 = vpop.f32.mrb[0].mxu0
        %v1336 = vadd.f32 0.0, %v1335
        %v1337 = vpop.f32.mrb[0].mxu0
        %1338 = vmatprep.mubr.f32.mxu0 0.0
        %1339 = vmatmul.mubr.f32.gmra.mrb[0].mxu0 %v1153
        %v1340 = vpop.f32.mrb[0].mxu0
        %v1341 = vadd.f32 0.0, %v1340
        %v1342 = vpop.f32.mrb[0].mxu0
        %1343 = vmatprep.mubr.f32.mxu0 0.0
        %1344 = vmatmul.mubr.f32.gmra.mrb[0].mxu0 %v1154
        %v1345 = vpop.f32.mrb[0].mxu0
        %v1346 = vadd.f32 0.0, %v1345
        %v1347 = vpop.f32.mrb[0].mxu0
        %1348 = vmatprep.mubr.f32.mxu0 0.0
        %1349 = vmatmul.mubr.f32.gmra.mrb[0].mxu0 %v1155
        %v1350 = vpop.f32.mrb[0].mxu0
        %v1351 = vadd.f32 0.0, %v1350
        %v1352 = vpop.f32.mrb[0].mxu0
        %1353 = vmatprep.mubr.f32.mxu0 0.0
        %1354 = vmatmul.mubr.f32.gmra.mrb[0].mxu0 %v1156
        %v1355 = vpop.f32.mrb[0].mxu0
        %v1356 = vadd.f32 0.0, %v1355
        %v1357 = vpop.f32.mrb[0].mxu0
        %1358 = vmatprep.mubr.f32.mxu0 0.0
        %1359 = vmatmul.mubr.f32.gmra.mrb[0].mxu0 %v1157
        %v1360 = vpop.f32.mrb[0].mxu0
        %v1361 = vadd.f32 0.0, %v1360
        %v1362 = vpop.f32.mrb[0].mxu0
        %1363 = vmatprep.mubr.f32.mxu0 0.0
        %1364 = vmatmul.mubr.f32.gmra.mrb[0].mxu0 %v1158
        %v1365 = vpop.f32.mrb[0].mxu0
        %v1366 = vadd.f32 0.0, %v1365
        %v1367 = vpop.f32.mrb[0].mxu0
        %1368 = vmatprep.mubr.f32.mxu0 0.0
        %1369 = vmatmul.mubr.f32.gmra.mrb[0].mxu0 %v1159
        %v1370 = vpop.f32.mrb[0].mxu0
        %v1371 = vadd.f32 0.0, %v1370
        %v1372 = vpop.f32.mrb[0].mxu0
        %1373 = vmatprep.mubr.f32.mxu0 0.0
        %1374 = vmatmul.mubr.f32.gmra.mrb[0].mxu0 %v1160
        %v1375 = vpop.f32.mrb[0].mxu0
        %v1376 = vadd.f32 0.0, %v1375
        %v1377 = vpop.f32.mrb[0].mxu0
        %1378 = vmatprep.mubr.f32.mxu0 0.0
        %1379 = vmatmul.mubr.f32.gmra.mrb[0].mxu0 %v1161
        %v1380 = vpop.f32.mrb[0].mxu0
        %v1381 = vadd.f32 0.0, %v1380
        %v1382 = vpop.f32.mrb[0].mxu0
        %1383 = vmatprep.mubr.f32.mxu0 0.0
        %1384 = vmatmul.mubr.f32.gmra.mrb[0].mxu0 %v1162
        %v1385 = vpop.f32.mrb[0].mxu0
        %v1386 = vadd.f32 0.0, %v1385
        %v1387 = vpop.f32.mrb[0].mxu0
        %1388 = vmatprep.mubr.f32.mxu0 0.0
        %1389 = vmatmul.mubr.f32.gmra.mrb[0].mxu0 %v1163
        %v1390 = vpop.f32.mrb[0].mxu0
        %v1391 = vadd.f32 0.0, %v1390
        %v1392 = vpop.f32.mrb[0].mxu0
        %1393 = vmatprep.mubr.f32.mxu0 0.0
        %1394 = vmatmul.mubr.f32.gmra.mrb[0].mxu0 %v1164
        %v1395 = vpop.f32.mrb[0].mxu0
        %v1396 = vadd.f32 0.0, %v1395
        %v1397 = vpop.f32.mrb[0].mxu0
        %1398 = vmatprep.mubr.f32.mxu0 0.0
        %1399 = vmatmul.mubr.f32.gmra.mrb[0].mxu0 %v1165
        %v1400 = vpop.f32.mrb[0].mxu0
        %v1401 = vadd.f32 0.0, %v1400
        %v1402 = vpop.f32.mrb[0].mxu0
        %1403 = vmatprep.mubr.f32.mxu0 0.0
        %1404 = vmatmul.mubr.f32.gmra.mrb[0].mxu0 %v1166
        %v1405 = vpop.f32.mrb[0].mxu0
        %v1406 = vadd.f32 0.0, %v1405
        %v1407 = vpop.f32.mrb[0].mxu0
        %1408 = vdwg.mxu0
        %v1409 = vadd.f32 %v1103, %v1251
        %v1410 = vadd.f32 %v1104, %v1256
        %v1411 = vadd.f32 %v1105, %v1261
        %v1412 = vadd.f32 %v1106, %v1266
        %v1413 = vadd.f32 %v1107, %v1271
        %v1414 = vadd.f32 %v1108, %v1276
        %v1415 = vadd.f32 %v1109, %v1281
        %v1416 = vadd.f32 %v1110, %v1286
        %v1417 = vadd.f32 %v1111, %v1291
        %v1418 = vadd.f32 %v1112, %v1296
        %v1419 = vadd.f32 %v1113, %v1301
        %v1420 = vadd.f32 %v1114, %v1306
        %v1421 = vadd.f32 %v1115, %v1311
        %v1422 = vadd.f32 %v1116, %v1316
        %v1423 = vadd.f32 %v1117, %v1321
        %v1424 = vadd.f32 %v1118, %v1326
        %v1425 = vadd.f32 %v1119, %v1331
        %v1426 = vadd.f32 %v1120, %v1336
        %v1427 = vadd.f32 %v1121, %v1341
        %v1428 = vadd.f32 %v1122, %v1346
        %v1429 = vadd.f32 %v1123, %v1351
        %v1430 = vadd.f32 %v1124, %v1356
        %v1431 = vadd.f32 %v1125, %v1361
        %v1432 = vadd.f32 %v1126, %v1366
        %v1433 = vadd.f32 %v1127, %v1371
        %v1434 = vadd.f32 %v1128, %v1376
        %v1435 = vadd.f32 %v1129, %v1381
        %v1436 = vadd.f32 %v1130, %v1386
        %v1437 = vadd.f32 %v1131, %v1391
        %v1438 = vadd.f32 %v1132, %v1396
        %v1439 = vadd.f32 %v1133, %v1401
        %v1440 = vadd.f32 %v1134, %v1406
        %v1441 = vld [vmem:[%s215 + $0x1] sm:$0xff]
        %v1442 = vld [vmem:[%s215 + $0x9] sm:$0xff]
        %v1443 = vld [vmem:[%s215 + $0x11] sm:$0xff]
        %v1444 = vld [vmem:[%s215 + $0x19] sm:$0xff]
        %v1445 = vld [vmem:[%s215 + $0x29] sm:$0xff]
        %v1446 = vld [vmem:[%s215 + $0x31] sm:$0xff]
        %v1447 = vld [vmem:[%s215 + $0x39] sm:$0xff]
        %v1448 = vld [vmem:[%s215 + $0x41] sm:$0xff]
        %v1449 = vld [vmem:[%s215 + $0x51] sm:$0xff]
        %v1450 = vld [vmem:[%s215 + $0x59] sm:$0xff]
        %v1451 = vld [vmem:[%s215 + $0x61] sm:$0xff]
        %v1452 = vld [vmem:[%s215 + $0x69] sm:$0xff]
        %v1453 = vld [vmem:[%s215 + $0x79] sm:$0xff]
        %v1454 = vld [vmem:[%s215 + $0x81] sm:$0xff]
        %v1455 = vld [vmem:[%s215 + $0x89] sm:$0xff]
        %v1456 = vld [vmem:[%s215 + $0x91] sm:$0xff]
        %v1457 = vld [vmem:[%s215 + $0xa1] sm:$0xff]
        %v1458 = vld [vmem:[%s215 + $0xa9] sm:$0xff]
        %v1459 = vld [vmem:[%s215 + $0xb1] sm:$0xff]
        %v1460 = vld [vmem:[%s215 + $0xb9] sm:$0xff]
        %v1461 = vld [vmem:[%s215 + $0xc9] sm:$0xff]
        %v1462 = vld [vmem:[%s215 + $0xd1] sm:$0xff]
        %v1463 = vld [vmem:[%s215 + $0xd9] sm:$0xff]
        %v1464 = vld [vmem:[%s215 + $0xe1] sm:$0xff]
        %v1465 = vld [vmem:[%s215 + $0xf1] sm:$0xff]
        %v1466 = vld [vmem:[%s215 + $0xf9] sm:$0xff]
        %v1467 = vld [vmem:[%s215 + $0x101] sm:$0xff]
        %v1468 = vld [vmem:[%s215 + $0x109] sm:$0xff]
        %v1469 = vld [vmem:[%s215 + $0x119] sm:$0xff]
        %v1470 = vld [vmem:[%s215 + $0x121] sm:$0xff]
        %v1471 = vld [vmem:[%s215 + $0x129] sm:$0xff]
        %v1472 = vld [vmem:[%s215 + $0x131] sm:$0xff]
        %s1473 = scalar_lea.vmem %s1, 512
        %v1474 = vld [vmem:[%s1473] sm:$0xff]
        %v1475 = vld [vmem:[%s1473 + $0x8] sm:$0xff]
        %v1476 = vld [vmem:[%s1473 + $0x10] sm:$0xff]
        %v1477 = vld [vmem:[%s1473 + $0x18] sm:$0xff]
        %v1478 = vld [vmem:[%s1473 + $0x20] sm:$0xff]
        %v1479 = vld [vmem:[%s1473 + $0x28] sm:$0xff]
        %v1480 = vld [vmem:[%s1473 + $0x30] sm:$0xff]
        %v1481 = vld [vmem:[%s1473 + $0x38] sm:$0xff]
        %v1482 = vld [vmem:[%s1473 + $0x40] sm:$0xff]
        %v1483 = vld [vmem:[%s1473 + $0x48] sm:$0xff]
        %v1484 = vld [vmem:[%s1473 + $0x50] sm:$0xff]
        %v1485 = vld [vmem:[%s1473 + $0x58] sm:$0xff]
        %v1486 = vld [vmem:[%s1473 + $0x60] sm:$0xff]
        %v1487 = vld [vmem:[%s1473 + $0x68] sm:$0xff]
        %v1488 = vld [vmem:[%s1473 + $0x70] sm:$0xff]
        %v1489 = vld [vmem:[%s1473 + $0x78] sm:$0xff]
        %1490 = vmatprep.subr.mxu0 0.0
        %1491 = vmatpush1.msra.mxu0 %v1474
        %1492 = vmatprep.subr.mxu0 0.0
        %1493 = vmatpush1.msra.mxu0 %v1475
        %1494 = vmatprep.subr.mxu0 0.0
        %1495 = vmatpush1.msra.mxu0 %v1476
        %1496 = vmatprep.subr.mxu0 0.0
        %1497 = vmatpush1.msra.mxu0 %v1477
        %1498 = vmatprep.subr.mxu0 0.0
        %1499 = vmatpush1.msra.mxu0 %v1478
        %1500 = vmatprep.subr.mxu0 0.0
        %1501 = vmatpush1.msra.mxu0 %v1479
        %1502 = vmatprep.subr.mxu0 0.0
        %1503 = vmatpush1.msra.mxu0 %v1480
        %1504 = vmatprep.subr.mxu0 0.0
        %1505 = vmatpush1.msra.mxu0 %v1481
        %1506 = vmatprep.subr.mxu0 0.0
        %1507 = vmatpush1.msra.mxu0 %v1482
        %1508 = vmatprep.subr.mxu0 0.0
        %1509 = vmatpush1.msra.mxu0 %v1483
        %1510 = vmatprep.subr.mxu0 0.0
        %1511 = vmatpush1.msra.mxu0 %v1484
        %1512 = vmatprep.subr.mxu0 0.0
        %1513 = vmatpush1.msra.mxu0 %v1485
        %1514 = vmatprep.subr.mxu0 0.0
        %1515 = vmatpush1.msra.mxu0 %v1486
        %1516 = vmatprep.subr.mxu0 0.0
        %1517 = vmatpush1.msra.mxu0 %v1487
        %1518 = vmatprep.subr.mxu0 0.0
        %1519 = vmatpush1.msra.mxu0 %v1488
        %1520 = vmatprep.subr.mxu0 0.0
        %1521 = vmatpush1.msra.mxu0 %v1489
        %1522 = vmatprep.subr.mxu0 0.0
        %1523 = vmatpush1.msra.mxu0 0.0
        %1524 = vmatprep.subr.mxu0 0.0
        %1525 = vmatpush1.msra.mxu0 0.0
        %1526 = vmatprep.subr.mxu0 0.0
        %1527 = vmatpush1.msra.mxu0 0.0
        %1528 = vmatprep.subr.mxu0 0.0
        %1529 = vmatpush1.msra.mxu0 0.0
        %1530 = vmatprep.subr.mxu0 0.0
        %1531 = vmatpush1.msra.mxu0 0.0
        %1532 = vmatprep.subr.mxu0 0.0
        %1533 = vmatpush1.msra.mxu0 0.0
        %1534 = vmatprep.subr.mxu0 0.0
        %1535 = vmatpush1.msra.mxu0 0.0
        %1536 = vmatprep.subr.mxu0 0.0
        %1537 = vmatpush1.msra.mxu0 0.0
        %1538 = vmatprep.subr.mxu0 0.0
        %1539 = vmatpush1.msra.mxu0 0.0
        %1540 = vmatprep.subr.mxu0 0.0
        %1541 = vmatpush1.msra.mxu0 0.0
        %1542 = vmatprep.subr.mxu0 0.0
        %1543 = vmatpush1.msra.mxu0 0.0
        %1544 = vmatprep.subr.mxu0 0.0
        %1545 = vmatpush1.msra.mxu0 0.0
        %1546 = vmatprep.subr.mxu0 0.0
        %1547 = vmatpush1.msra.mxu0 0.0
        %1548 = vmatprep.subr.mxu0 0.0
        %1549 = vmatpush1.msra.mxu0 0.0
        %1550 = vmatprep.subr.mxu0 0.0
        %1551 = vmatpush1.msra.mxu0 0.0
        %1552 = vmatprep.subr.mxu0 0.0
        %1553 = vmatpush1.msra.mxu0 0.0
        %1554 = vmatprep.mubr.f32.mxu0 0.0
        %1555 = vmatmul.mubr.f32.gmra.mrb[0].mxu0 %v1441
        %v1556 = vpop.f32.mrb[0].mxu0
        %v1557 = vadd.f32 0.0, %v1556
        %v1558 = vpop.f32.mrb[0].mxu0
        %1559 = vmatprep.mubr.f32.mxu0 0.0
        %1560 = vmatmul.mubr.f32.gmra.mrb[0].mxu0 %v1442
        %v1561 = vpop.f32.mrb[0].mxu0
        %v1562 = vadd.f32 0.0, %v1561
        %v1563 = vpop.f32.mrb[0].mxu0
        %1564 = vmatprep.mubr.f32.mxu0 0.0
        %1565 = vmatmul.mubr.f32.gmra.mrb[0].mxu0 %v1443
        %v1566 = vpop.f32.mrb[0].mxu0
        %v1567 = vadd.f32 0.0, %v1566
        %v1568 = vpop.f32.mrb[0].mxu0
        %1569 = vmatprep.mubr.f32.mxu0 0.0
        %1570 = vmatmul.mubr.f32.gmra.mrb[0].mxu0 %v1444
        %v1571 = vpop.f32.mrb[0].mxu0
        %v1572 = vadd.f32 0.0, %v1571
        %v1573 = vpop.f32.mrb[0].mxu0
        %1574 = vmatprep.mubr.f32.mxu0 0.0
        %1575 = vmatmul.mubr.f32.gmra.mrb[0].mxu0 %v1445
        %v1576 = vpop.f32.mrb[0].mxu0
        %v1577 = vadd.f32 0.0, %v1576
        %v1578 = vpop.f32.mrb[0].mxu0
        %1579 = vmatprep.mubr.f32.mxu0 0.0
        %1580 = vmatmul.mubr.f32.gmra.mrb[0].mxu0 %v1446
        %v1581 = vpop.f32.mrb[0].mxu0
        %v1582 = vadd.f32 0.0, %v1581
        %v1583 = vpop.f32.mrb[0].mxu0
        %1584 = vmatprep.mubr.f32.mxu0 0.0
        %1585 = vmatmul.mubr.f32.gmra.mrb[0].mxu0 %v1447
        %v1586 = vpop.f32.mrb[0].mxu0
        %v1587 = vadd.f32 0.0, %v1586
        %v1588 = vpop.f32.mrb[0].mxu0
        %1589 = vmatprep.mubr.f32.mxu0 0.0
        %1590 = vmatmul.mubr.f32.gmra.mrb[0].mxu0 %v1448
        %v1591 = vpop.f32.mrb[0].mxu0
        %v1592 = vadd.f32 0.0, %v1591
        %v1593 = vpop.f32.mrb[0].mxu0
        %1594 = vmatprep.mubr.f32.mxu0 0.0
        %1595 = vmatmul.mubr.f32.gmra.mrb[0].mxu0 %v1449
        %v1596 = vpop.f32.mrb[0].mxu0
        %v1597 = vadd.f32 0.0, %v1596
        %v1598 = vpop.f32.mrb[0].mxu0
        %1599 = vmatprep.mubr.f32.mxu0 0.0
        %1600 = vmatmul.mubr.f32.gmra.mrb[0].mxu0 %v1450
        %v1601 = vpop.f32.mrb[0].mxu0
        %v1602 = vadd.f32 0.0, %v1601
        %v1603 = vpop.f32.mrb[0].mxu0
        %1604 = vmatprep.mubr.f32.mxu0 0.0
        %1605 = vmatmul.mubr.f32.gmra.mrb[0].mxu0 %v1451
        %v1606 = vpop.f32.mrb[0].mxu0
        %v1607 = vadd.f32 0.0, %v1606
        %v1608 = vpop.f32.mrb[0].mxu0
        %1609 = vmatprep.mubr.f32.mxu0 0.0
        %1610 = vmatmul.mubr.f32.gmra.mrb[0].mxu0 %v1452
        %v1611 = vpop.f32.mrb[0].mxu0
        %v1612 = vadd.f32 0.0, %v1611
        %v1613 = vpop.f32.mrb[0].mxu0
        %1614 = vmatprep.mubr.f32.mxu0 0.0
        %1615 = vmatmul.mubr.f32.gmra.mrb[0].mxu0 %v1453
        %v1616 = vpop.f32.mrb[0].mxu0
        %v1617 = vadd.f32 0.0, %v1616
        %v1618 = vpop.f32.mrb[0].mxu0
        %1619 = vmatprep.mubr.f32.mxu0 0.0
        %1620 = vmatmul.mubr.f32.gmra.mrb[0].mxu0 %v1454
        %v1621 = vpop.f32.mrb[0].mxu0
        %v1622 = vadd.f32 0.0, %v1621
        %v1623 = vpop.f32.mrb[0].mxu0
        %1624 = vmatprep.mubr.f32.mxu0 0.0
        %1625 = vmatmul.mubr.f32.gmra.mrb[0].mxu0 %v1455
        %v1626 = vpop.f32.mrb[0].mxu0
        %v1627 = vadd.f32 0.0, %v1626
        %v1628 = vpop.f32.mrb[0].mxu0
        %1629 = vmatprep.mubr.f32.mxu0 0.0
        %1630 = vmatmul.mubr.f32.gmra.mrb[0].mxu0 %v1456
        %v1631 = vpop.f32.mrb[0].mxu0
        %v1632 = vadd.f32 0.0, %v1631
        %v1633 = vpop.f32.mrb[0].mxu0
        %1634 = vmatprep.mubr.f32.mxu0 0.0
        %1635 = vmatmul.mubr.f32.gmra.mrb[0].mxu0 %v1457
        %v1636 = vpop.f32.mrb[0].mxu0
        %v1637 = vadd.f32 0.0, %v1636
        %v1638 = vpop.f32.mrb[0].mxu0
        %1639 = vmatprep.mubr.f32.mxu0 0.0
        %1640 = vmatmul.mubr.f32.gmra.mrb[0].mxu0 %v1458
        %v1641 = vpop.f32.mrb[0].mxu0
        %v1642 = vadd.f32 0.0, %v1641
        %v1643 = vpop.f32.mrb[0].mxu0
        %1644 = vmatprep.mubr.f32.mxu0 0.0
        %1645 = vmatmul.mubr.f32.gmra.mrb[0].mxu0 %v1459
        %v1646 = vpop.f32.mrb[0].mxu0
        %v1647 = vadd.f32 0.0, %v1646
        %v1648 = vpop.f32.mrb[0].mxu0
        %1649 = vmatprep.mubr.f32.mxu0 0.0
        %1650 = vmatmul.mubr.f32.gmra.mrb[0].mxu0 %v1460
        %v1651 = vpop.f32.mrb[0].mxu0
        %v1652 = vadd.f32 0.0, %v1651
        %v1653 = vpop.f32.mrb[0].mxu0
        %1654 = vmatprep.mubr.f32.mxu0 0.0
        %1655 = vmatmul.mubr.f32.gmra.mrb[0].mxu0 %v1461
        %v1656 = vpop.f32.mrb[0].mxu0
        %v1657 = vadd.f32 0.0, %v1656
        %v1658 = vpop.f32.mrb[0].mxu0
        %1659 = vmatprep.mubr.f32.mxu0 0.0
        %1660 = vmatmul.mubr.f32.gmra.mrb[0].mxu0 %v1462
        %v1661 = vpop.f32.mrb[0].mxu0
        %v1662 = vadd.f32 0.0, %v1661
        %v1663 = vpop.f32.mrb[0].mxu0
        %1664 = vmatprep.mubr.f32.mxu0 0.0
        %1665 = vmatmul.mubr.f32.gmra.mrb[0].mxu0 %v1463
        %v1666 = vpop.f32.mrb[0].mxu0
        %v1667 = vadd.f32 0.0, %v1666
        %v1668 = vpop.f32.mrb[0].mxu0
        %1669 = vmatprep.mubr.f32.mxu0 0.0
        %1670 = vmatmul.mubr.f32.gmra.mrb[0].mxu0 %v1464
        %v1671 = vpop.f32.mrb[0].mxu0
        %v1672 = vadd.f32 0.0, %v1671
        %v1673 = vpop.f32.mrb[0].mxu0
        %1674 = vmatprep.mubr.f32.mxu0 0.0
        %1675 = vmatmul.mubr.f32.gmra.mrb[0].mxu0 %v1465
        %v1676 = vpop.f32.mrb[0].mxu0
        %v1677 = vadd.f32 0.0, %v1676
        %v1678 = vpop.f32.mrb[0].mxu0
        %1679 = vmatprep.mubr.f32.mxu0 0.0
        %1680 = vmatmul.mubr.f32.gmra.mrb[0].mxu0 %v1466
        %v1681 = vpop.f32.mrb[0].mxu0
        %v1682 = vadd.f32 0.0, %v1681
        %v1683 = vpop.f32.mrb[0].mxu0
        %1684 = vmatprep.mubr.f32.mxu0 0.0
        %1685 = vmatmul.mubr.f32.gmra.mrb[0].mxu0 %v1467
        %v1686 = vpop.f32.mrb[0].mxu0
        %v1687 = vadd.f32 0.0, %v1686
        %v1688 = vpop.f32.mrb[0].mxu0
        %1689 = vmatprep.mubr.f32.mxu0 0.0
        %1690 = vmatmul.mubr.f32.gmra.mrb[0].mxu0 %v1468
        %v1691 = vpop.f32.mrb[0].mxu0
        %v1692 = vadd.f32 0.0, %v1691
        %v1693 = vpop.f32.mrb[0].mxu0
        %1694 = vmatprep.mubr.f32.mxu0 0.0
        %1695 = vmatmul.mubr.f32.gmra.mrb[0].mxu0 %v1469
        %v1696 = vpop.f32.mrb[0].mxu0
        %v1697 = vadd.f32 0.0, %v1696
        %v1698 = vpop.f32.mrb[0].mxu0
        %1699 = vmatprep.mubr.f32.mxu0 0.0
        %1700 = vmatmul.mubr.f32.gmra.mrb[0].mxu0 %v1470
        %v1701 = vpop.f32.mrb[0].mxu0
        %v1702 = vadd.f32 0.0, %v1701
        %v1703 = vpop.f32.mrb[0].mxu0
        %1704 = vmatprep.mubr.f32.mxu0 0.0
        %1705 = vmatmul.mubr.f32.gmra.mrb[0].mxu0 %v1471
        %v1706 = vpop.f32.mrb[0].mxu0
        %v1707 = vadd.f32 0.0, %v1706
        %v1708 = vpop.f32.mrb[0].mxu0
        %1709 = vmatprep.mubr.f32.mxu0 0.0
        %1710 = vmatmul.mubr.f32.gmra.mrb[0].mxu0 %v1472
        %v1711 = vpop.f32.mrb[0].mxu0
        %v1712 = vadd.f32 0.0, %v1711
        %v1713 = vpop.f32.mrb[0].mxu0
        %1714 = vdwg.mxu0
        %v1715 = vadd.f32 %v1409, %v1557
        %v1716 = vadd.f32 %v1410, %v1562
        %v1717 = vadd.f32 %v1411, %v1567
        %v1718 = vadd.f32 %v1412, %v1572
        %v1719 = vadd.f32 %v1413, %v1577
        %v1720 = vadd.f32 %v1414, %v1582
        %v1721 = vadd.f32 %v1415, %v1587
        %v1722 = vadd.f32 %v1416, %v1592
        %v1723 = vadd.f32 %v1417, %v1597
        %v1724 = vadd.f32 %v1418, %v1602
        %v1725 = vadd.f32 %v1419, %v1607
        %v1726 = vadd.f32 %v1420, %v1612
        %v1727 = vadd.f32 %v1421, %v1617
        %v1728 = vadd.f32 %v1422, %v1622
        %v1729 = vadd.f32 %v1423, %v1627
        %v1730 = vadd.f32 %v1424, %v1632
        %v1731 = vadd.f32 %v1425, %v1637
        %v1732 = vadd.f32 %v1426, %v1642
        %v1733 = vadd.f32 %v1427, %v1647
        %v1734 = vadd.f32 %v1428, %v1652
        %v1735 = vadd.f32 %v1429, %v1657
        %v1736 = vadd.f32 %v1430, %v1662
        %v1737 = vadd.f32 %v1431, %v1667
        %v1738 = vadd.f32 %v1432, %v1672
        %v1739 = vadd.f32 %v1433, %v1677
        %v1740 = vadd.f32 %v1434, %v1682
        %v1741 = vadd.f32 %v1435, %v1687
        %v1742 = vadd.f32 %v1436, %v1692
        %v1743 = vadd.f32 %v1437, %v1697
        %v1744 = vadd.f32 %v1438, %v1702
        %v1745 = vadd.f32 %v1439, %v1707
        %v1746 = vadd.f32 %v1440, %v1712
        %v1747 = vld [vmem:[%s215 + $0x2] sm:$0xff]
        %v1748 = vld [vmem:[%s215 + $0xa] sm:$0xff]
        %v1749 = vld [vmem:[%s215 + $0x12] sm:$0xff]
        %v1750 = vld [vmem:[%s215 + $0x1a] sm:$0xff]
        %v1751 = vld [vmem:[%s215 + $0x2a] sm:$0xff]
        %v1752 = vld [vmem:[%s215 + $0x32] sm:$0xff]
        %v1753 = vld [vmem:[%s215 + $0x3a] sm:$0xff]
        %v1754 = vld [vmem:[%s215 + $0x42] sm:$0xff]
        %v1755 = vld [vmem:[%s215 + $0x52] sm:$0xff]
        %v1756 = vld [vmem:[%s215 + $0x5a] sm:$0xff]
        %v1757 = vld [vmem:[%s215 + $0x62] sm:$0xff]
        %v1758 = vld [vmem:[%s215 + $0x6a] sm:$0xff]
        %v1759 = vld [vmem:[%s215 + $0x7a] sm:$0xff]
        %v1760 = vld [vmem:[%s215 + $0x82] sm:$0xff]
        %v1761 = vld [vmem:[%s215 + $0x8a] sm:$0xff]
        %v1762 = vld [vmem:[%s215 + $0x92] sm:$0xff]
        %v1763 = vld [vmem:[%s215 + $0xa2] sm:$0xff]
        %v1764 = vld [vmem:[%s215 + $0xaa] sm:$0xff]
        %v1765 = vld [vmem:[%s215 + $0xb2] sm:$0xff]
        %v1766 = vld [vmem:[%s215 + $0xba] sm:$0xff]
        %v1767 = vld [vmem:[%s215 + $0xca] sm:$0xff]
        %v1768 = vld [vmem:[%s215 + $0xd2] sm:$0xff]
        %v1769 = vld [vmem:[%s215 + $0xda] sm:$0xff]
        %v1770 = vld [vmem:[%s215 + $0xe2] sm:$0xff]
        %v1771 = vld [vmem:[%s215 + $0xf2] sm:$0xff]
        %v1772 = vld [vmem:[%s215 + $0xfa] sm:$0xff]
        %v1773 = vld [vmem:[%s215 + $0x102] sm:$0xff]
        %v1774 = vld [vmem:[%s215 + $0x10a] sm:$0xff]
        %v1775 = vld [vmem:[%s215 + $0x11a] sm:$0xff]
        %v1776 = vld [vmem:[%s215 + $0x122] sm:$0xff]
        %v1777 = vld [vmem:[%s215 + $0x12a] sm:$0xff]
        %v1778 = vld [vmem:[%s215 + $0x132] sm:$0xff]
        %s1779 = scalar_lea.vmem %s1, 640
        %v1780 = vld [vmem:[%s1779] sm:$0xff]
        %v1781 = vld [vmem:[%s1779 + $0x8] sm:$0xff]
        %v1782 = vld [vmem:[%s1779 + $0x10] sm:$0xff]
        %v1783 = vld [vmem:[%s1779 + $0x18] sm:$0xff]
        %v1784 = vld [vmem:[%s1779 + $0x20] sm:$0xff]
        %v1785 = vld [vmem:[%s1779 + $0x28] sm:$0xff]
        %v1786 = vld [vmem:[%s1779 + $0x30] sm:$0xff]
        %v1787 = vld [vmem:[%s1779 + $0x38] sm:$0xff]
        %v1788 = vld [vmem:[%s1779 + $0x40] sm:$0xff]
        %v1789 = vld [vmem:[%s1779 + $0x48] sm:$0xff]
        %v1790 = vld [vmem:[%s1779 + $0x50] sm:$0xff]
        %v1791 = vld [vmem:[%s1779 + $0x58] sm:$0xff]
        %v1792 = vld [vmem:[%s1779 + $0x60] sm:$0xff]
        %v1793 = vld [vmem:[%s1779 + $0x68] sm:$0xff]
        %v1794 = vld [vmem:[%s1779 + $0x70] sm:$0xff]
        %v1795 = vld [vmem:[%s1779 + $0x78] sm:$0xff]
        %1796 = vmatprep.subr.mxu0 0.0
        %1797 = vmatpush1.msra.mxu0 %v1780
        %1798 = vmatprep.subr.mxu0 0.0
        %1799 = vmatpush1.msra.mxu0 %v1781
        %1800 = vmatprep.subr.mxu0 0.0
        %1801 = vmatpush1.msra.mxu0 %v1782
        %1802 = vmatprep.subr.mxu0 0.0
        %1803 = vmatpush1.msra.mxu0 %v1783
        %1804 = vmatprep.subr.mxu0 0.0
        %1805 = vmatpush1.msra.mxu0 %v1784
        %1806 = vmatprep.subr.mxu0 0.0
        %1807 = vmatpush1.msra.mxu0 %v1785
        %1808 = vmatprep.subr.mxu0 0.0
        %1809 = vmatpush1.msra.mxu0 %v1786
        %1810 = vmatprep.subr.mxu0 0.0
        %1811 = vmatpush1.msra.mxu0 %v1787
        %1812 = vmatprep.subr.mxu0 0.0
        %1813 = vmatpush1.msra.mxu0 %v1788
        %1814 = vmatprep.subr.mxu0 0.0
        %1815 = vmatpush1.msra.mxu0 %v1789
        %1816 = vmatprep.subr.mxu0 0.0
        %1817 = vmatpush1.msra.mxu0 %v1790
        %1818 = vmatprep.subr.mxu0 0.0
        %1819 = vmatpush1.msra.mxu0 %v1791
        %1820 = vmatprep.subr.mxu0 0.0
        %1821 = vmatpush1.msra.mxu0 %v1792
        %1822 = vmatprep.subr.mxu0 0.0
        %1823 = vmatpush1.msra.mxu0 %v1793
        %1824 = vmatprep.subr.mxu0 0.0
        %1825 = vmatpush1.msra.mxu0 %v1794
        %1826 = vmatprep.subr.mxu0 0.0
        %1827 = vmatpush1.msra.mxu0 %v1795
        %1828 = vmatprep.subr.mxu0 0.0
        %1829 = vmatpush1.msra.mxu0 0.0
        %1830 = vmatprep.subr.mxu0 0.0
        %1831 = vmatpush1.msra.mxu0 0.0
        %1832 = vmatprep.subr.mxu0 0.0
        %1833 = vmatpush1.msra.mxu0 0.0
        %1834 = vmatprep.subr.mxu0 0.0
        %1835 = vmatpush1.msra.mxu0 0.0
        %1836 = vmatprep.subr.mxu0 0.0
        %1837 = vmatpush1.msra.mxu0 0.0
        %1838 = vmatprep.subr.mxu0 0.0
        %1839 = vmatpush1.msra.mxu0 0.0
        %1840 = vmatprep.subr.mxu0 0.0
        %1841 = vmatpush1.msra.mxu0 0.0
        %1842 = vmatprep.subr.mxu0 0.0
        %1843 = vmatpush1.msra.mxu0 0.0
        %1844 = vmatprep.subr.mxu0 0.0
        %1845 = vmatpush1.msra.mxu0 0.0
        %1846 = vmatprep.subr.mxu0 0.0
        %1847 = vmatpush1.msra.mxu0 0.0
        %1848 = vmatprep.subr.mxu0 0.0
        %1849 = vmatpush1.msra.mxu0 0.0
        %1850 = vmatprep.subr.mxu0 0.0
        %1851 = vmatpush1.msra.mxu0 0.0
        %1852 = vmatprep.subr.mxu0 0.0
        %1853 = vmatpush1.msra.mxu0 0.0
        %1854 = vmatprep.subr.mxu0 0.0
        %1855 = vmatpush1.msra.mxu0 0.0
        %1856 = vmatprep.subr.mxu0 0.0
        %1857 = vmatpush1.msra.mxu0 0.0
        %1858 = vmatprep.subr.mxu0 0.0
        %1859 = vmatpush1.msra.mxu0 0.0
        %1860 = vmatprep.mubr.f32.mxu0 0.0
        %1861 = vmatmul.mubr.f32.gmra.mrb[0].mxu0 %v1747
        %v1862 = vpop.f32.mrb[0].mxu0
        %v1863 = vadd.f32 0.0, %v1862
        %v1864 = vpop.f32.mrb[0].mxu0
        %1865 = vmatprep.mubr.f32.mxu0 0.0
        %1866 = vmatmul.mubr.f32.gmra.mrb[0].mxu0 %v1748
        %v1867 = vpop.f32.mrb[0].mxu0
        %v1868 = vadd.f32 0.0, %v1867
        %v1869 = vpop.f32.mrb[0].mxu0
        %1870 = vmatprep.mubr.f32.mxu0 0.0
        %1871 = vmatmul.mubr.f32.gmra.mrb[0].mxu0 %v1749
        %v1872 = vpop.f32.mrb[0].mxu0
        %v1873 = vadd.f32 0.0, %v1872
        %v1874 = vpop.f32.mrb[0].mxu0
        %1875 = vmatprep.mubr.f32.mxu0 0.0
        %1876 = vmatmul.mubr.f32.gmra.mrb[0].mxu0 %v1750
        %v1877 = vpop.f32.mrb[0].mxu0
        %v1878 = vadd.f32 0.0, %v1877
        %v1879 = vpop.f32.mrb[0].mxu0
        %1880 = vmatprep.mubr.f32.mxu0 0.0
        %1881 = vmatmul.mubr.f32.gmra.mrb[0].mxu0 %v1751
        %v1882 = vpop.f32.mrb[0].mxu0
        %v1883 = vadd.f32 0.0, %v1882
        %v1884 = vpop.f32.mrb[0].mxu0
        %1885 = vmatprep.mubr.f32.mxu0 0.0
        %1886 = vmatmul.mubr.f32.gmra.mrb[0].mxu0 %v1752
        %v1887 = vpop.f32.mrb[0].mxu0
        %v1888 = vadd.f32 0.0, %v1887
        %v1889 = vpop.f32.mrb[0].mxu0
        %1890 = vmatprep.mubr.f32.mxu0 0.0
        %1891 = vmatmul.mubr.f32.gmra.mrb[0].mxu0 %v1753
        %v1892 = vpop.f32.mrb[0].mxu0
        %v1893 = vadd.f32 0.0, %v1892
        %v1894 = vpop.f32.mrb[0].mxu0
        %1895 = vmatprep.mubr.f32.mxu0 0.0
        %1896 = vmatmul.mubr.f32.gmra.mrb[0].mxu0 %v1754
        %v1897 = vpop.f32.mrb[0].mxu0
        %v1898 = vadd.f32 0.0, %v1897
        %v1899 = vpop.f32.mrb[0].mxu0
        %1900 = vmatprep.mubr.f32.mxu0 0.0
        %1901 = vmatmul.mubr.f32.gmra.mrb[0].mxu0 %v1755
        %v1902 = vpop.f32.mrb[0].mxu0
        %v1903 = vadd.f32 0.0, %v1902
        %v1904 = vpop.f32.mrb[0].mxu0
        %1905 = vmatprep.mubr.f32.mxu0 0.0
        %1906 = vmatmul.mubr.f32.gmra.mrb[0].mxu0 %v1756
        %v1907 = vpop.f32.mrb[0].mxu0
        %v1908 = vadd.f32 0.0, %v1907
        %v1909 = vpop.f32.mrb[0].mxu0
        %1910 = vmatprep.mubr.f32.mxu0 0.0
        %1911 = vmatmul.mubr.f32.gmra.mrb[0].mxu0 %v1757
        %v1912 = vpop.f32.mrb[0].mxu0
        %v1913 = vadd.f32 0.0, %v1912
        %v1914 = vpop.f32.mrb[0].mxu0
        %1915 = vmatprep.mubr.f32.mxu0 0.0
        %1916 = vmatmul.mubr.f32.gmra.mrb[0].mxu0 %v1758
        %v1917 = vpop.f32.mrb[0].mxu0
        %v1918 = vadd.f32 0.0, %v1917
        %v1919 = vpop.f32.mrb[0].mxu0
        %1920 = vmatprep.mubr.f32.mxu0 0.0
        %1921 = vmatmul.mubr.f32.gmra.mrb[0].mxu0 %v1759
        %v1922 = vpop.f32.mrb[0].mxu0
        %v1923 = vadd.f32 0.0, %v1922
        %v1924 = vpop.f32.mrb[0].mxu0
        %1925 = vmatprep.mubr.f32.mxu0 0.0
        %1926 = vmatmul.mubr.f32.gmra.mrb[0].mxu0 %v1760
        %v1927 = vpop.f32.mrb[0].mxu0
        %v1928 = vadd.f32 0.0, %v1927
        %v1929 = vpop.f32.mrb[0].mxu0
        %1930 = vmatprep.mubr.f32.mxu0 0.0
        %1931 = vmatmul.mubr.f32.gmra.mrb[0].mxu0 %v1761
        %v1932 = vpop.f32.mrb[0].mxu0
        %v1933 = vadd.f32 0.0, %v1932
        %v1934 = vpop.f32.mrb[0].mxu0
        %1935 = vmatprep.mubr.f32.mxu0 0.0
        %1936 = vmatmul.mubr.f32.gmra.mrb[0].mxu0 %v1762
        %v1937 = vpop.f32.mrb[0].mxu0
        %v1938 = vadd.f32 0.0, %v1937
        %v1939 = vpop.f32.mrb[0].mxu0
        %1940 = vmatprep.mubr.f32.mxu0 0.0
        %1941 = vmatmul.mubr.f32.gmra.mrb[0].mxu0 %v1763
        %v1942 = vpop.f32.mrb[0].mxu0
        %v1943 = vadd.f32 0.0, %v1942
        %v1944 = vpop.f32.mrb[0].mxu0
        %1945 = vmatprep.mubr.f32.mxu0 0.0
        %1946 = vmatmul.mubr.f32.gmra.mrb[0].mxu0 %v1764
        %v1947 = vpop.f32.mrb[0].mxu0
        %v1948 = vadd.f32 0.0, %v1947
        %v1949 = vpop.f32.mrb[0].mxu0
        %1950 = vmatprep.mubr.f32.mxu0 0.0
        %1951 = vmatmul.mubr.f32.gmra.mrb[0].mxu0 %v1765
        %v1952 = vpop.f32.mrb[0].mxu0
        %v1953 = vadd.f32 0.0, %v1952
        %v1954 = vpop.f32.mrb[0].mxu0
        %1955 = vmatprep.mubr.f32.mxu0 0.0
        %1956 = vmatmul.mubr.f32.gmra.mrb[0].mxu0 %v1766
        %v1957 = vpop.f32.mrb[0].mxu0
        %v1958 = vadd.f32 0.0, %v1957
        %v1959 = vpop.f32.mrb[0].mxu0
        %1960 = vmatprep.mubr.f32.mxu0 0.0
        %1961 = vmatmul.mubr.f32.gmra.mrb[0].mxu0 %v1767
        %v1962 = vpop.f32.mrb[0].mxu0
        %v1963 = vadd.f32 0.0, %v1962
        %v1964 = vpop.f32.mrb[0].mxu0
        %1965 = vmatprep.mubr.f32.mxu0 0.0
        %1966 = vmatmul.mubr.f32.gmra.mrb[0].mxu0 %v1768
        %v1967 = vpop.f32.mrb[0].mxu0
        %v1968 = vadd.f32 0.0, %v1967
        %v1969 = vpop.f32.mrb[0].mxu0
        %1970 = vmatprep.mubr.f32.mxu0 0.0
        %1971 = vmatmul.mubr.f32.gmra.mrb[0].mxu0 %v1769
        %v1972 = vpop.f32.mrb[0].mxu0
        %v1973 = vadd.f32 0.0, %v1972
        %v1974 = vpop.f32.mrb[0].mxu0
        %1975 = vmatprep.mubr.f32.mxu0 0.0
        %1976 = vmatmul.mubr.f32.gmra.mrb[0].mxu0 %v1770
        %v1977 = vpop.f32.mrb[0].mxu0
        %v1978 = vadd.f32 0.0, %v1977
        %v1979 = vpop.f32.mrb[0].mxu0
        %1980 = vmatprep.mubr.f32.mxu0 0.0
        %1981 = vmatmul.mubr.f32.gmra.mrb[0].mxu0 %v1771
        %v1982 = vpop.f32.mrb[0].mxu0
        %v1983 = vadd.f32 0.0, %v1982
        %v1984 = vpop.f32.mrb[0].mxu0
        %1985 = vmatprep.mubr.f32.mxu0 0.0
        %1986 = vmatmul.mubr.f32.gmra.mrb[0].mxu0 %v1772
        %v1987 = vpop.f32.mrb[0].mxu0
        %v1988 = vadd.f32 0.0, %v1987
        %v1989 = vpop.f32.mrb[0].mxu0
        %1990 = vmatprep.mubr.f32.mxu0 0.0
        %1991 = vmatmul.mubr.f32.gmra.mrb[0].mxu0 %v1773
        %v1992 = vpop.f32.mrb[0].mxu0
        %v1993 = vadd.f32 0.0, %v1992
        %v1994 = vpop.f32.mrb[0].mxu0
        %1995 = vmatprep.mubr.f32.mxu0 0.0
        %1996 = vmatmul.mubr.f32.gmra.mrb[0].mxu0 %v1774
        %v1997 = vpop.f32.mrb[0].mxu0
        %v1998 = vadd.f32 0.0, %v1997
        %v1999 = vpop.f32.mrb[0].mxu0
        %2000 = vmatprep.mubr.f32.mxu0 0.0
        %2001 = vmatmul.mubr.f32.gmra.mrb[0].mxu0 %v1775
        %v2002 = vpop.f32.mrb[0].mxu0
        %v2003 = vadd.f32 0.0, %v2002
        %v2004 = vpop.f32.mrb[0].mxu0
        %2005 = vmatprep.mubr.f32.mxu0 0.0
        %2006 = vmatmul.mubr.f32.gmra.mrb[0].mxu0 %v1776
        %v2007 = vpop.f32.mrb[0].mxu0
        %v2008 = vadd.f32 0.0, %v2007
        %v2009 = vpop.f32.mrb[0].mxu0
        %2010 = vmatprep.mubr.f32.mxu0 0.0
        %2011 = vmatmul.mubr.f32.gmra.mrb[0].mxu0 %v1777
        %v2012 = vpop.f32.mrb[0].mxu0
        %v2013 = vadd.f32 0.0, %v2012
        %v2014 = vpop.f32.mrb[0].mxu0
        %2015 = vmatprep.mubr.f32.mxu0 0.0
        %2016 = vmatmul.mubr.f32.gmra.mrb[0].mxu0 %v1778
        %v2017 = vpop.f32.mrb[0].mxu0
        %v2018 = vadd.f32 0.0, %v2017
        %v2019 = vpop.f32.mrb[0].mxu0
        %2020 = vdwg.mxu0
        %v2021 = vadd.f32 %v1715, %v1863
        %v2022 = vadd.f32 %v1716, %v1868
        %v2023 = vadd.f32 %v1717, %v1873
        %v2024 = vadd.f32 %v1718, %v1878
        %v2025 = vadd.f32 %v1719, %v1883
        %v2026 = vadd.f32 %v1720, %v1888
        %v2027 = vadd.f32 %v1721, %v1893
        %v2028 = vadd.f32 %v1722, %v1898
        %v2029 = vadd.f32 %v1723, %v1903
        %v2030 = vadd.f32 %v1724, %v1908
        %v2031 = vadd.f32 %v1725, %v1913
        %v2032 = vadd.f32 %v1726, %v1918
        %v2033 = vadd.f32 %v1727, %v1923
        %v2034 = vadd.f32 %v1728, %v1928
        %v2035 = vadd.f32 %v1729, %v1933
        %v2036 = vadd.f32 %v1730, %v1938
        %v2037 = vadd.f32 %v1731, %v1943
        %v2038 = vadd.f32 %v1732, %v1948
        %v2039 = vadd.f32 %v1733, %v1953
        %v2040 = vadd.f32 %v1734, %v1958
        %v2041 = vadd.f32 %v1735, %v1963
        %v2042 = vadd.f32 %v1736, %v1968
        %v2043 = vadd.f32 %v1737, %v1973
        %v2044 = vadd.f32 %v1738, %v1978
        %v2045 = vadd.f32 %v1739, %v1983
        %v2046 = vadd.f32 %v1740, %v1988
        %v2047 = vadd.f32 %v1741, %v1993
        %v2048 = vadd.f32 %v1742, %v1998
        %v2049 = vadd.f32 %v1743, %v2003
        %v2050 = vadd.f32 %v1744, %v2008
        %v2051 = vadd.f32 %v1745, %v2013
        %v2052 = vadd.f32 %v1746, %v2018
        %s2053 = sadd.s32 %s212, 2
        %s2054 = smul.u32 %s2053, 40
        %s2055 = scalar_lea.vmem %s210, %s2054
        %v2056 = vld [vmem:[%s2055] sm:$0xff]
        %v2057 = vld [vmem:[%s2055 + $0x8] sm:$0xff]
        %v2058 = vld [vmem:[%s2055 + $0x10] sm:$0xff]
        %v2059 = vld [vmem:[%s2055 + $0x18] sm:$0xff]
        %v2060 = vld [vmem:[%s2055 + $0x28] sm:$0xff]
        %v2061 = vld [vmem:[%s2055 + $0x30] sm:$0xff]
        %v2062 = vld [vmem:[%s2055 + $0x38] sm:$0xff]
        %v2063 = vld [vmem:[%s2055 + $0x40] sm:$0xff]
        %v2064 = vld [vmem:[%s2055 + $0x50] sm:$0xff]
        %v2065 = vld [vmem:[%s2055 + $0x58] sm:$0xff]
        %v2066 = vld [vmem:[%s2055 + $0x60] sm:$0xff]
        %v2067 = vld [vmem:[%s2055 + $0x68] sm:$0xff]
        %v2068 = vld [vmem:[%s2055 + $0x78] sm:$0xff]
        %v2069 = vld [vmem:[%s2055 + $0x80] sm:$0xff]
        %v2070 = vld [vmem:[%s2055 + $0x88] sm:$0xff]
        %v2071 = vld [vmem:[%s2055 + $0x90] sm:$0xff]
        %v2072 = vld [vmem:[%s2055 + $0xa0] sm:$0xff]
        %v2073 = vld [vmem:[%s2055 + $0xa8] sm:$0xff]
        %v2074 = vld [vmem:[%s2055 + $0xb0] sm:$0xff]
        %v2075 = vld [vmem:[%s2055 + $0xb8] sm:$0xff]
        %v2076 = vld [vmem:[%s2055 + $0xc8] sm:$0xff]
        %v2077 = vld [vmem:[%s2055 + $0xd0] sm:$0xff]
        %v2078 = vld [vmem:[%s2055 + $0xd8] sm:$0xff]
        %v2079 = vld [vmem:[%s2055 + $0xe0] sm:$0xff]
        %v2080 = vld [vmem:[%s2055 + $0xf0] sm:$0xff]
        %v2081 = vld [vmem:[%s2055 + $0xf8] sm:$0xff]
        %v2082 = vld [vmem:[%s2055 + $0x100] sm:$0xff]
        %v2083 = vld [vmem:[%s2055 + $0x108] sm:$0xff]
        %v2084 = vld [vmem:[%s2055 + $0x118] sm:$0xff]
        %v2085 = vld [vmem:[%s2055 + $0x120] sm:$0xff]
        %v2086 = vld [vmem:[%s2055 + $0x128] sm:$0xff]
        %v2087 = vld [vmem:[%s2055 + $0x130] sm:$0xff]
        %s2088 = scalar_lea.vmem %s1, 768
        %v2089 = vld [vmem:[%s2088] sm:$0xff]
        %v2090 = vld [vmem:[%s2088 + $0x8] sm:$0xff]
        %v2091 = vld [vmem:[%s2088 + $0x10] sm:$0xff]
        %v2092 = vld [vmem:[%s2088 + $0x18] sm:$0xff]
        %v2093 = vld [vmem:[%s2088 + $0x20] sm:$0xff]
        %v2094 = vld [vmem:[%s2088 + $0x28] sm:$0xff]
        %v2095 = vld [vmem:[%s2088 + $0x30] sm:$0xff]
        %v2096 = vld [vmem:[%s2088 + $0x38] sm:$0xff]
        %v2097 = vld [vmem:[%s2088 + $0x40] sm:$0xff]
        %v2098 = vld [vmem:[%s2088 + $0x48] sm:$0xff]
        %v2099 = vld [vmem:[%s2088 + $0x50] sm:$0xff]
        %v2100 = vld [vmem:[%s2088 + $0x58] sm:$0xff]
        %v2101 = vld [vmem:[%s2088 + $0x60] sm:$0xff]
        %v2102 = vld [vmem:[%s2088 + $0x68] sm:$0xff]
        %v2103 = vld [vmem:[%s2088 + $0x70] sm:$0xff]
        %v2104 = vld [vmem:[%s2088 + $0x78] sm:$0xff]
        %2105 = vmatprep.subr.mxu0 0.0
        %2106 = vmatpush1.msra.mxu0 %v2089
        %2107 = vmatprep.subr.mxu0 0.0
        %2108 = vmatpush1.msra.mxu0 %v2090
        %2109 = vmatprep.subr.mxu0 0.0
        %2110 = vmatpush1.msra.mxu0 %v2091
        %2111 = vmatprep.subr.mxu0 0.0
        %2112 = vmatpush1.msra.mxu0 %v2092
        %2113 = vmatprep.subr.mxu0 0.0
        %2114 = vmatpush1.msra.mxu0 %v2093
        %2115 = vmatprep.subr.mxu0 0.0
        %2116 = vmatpush1.msra.mxu0 %v2094
        %2117 = vmatprep.subr.mxu0 0.0
        %2118 = vmatpush1.msra.mxu0 %v2095
        %2119 = vmatprep.subr.mxu0 0.0
        %2120 = vmatpush1.msra.mxu0 %v2096
        %2121 = vmatprep.subr.mxu0 0.0
        %2122 = vmatpush1.msra.mxu0 %v2097
        %2123 = vmatprep.subr.mxu0 0.0
        %2124 = vmatpush1.msra.mxu0 %v2098
        %2125 = vmatprep.subr.mxu0 0.0
        %2126 = vmatpush1.msra.mxu0 %v2099
        %2127 = vmatprep.subr.mxu0 0.0
        %2128 = vmatpush1.msra.mxu0 %v2100
        %2129 = vmatprep.subr.mxu0 0.0
        %2130 = vmatpush1.msra.mxu0 %v2101
        %2131 = vmatprep.subr.mxu0 0.0
        %2132 = vmatpush1.msra.mxu0 %v2102
        %2133 = vmatprep.subr.mxu0 0.0
        %2134 = vmatpush1.msra.mxu0 %v2103
        %2135 = vmatprep.subr.mxu0 0.0
        %2136 = vmatpush1.msra.mxu0 %v2104
        %2137 = vmatprep.subr.mxu0 0.0
        %2138 = vmatpush1.msra.mxu0 0.0
        %2139 = vmatprep.subr.mxu0 0.0
        %2140 = vmatpush1.msra.mxu0 0.0
        %2141 = vmatprep.subr.mxu0 0.0
        %2142 = vmatpush1.msra.mxu0 0.0
        %2143 = vmatprep.subr.mxu0 0.0
        %2144 = vmatpush1.msra.mxu0 0.0
        %2145 = vmatprep.subr.mxu0 0.0
        %2146 = vmatpush1.msra.mxu0 0.0
        %2147 = vmatprep.subr.mxu0 0.0
        %2148 = vmatpush1.msra.mxu0 0.0
        %2149 = vmatprep.subr.mxu0 0.0
        %2150 = vmatpush1.msra.mxu0 0.0
        %2151 = vmatprep.subr.mxu0 0.0
        %2152 = vmatpush1.msra.mxu0 0.0
        %2153 = vmatprep.subr.mxu0 0.0
        %2154 = vmatpush1.msra.mxu0 0.0
        %2155 = vmatprep.subr.mxu0 0.0
        %2156 = vmatpush1.msra.mxu0 0.0
        %2157 = vmatprep.subr.mxu0 0.0
        %2158 = vmatpush1.msra.mxu0 0.0
        %2159 = vmatprep.subr.mxu0 0.0
        %2160 = vmatpush1.msra.mxu0 0.0
        %2161 = vmatprep.subr.mxu0 0.0
        %2162 = vmatpush1.msra.mxu0 0.0
        %2163 = vmatprep.subr.mxu0 0.0
        %2164 = vmatpush1.msra.mxu0 0.0
        %2165 = vmatprep.subr.mxu0 0.0
        %2166 = vmatpush1.msra.mxu0 0.0
        %2167 = vmatprep.subr.mxu0 0.0
        %2168 = vmatpush1.msra.mxu0 0.0
        %2169 = vmatprep.mubr.f32.mxu0 0.0
        %2170 = vmatmul.mubr.f32.gmra.mrb[0].mxu0 %v2056
        %v2171 = vpop.f32.mrb[0].mxu0
        %v2172 = vadd.f32 0.0, %v2171
        %v2173 = vpop.f32.mrb[0].mxu0
        %2174 = vmatprep.mubr.f32.mxu0 0.0
        %2175 = vmatmul.mubr.f32.gmra.mrb[0].mxu0 %v2057
        %v2176 = vpop.f32.mrb[0].mxu0
        %v2177 = vadd.f32 0.0, %v2176
        %v2178 = vpop.f32.mrb[0].mxu0
        %2179 = vmatprep.mubr.f32.mxu0 0.0
        %2180 = vmatmul.mubr.f32.gmra.mrb[0].mxu0 %v2058
        %v2181 = vpop.f32.mrb[0].mxu0
        %v2182 = vadd.f32 0.0, %v2181
        %v2183 = vpop.f32.mrb[0].mxu0
        %2184 = vmatprep.mubr.f32.mxu0 0.0
        %2185 = vmatmul.mubr.f32.gmra.mrb[0].mxu0 %v2059
        %v2186 = vpop.f32.mrb[0].mxu0
        %v2187 = vadd.f32 0.0, %v2186
        %v2188 = vpop.f32.mrb[0].mxu0
        %2189 = vmatprep.mubr.f32.mxu0 0.0
        %2190 = vmatmul.mubr.f32.gmra.mrb[0].mxu0 %v2060
        %v2191 = vpop.f32.mrb[0].mxu0
        %v2192 = vadd.f32 0.0, %v2191
        %v2193 = vpop.f32.mrb[0].mxu0
        %2194 = vmatprep.mubr.f32.mxu0 0.0
        %2195 = vmatmul.mubr.f32.gmra.mrb[0].mxu0 %v2061
        %v2196 = vpop.f32.mrb[0].mxu0
        %v2197 = vadd.f32 0.0, %v2196
        %v2198 = vpop.f32.mrb[0].mxu0
        %2199 = vmatprep.mubr.f32.mxu0 0.0
        %2200 = vmatmul.mubr.f32.gmra.mrb[0].mxu0 %v2062
        %v2201 = vpop.f32.mrb[0].mxu0
        %v2202 = vadd.f32 0.0, %v2201
        %v2203 = vpop.f32.mrb[0].mxu0
        %2204 = vmatprep.mubr.f32.mxu0 0.0
        %2205 = vmatmul.mubr.f32.gmra.mrb[0].mxu0 %v2063
        %v2206 = vpop.f32.mrb[0].mxu0
        %v2207 = vadd.f32 0.0, %v2206
        %v2208 = vpop.f32.mrb[0].mxu0
        %2209 = vmatprep.mubr.f32.mxu0 0.0
        %2210 = vmatmul.mubr.f32.gmra.mrb[0].mxu0 %v2064
        %v2211 = vpop.f32.mrb[0].mxu0
        %v2212 = vadd.f32 0.0, %v2211
        %v2213 = vpop.f32.mrb[0].mxu0
        %2214 = vmatprep.mubr.f32.mxu0 0.0
        %2215 = vmatmul.mubr.f32.gmra.mrb[0].mxu0 %v2065
        %v2216 = vpop.f32.mrb[0].mxu0
        %v2217 = vadd.f32 0.0, %v2216
        %v2218 = vpop.f32.mrb[0].mxu0
        %2219 = vmatprep.mubr.f32.mxu0 0.0
        %2220 = vmatmul.mubr.f32.gmra.mrb[0].mxu0 %v2066
        %v2221 = vpop.f32.mrb[0].mxu0
        %v2222 = vadd.f32 0.0, %v2221
        %v2223 = vpop.f32.mrb[0].mxu0
        %2224 = vmatprep.mubr.f32.mxu0 0.0
        %2225 = vmatmul.mubr.f32.gmra.mrb[0].mxu0 %v2067
        %v2226 = vpop.f32.mrb[0].mxu0
        %v2227 = vadd.f32 0.0, %v2226
        %v2228 = vpop.f32.mrb[0].mxu0
        %2229 = vmatprep.mubr.f32.mxu0 0.0
        %2230 = vmatmul.mubr.f32.gmra.mrb[0].mxu0 %v2068
        %v2231 = vpop.f32.mrb[0].mxu0
        %v2232 = vadd.f32 0.0, %v2231
        %v2233 = vpop.f32.mrb[0].mxu0
        %2234 = vmatprep.mubr.f32.mxu0 0.0
        %2235 = vmatmul.mubr.f32.gmra.mrb[0].mxu0 %v2069
        %v2236 = vpop.f32.mrb[0].mxu0
        %v2237 = vadd.f32 0.0, %v2236
        %v2238 = vpop.f32.mrb[0].mxu0
        %2239 = vmatprep.mubr.f32.mxu0 0.0
        %2240 = vmatmul.mubr.f32.gmra.mrb[0].mxu0 %v2070
        %v2241 = vpop.f32.mrb[0].mxu0
        %v2242 = vadd.f32 0.0, %v2241
        %v2243 = vpop.f32.mrb[0].mxu0
        %2244 = vmatprep.mubr.f32.mxu0 0.0
        %2245 = vmatmul.mubr.f32.gmra.mrb[0].mxu0 %v2071
        %v2246 = vpop.f32.mrb[0].mxu0
        %v2247 = vadd.f32 0.0, %v2246
        %v2248 = vpop.f32.mrb[0].mxu0
        %2249 = vmatprep.mubr.f32.mxu0 0.0
        %2250 = vmatmul.mubr.f32.gmra.mrb[0].mxu0 %v2072
        %v2251 = vpop.f32.mrb[0].mxu0
        %v2252 = vadd.f32 0.0, %v2251
        %v2253 = vpop.f32.mrb[0].mxu0
        %2254 = vmatprep.mubr.f32.mxu0 0.0
        %2255 = vmatmul.mubr.f32.gmra.mrb[0].mxu0 %v2073
        %v2256 = vpop.f32.mrb[0].mxu0
        %v2257 = vadd.f32 0.0, %v2256
        %v2258 = vpop.f32.mrb[0].mxu0
        %2259 = vmatprep.mubr.f32.mxu0 0.0
        %2260 = vmatmul.mubr.f32.gmra.mrb[0].mxu0 %v2074
        %v2261 = vpop.f32.mrb[0].mxu0
        %v2262 = vadd.f32 0.0, %v2261
        %v2263 = vpop.f32.mrb[0].mxu0
        %2264 = vmatprep.mubr.f32.mxu0 0.0
        %2265 = vmatmul.mubr.f32.gmra.mrb[0].mxu0 %v2075
        %v2266 = vpop.f32.mrb[0].mxu0
        %v2267 = vadd.f32 0.0, %v2266
        %v2268 = vpop.f32.mrb[0].mxu0
        %2269 = vmatprep.mubr.f32.mxu0 0.0
        %2270 = vmatmul.mubr.f32.gmra.mrb[0].mxu0 %v2076
        %v2271 = vpop.f32.mrb[0].mxu0
        %v2272 = vadd.f32 0.0, %v2271
        %v2273 = vpop.f32.mrb[0].mxu0
        %2274 = vmatprep.mubr.f32.mxu0 0.0
        %2275 = vmatmul.mubr.f32.gmra.mrb[0].mxu0 %v2077
        %v2276 = vpop.f32.mrb[0].mxu0
        %v2277 = vadd.f32 0.0, %v2276
        %v2278 = vpop.f32.mrb[0].mxu0
        %2279 = vmatprep.mubr.f32.mxu0 0.0
        %2280 = vmatmul.mubr.f32.gmra.mrb[0].mxu0 %v2078
        %v2281 = vpop.f32.mrb[0].mxu0
        %v2282 = vadd.f32 0.0, %v2281
        %v2283 = vpop.f32.mrb[0].mxu0
        %2284 = vmatprep.mubr.f32.mxu0 0.0
        %2285 = vmatmul.mubr.f32.gmra.mrb[0].mxu0 %v2079
        %v2286 = vpop.f32.mrb[0].mxu0
        %v2287 = vadd.f32 0.0, %v2286
        %v2288 = vpop.f32.mrb[0].mxu0
        %2289 = vmatprep.mubr.f32.mxu0 0.0
        %2290 = vmatmul.mubr.f32.gmra.mrb[0].mxu0 %v2080
        %v2291 = vpop.f32.mrb[0].mxu0
        %v2292 = vadd.f32 0.0, %v2291
        %v2293 = vpop.f32.mrb[0].mxu0
        %2294 = vmatprep.mubr.f32.mxu0 0.0
        %2295 = vmatmul.mubr.f32.gmra.mrb[0].mxu0 %v2081
        %v2296 = vpop.f32.mrb[0].mxu0
        %v2297 = vadd.f32 0.0, %v2296
        %v2298 = vpop.f32.mrb[0].mxu0
        %2299 = vmatprep.mubr.f32.mxu0 0.0
        %2300 = vmatmul.mubr.f32.gmra.mrb[0].mxu0 %v2082
        %v2301 = vpop.f32.mrb[0].mxu0
        %v2302 = vadd.f32 0.0, %v2301
        %v2303 = vpop.f32.mrb[0].mxu0
        %2304 = vmatprep.mubr.f32.mxu0 0.0
        %2305 = vmatmul.mubr.f32.gmra.mrb[0].mxu0 %v2083
        %v2306 = vpop.f32.mrb[0].mxu0
        %v2307 = vadd.f32 0.0, %v2306
        %v2308 = vpop.f32.mrb[0].mxu0
        %2309 = vmatprep.mubr.f32.mxu0 0.0
        %2310 = vmatmul.mubr.f32.gmra.mrb[0].mxu0 %v2084
        %v2311 = vpop.f32.mrb[0].mxu0
        %v2312 = vadd.f32 0.0, %v2311
        %v2313 = vpop.f32.mrb[0].mxu0
        %2314 = vmatprep.mubr.f32.mxu0 0.0
        %2315 = vmatmul.mubr.f32.gmra.mrb[0].mxu0 %v2085
        %v2316 = vpop.f32.mrb[0].mxu0
        %v2317 = vadd.f32 0.0, %v2316
        %v2318 = vpop.f32.mrb[0].mxu0
        %2319 = vmatprep.mubr.f32.mxu0 0.0
        %2320 = vmatmul.mubr.f32.gmra.mrb[0].mxu0 %v2086
        %v2321 = vpop.f32.mrb[0].mxu0
        %v2322 = vadd.f32 0.0, %v2321
        %v2323 = vpop.f32.mrb[0].mxu0
        %2324 = vmatprep.mubr.f32.mxu0 0.0
        %2325 = vmatmul.mubr.f32.gmra.mrb[0].mxu0 %v2087
        %v2326 = vpop.f32.mrb[0].mxu0
        %v2327 = vadd.f32 0.0, %v2326
        %v2328 = vpop.f32.mrb[0].mxu0
        %2329 = vdwg.mxu0
        %v2330 = vadd.f32 %v2021, %v2172
        %v2331 = vadd.f32 %v2022, %v2177
        %v2332 = vadd.f32 %v2023, %v2182
        %v2333 = vadd.f32 %v2024, %v2187
        %v2334 = vadd.f32 %v2025, %v2192
        %v2335 = vadd.f32 %v2026, %v2197
        %v2336 = vadd.f32 %v2027, %v2202
        %v2337 = vadd.f32 %v2028, %v2207
        %v2338 = vadd.f32 %v2029, %v2212
        %v2339 = vadd.f32 %v2030, %v2217
        %v2340 = vadd.f32 %v2031, %v2222
        %v2341 = vadd.f32 %v2032, %v2227
        %v2342 = vadd.f32 %v2033, %v2232
        %v2343 = vadd.f32 %v2034, %v2237
        %v2344 = vadd.f32 %v2035, %v2242
        %v2345 = vadd.f32 %v2036, %v2247
        %v2346 = vadd.f32 %v2037, %v2252
        %v2347 = vadd.f32 %v2038, %v2257
        %v2348 = vadd.f32 %v2039, %v2262
        %v2349 = vadd.f32 %v2040, %v2267
        %v2350 = vadd.f32 %v2041, %v2272
        %v2351 = vadd.f32 %v2042, %v2277
        %v2352 = vadd.f32 %v2043, %v2282
        %v2353 = vadd.f32 %v2044, %v2287
        %v2354 = vadd.f32 %v2045, %v2292
        %v2355 = vadd.f32 %v2046, %v2297
        %v2356 = vadd.f32 %v2047, %v2302
        %v2357 = vadd.f32 %v2048, %v2307
        %v2358 = vadd.f32 %v2049, %v2312
        %v2359 = vadd.f32 %v2050, %v2317
        %v2360 = vadd.f32 %v2051, %v2322
        %v2361 = vadd.f32 %v2052, %v2327
        %v2362 = vld [vmem:[%s2055 + $0x1] sm:$0xff]
        %v2363 = vld [vmem:[%s2055 + $0x9] sm:$0xff]
        %v2364 = vld [vmem:[%s2055 + $0x11] sm:$0xff]
        %v2365 = vld [vmem:[%s2055 + $0x19] sm:$0xff]
        %v2366 = vld [vmem:[%s2055 + $0x29] sm:$0xff]
        %v2367 = vld [vmem:[%s2055 + $0x31] sm:$0xff]
        %v2368 = vld [vmem:[%s2055 + $0x39] sm:$0xff]
        %v2369 = vld [vmem:[%s2055 + $0x41] sm:$0xff]
        %v2370 = vld [vmem:[%s2055 + $0x51] sm:$0xff]
        %v2371 = vld [vmem:[%s2055 + $0x59] sm:$0xff]
        %v2372 = vld [vmem:[%s2055 + $0x61] sm:$0xff]
        %v2373 = vld [vmem:[%s2055 + $0x69] sm:$0xff]
        %v2374 = vld [vmem:[%s2055 + $0x79] sm:$0xff]
        %v2375 = vld [vmem:[%s2055 + $0x81] sm:$0xff]
        %v2376 = vld [vmem:[%s2055 + $0x89] sm:$0xff]
        %v2377 = vld [vmem:[%s2055 + $0x91] sm:$0xff]
        %v2378 = vld [vmem:[%s2055 + $0xa1] sm:$0xff]
        %v2379 = vld [vmem:[%s2055 + $0xa9] sm:$0xff]
        %v2380 = vld [vmem:[%s2055 + $0xb1] sm:$0xff]
        %v2381 = vld [vmem:[%s2055 + $0xb9] sm:$0xff]
        %v2382 = vld [vmem:[%s2055 + $0xc9] sm:$0xff]
        %v2383 = vld [vmem:[%s2055 + $0xd1] sm:$0xff]
        %v2384 = vld [vmem:[%s2055 + $0xd9] sm:$0xff]
        %v2385 = vld [vmem:[%s2055 + $0xe1] sm:$0xff]
        %v2386 = vld [vmem:[%s2055 + $0xf1] sm:$0xff]
        %v2387 = vld [vmem:[%s2055 + $0xf9] sm:$0xff]
        %v2388 = vld [vmem:[%s2055 + $0x101] sm:$0xff]
        %v2389 = vld [vmem:[%s2055 + $0x109] sm:$0xff]
        %v2390 = vld [vmem:[%s2055 + $0x119] sm:$0xff]
        %v2391 = vld [vmem:[%s2055 + $0x121] sm:$0xff]
        %v2392 = vld [vmem:[%s2055 + $0x129] sm:$0xff]
        %v2393 = vld [vmem:[%s2055 + $0x131] sm:$0xff]
        %s2394 = scalar_lea.vmem %s1, 896
        %v2395 = vld [vmem:[%s2394] sm:$0xff]
        %v2396 = vld [vmem:[%s2394 + $0x8] sm:$0xff]
        %v2397 = vld [vmem:[%s2394 + $0x10] sm:$0xff]
        %v2398 = vld [vmem:[%s2394 + $0x18] sm:$0xff]
        %v2399 = vld [vmem:[%s2394 + $0x20] sm:$0xff]
        %v2400 = vld [vmem:[%s2394 + $0x28] sm:$0xff]
        %v2401 = vld [vmem:[%s2394 + $0x30] sm:$0xff]
        %v2402 = vld [vmem:[%s2394 + $0x38] sm:$0xff]
        %v2403 = vld [vmem:[%s2394 + $0x40] sm:$0xff]
        %v2404 = vld [vmem:[%s2394 + $0x48] sm:$0xff]
        %v2405 = vld [vmem:[%s2394 + $0x50] sm:$0xff]
        %v2406 = vld [vmem:[%s2394 + $0x58] sm:$0xff]
        %v2407 = vld [vmem:[%s2394 + $0x60] sm:$0xff]
        %v2408 = vld [vmem:[%s2394 + $0x68] sm:$0xff]
        %v2409 = vld [vmem:[%s2394 + $0x70] sm:$0xff]
        %v2410 = vld [vmem:[%s2394 + $0x78] sm:$0xff]
        %2411 = vmatprep.subr.mxu0 0.0
        %2412 = vmatpush1.msra.mxu0 %v2395
        %2413 = vmatprep.subr.mxu0 0.0
        %2414 = vmatpush1.msra.mxu0 %v2396
        %2415 = vmatprep.subr.mxu0 0.0
        %2416 = vmatpush1.msra.mxu0 %v2397
        %2417 = vmatprep.subr.mxu0 0.0
        %2418 = vmatpush1.msra.mxu0 %v2398
        %2419 = vmatprep.subr.mxu0 0.0
        %2420 = vmatpush1.msra.mxu0 %v2399
        %2421 = vmatprep.subr.mxu0 0.0
        %2422 = vmatpush1.msra.mxu0 %v2400
        %2423 = vmatprep.subr.mxu0 0.0
        %2424 = vmatpush1.msra.mxu0 %v2401
        %2425 = vmatprep.subr.mxu0 0.0
        %2426 = vmatpush1.msra.mxu0 %v2402
        %2427 = vmatprep.subr.mxu0 0.0
        %2428 = vmatpush1.msra.mxu0 %v2403
        %2429 = vmatprep.subr.mxu0 0.0
        %2430 = vmatpush1.msra.mxu0 %v2404
        %2431 = vmatprep.subr.mxu0 0.0
        %2432 = vmatpush1.msra.mxu0 %v2405
        %2433 = vmatprep.subr.mxu0 0.0
        %2434 = vmatpush1.msra.mxu0 %v2406
        %2435 = vmatprep.subr.mxu0 0.0
        %2436 = vmatpush1.msra.mxu0 %v2407
        %2437 = vmatprep.subr.mxu0 0.0
        %2438 = vmatpush1.msra.mxu0 %v2408
        %2439 = vmatprep.subr.mxu0 0.0
        %2440 = vmatpush1.msra.mxu0 %v2409
        %2441 = vmatprep.subr.mxu0 0.0
        %2442 = vmatpush1.msra.mxu0 %v2410
        %2443 = vmatprep.subr.mxu0 0.0
        %2444 = vmatpush1.msra.mxu0 0.0
        %2445 = vmatprep.subr.mxu0 0.0
        %2446 = vmatpush1.msra.mxu0 0.0
        %2447 = vmatprep.subr.mxu0 0.0
        %2448 = vmatpush1.msra.mxu0 0.0
        %2449 = vmatprep.subr.mxu0 0.0
        %2450 = vmatpush1.msra.mxu0 0.0
        %2451 = vmatprep.subr.mxu0 0.0
        %2452 = vmatpush1.msra.mxu0 0.0
        %2453 = vmatprep.subr.mxu0 0.0
        %2454 = vmatpush1.msra.mxu0 0.0
        %2455 = vmatprep.subr.mxu0 0.0
        %2456 = vmatpush1.msra.mxu0 0.0
        %2457 = vmatprep.subr.mxu0 0.0
        %2458 = vmatpush1.msra.mxu0 0.0
        %2459 = vmatprep.subr.mxu0 0.0
        %2460 = vmatpush1.msra.mxu0 0.0
        %2461 = vmatprep.subr.mxu0 0.0
        %2462 = vmatpush1.msra.mxu0 0.0
        %2463 = vmatprep.subr.mxu0 0.0
        %2464 = vmatpush1.msra.mxu0 0.0
        %2465 = vmatprep.subr.mxu0 0.0
        %2466 = vmatpush1.msra.mxu0 0.0
        %2467 = vmatprep.subr.mxu0 0.0
        %2468 = vmatpush1.msra.mxu0 0.0
        %2469 = vmatprep.subr.mxu0 0.0
        %2470 = vmatpush1.msra.mxu0 0.0
        %2471 = vmatprep.subr.mxu0 0.0
        %2472 = vmatpush1.msra.mxu0 0.0
        %2473 = vmatprep.subr.mxu0 0.0
        %2474 = vmatpush1.msra.mxu0 0.0
        %2475 = vmatprep.mubr.f32.mxu0 0.0
        %2476 = vmatmul.mubr.f32.gmra.mrb[0].mxu0 %v2362
        %v2477 = vpop.f32.mrb[0].mxu0
        %v2478 = vadd.f32 0.0, %v2477
        %v2479 = vpop.f32.mrb[0].mxu0
        %2480 = vmatprep.mubr.f32.mxu0 0.0
        %2481 = vmatmul.mubr.f32.gmra.mrb[0].mxu0 %v2363
        %v2482 = vpop.f32.mrb[0].mxu0
        %v2483 = vadd.f32 0.0, %v2482
        %v2484 = vpop.f32.mrb[0].mxu0
        %2485 = vmatprep.mubr.f32.mxu0 0.0
        %2486 = vmatmul.mubr.f32.gmra.mrb[0].mxu0 %v2364
        %v2487 = vpop.f32.mrb[0].mxu0
        %v2488 = vadd.f32 0.0, %v2487
        %v2489 = vpop.f32.mrb[0].mxu0
        %2490 = vmatprep.mubr.f32.mxu0 0.0
        %2491 = vmatmul.mubr.f32.gmra.mrb[0].mxu0 %v2365
        %v2492 = vpop.f32.mrb[0].mxu0
        %v2493 = vadd.f32 0.0, %v2492
        %v2494 = vpop.f32.mrb[0].mxu0
        %2495 = vmatprep.mubr.f32.mxu0 0.0
        %2496 = vmatmul.mubr.f32.gmra.mrb[0].mxu0 %v2366
        %v2497 = vpop.f32.mrb[0].mxu0
        %v2498 = vadd.f32 0.0, %v2497
        %v2499 = vpop.f32.mrb[0].mxu0
        %2500 = vmatprep.mubr.f32.mxu0 0.0
        %2501 = vmatmul.mubr.f32.gmra.mrb[0].mxu0 %v2367
        %v2502 = vpop.f32.mrb[0].mxu0
        %v2503 = vadd.f32 0.0, %v2502
        %v2504 = vpop.f32.mrb[0].mxu0
        %2505 = vmatprep.mubr.f32.mxu0 0.0
        %2506 = vmatmul.mubr.f32.gmra.mrb[0].mxu0 %v2368
        %v2507 = vpop.f32.mrb[0].mxu0
        %v2508 = vadd.f32 0.0, %v2507
        %v2509 = vpop.f32.mrb[0].mxu0
        %2510 = vmatprep.mubr.f32.mxu0 0.0
        %2511 = vmatmul.mubr.f32.gmra.mrb[0].mxu0 %v2369
        %v2512 = vpop.f32.mrb[0].mxu0
        %v2513 = vadd.f32 0.0, %v2512
        %v2514 = vpop.f32.mrb[0].mxu0
        %2515 = vmatprep.mubr.f32.mxu0 0.0
        %2516 = vmatmul.mubr.f32.gmra.mrb[0].mxu0 %v2370
        %v2517 = vpop.f32.mrb[0].mxu0
        %v2518 = vadd.f32 0.0, %v2517
        %v2519 = vpop.f32.mrb[0].mxu0
        %2520 = vmatprep.mubr.f32.mxu0 0.0
        %2521 = vmatmul.mubr.f32.gmra.mrb[0].mxu0 %v2371
        %v2522 = vpop.f32.mrb[0].mxu0
        %v2523 = vadd.f32 0.0, %v2522
        %v2524 = vpop.f32.mrb[0].mxu0
        %2525 = vmatprep.mubr.f32.mxu0 0.0
        %2526 = vmatmul.mubr.f32.gmra.mrb[0].mxu0 %v2372
        %v2527 = vpop.f32.mrb[0].mxu0
        %v2528 = vadd.f32 0.0, %v2527
        %v2529 = vpop.f32.mrb[0].mxu0
        %2530 = vmatprep.mubr.f32.mxu0 0.0
        %2531 = vmatmul.mubr.f32.gmra.mrb[0].mxu0 %v2373
        %v2532 = vpop.f32.mrb[0].mxu0
        %v2533 = vadd.f32 0.0, %v2532
        %v2534 = vpop.f32.mrb[0].mxu0
        %2535 = vmatprep.mubr.f32.mxu0 0.0
        %2536 = vmatmul.mubr.f32.gmra.mrb[0].mxu0 %v2374
        %v2537 = vpop.f32.mrb[0].mxu0
        %v2538 = vadd.f32 0.0, %v2537
        %v2539 = vpop.f32.mrb[0].mxu0
        %2540 = vmatprep.mubr.f32.mxu0 0.0
        %2541 = vmatmul.mubr.f32.gmra.mrb[0].mxu0 %v2375
        %v2542 = vpop.f32.mrb[0].mxu0
        %v2543 = vadd.f32 0.0, %v2542
        %v2544 = vpop.f32.mrb[0].mxu0
        %2545 = vmatprep.mubr.f32.mxu0 0.0
        %2546 = vmatmul.mubr.f32.gmra.mrb[0].mxu0 %v2376
        %v2547 = vpop.f32.mrb[0].mxu0
        %v2548 = vadd.f32 0.0, %v2547
        %v2549 = vpop.f32.mrb[0].mxu0
        %2550 = vmatprep.mubr.f32.mxu0 0.0
        %2551 = vmatmul.mubr.f32.gmra.mrb[0].mxu0 %v2377
        %v2552 = vpop.f32.mrb[0].mxu0
        %v2553 = vadd.f32 0.0, %v2552
        %v2554 = vpop.f32.mrb[0].mxu0
        %2555 = vmatprep.mubr.f32.mxu0 0.0
        %2556 = vmatmul.mubr.f32.gmra.mrb[0].mxu0 %v2378
        %v2557 = vpop.f32.mrb[0].mxu0
        %v2558 = vadd.f32 0.0, %v2557
        %v2559 = vpop.f32.mrb[0].mxu0
        %2560 = vmatprep.mubr.f32.mxu0 0.0
        %2561 = vmatmul.mubr.f32.gmra.mrb[0].mxu0 %v2379
        %v2562 = vpop.f32.mrb[0].mxu0
        %v2563 = vadd.f32 0.0, %v2562
        %v2564 = vpop.f32.mrb[0].mxu0
        %2565 = vmatprep.mubr.f32.mxu0 0.0
        %2566 = vmatmul.mubr.f32.gmra.mrb[0].mxu0 %v2380
        %v2567 = vpop.f32.mrb[0].mxu0
        %v2568 = vadd.f32 0.0, %v2567
        %v2569 = vpop.f32.mrb[0].mxu0
        %2570 = vmatprep.mubr.f32.mxu0 0.0
        %2571 = vmatmul.mubr.f32.gmra.mrb[0].mxu0 %v2381
        %v2572 = vpop.f32.mrb[0].mxu0
        %v2573 = vadd.f32 0.0, %v2572
        %v2574 = vpop.f32.mrb[0].mxu0
        %2575 = vmatprep.mubr.f32.mxu0 0.0
        %2576 = vmatmul.mubr.f32.gmra.mrb[0].mxu0 %v2382
        %v2577 = vpop.f32.mrb[0].mxu0
        %v2578 = vadd.f32 0.0, %v2577
        %v2579 = vpop.f32.mrb[0].mxu0
        %2580 = vmatprep.mubr.f32.mxu0 0.0
        %2581 = vmatmul.mubr.f32.gmra.mrb[0].mxu0 %v2383
        %v2582 = vpop.f32.mrb[0].mxu0
        %v2583 = vadd.f32 0.0, %v2582
        %v2584 = vpop.f32.mrb[0].mxu0
        %2585 = vmatprep.mubr.f32.mxu0 0.0
        %2586 = vmatmul.mubr.f32.gmra.mrb[0].mxu0 %v2384
        %v2587 = vpop.f32.mrb[0].mxu0
        %v2588 = vadd.f32 0.0, %v2587
        %v2589 = vpop.f32.mrb[0].mxu0
        %2590 = vmatprep.mubr.f32.mxu0 0.0
        %2591 = vmatmul.mubr.f32.gmra.mrb[0].mxu0 %v2385
        %v2592 = vpop.f32.mrb[0].mxu0
        %v2593 = vadd.f32 0.0, %v2592
        %v2594 = vpop.f32.mrb[0].mxu0
        %2595 = vmatprep.mubr.f32.mxu0 0.0
        %2596 = vmatmul.mubr.f32.gmra.mrb[0].mxu0 %v2386
        %v2597 = vpop.f32.mrb[0].mxu0
        %v2598 = vadd.f32 0.0, %v2597
        %v2599 = vpop.f32.mrb[0].mxu0
        %2600 = vmatprep.mubr.f32.mxu0 0.0
        %2601 = vmatmul.mubr.f32.gmra.mrb[0].mxu0 %v2387
        %v2602 = vpop.f32.mrb[0].mxu0
        %v2603 = vadd.f32 0.0, %v2602
        %v2604 = vpop.f32.mrb[0].mxu0
        %2605 = vmatprep.mubr.f32.mxu0 0.0
        %2606 = vmatmul.mubr.f32.gmra.mrb[0].mxu0 %v2388
        %v2607 = vpop.f32.mrb[0].mxu0
        %v2608 = vadd.f32 0.0, %v2607
        %v2609 = vpop.f32.mrb[0].mxu0
        %2610 = vmatprep.mubr.f32.mxu0 0.0
        %2611 = vmatmul.mubr.f32.gmra.mrb[0].mxu0 %v2389
        %v2612 = vpop.f32.mrb[0].mxu0
        %v2613 = vadd.f32 0.0, %v2612
        %v2614 = vpop.f32.mrb[0].mxu0
        %2615 = vmatprep.mubr.f32.mxu0 0.0
        %2616 = vmatmul.mubr.f32.gmra.mrb[0].mxu0 %v2390
        %v2617 = vpop.f32.mrb[0].mxu0
        %v2618 = vadd.f32 0.0, %v2617
        %v2619 = vpop.f32.mrb[0].mxu0
        %2620 = vmatprep.mubr.f32.mxu0 0.0
        %2621 = vmatmul.mubr.f32.gmra.mrb[0].mxu0 %v2391
        %v2622 = vpop.f32.mrb[0].mxu0
        %v2623 = vadd.f32 0.0, %v2622
        %v2624 = vpop.f32.mrb[0].mxu0
        %2625 = vmatprep.mubr.f32.mxu0 0.0
        %2626 = vmatmul.mubr.f32.gmra.mrb[0].mxu0 %v2392
        %v2627 = vpop.f32.mrb[0].mxu0
        %v2628 = vadd.f32 0.0, %v2627
        %v2629 = vpop.f32.mrb[0].mxu0
        %2630 = vmatprep.mubr.f32.mxu0 0.0
        %2631 = vmatmul.mubr.f32.gmra.mrb[0].mxu0 %v2393
        %v2632 = vpop.f32.mrb[0].mxu0
        %v2633 = vadd.f32 0.0, %v2632
        %v2634 = vpop.f32.mrb[0].mxu0
        %2635 = vdwg.mxu0
        %v2636 = vadd.f32 %v2330, %v2478
        %v2637 = vadd.f32 %v2331, %v2483
        %v2638 = vadd.f32 %v2332, %v2488
        %v2639 = vadd.f32 %v2333, %v2493
        %v2640 = vadd.f32 %v2334, %v2498
        %v2641 = vadd.f32 %v2335, %v2503
        %v2642 = vadd.f32 %v2336, %v2508
        %v2643 = vadd.f32 %v2337, %v2513
        %v2644 = vadd.f32 %v2338, %v2518
        %v2645 = vadd.f32 %v2339, %v2523
        %v2646 = vadd.f32 %v2340, %v2528
        %v2647 = vadd.f32 %v2341, %v2533
        %v2648 = vadd.f32 %v2342, %v2538
        %v2649 = vadd.f32 %v2343, %v2543
        %v2650 = vadd.f32 %v2344, %v2548
        %v2651 = vadd.f32 %v2345, %v2553
        %v2652 = vadd.f32 %v2346, %v2558
        %v2653 = vadd.f32 %v2347, %v2563
        %v2654 = vadd.f32 %v2348, %v2568
        %v2655 = vadd.f32 %v2349, %v2573
        %v2656 = vadd.f32 %v2350, %v2578
        %v2657 = vadd.f32 %v2351, %v2583
        %v2658 = vadd.f32 %v2352, %v2588
        %v2659 = vadd.f32 %v2353, %v2593
        %v2660 = vadd.f32 %v2354, %v2598
        %v2661 = vadd.f32 %v2355, %v2603
        %v2662 = vadd.f32 %v2356, %v2608
        %v2663 = vadd.f32 %v2357, %v2613
        %v2664 = vadd.f32 %v2358, %v2618
        %v2665 = vadd.f32 %v2359, %v2623
        %v2666 = vadd.f32 %v2360, %v2628
        %v2667 = vadd.f32 %v2361, %v2633
        %v2668 = vld [vmem:[%s2055 + $0x2] sm:$0xff]
        %v2669 = vld [vmem:[%s2055 + $0xa] sm:$0xff]
        %v2670 = vld [vmem:[%s2055 + $0x12] sm:$0xff]
        %v2671 = vld [vmem:[%s2055 + $0x1a] sm:$0xff]
        %v2672 = vld [vmem:[%s2055 + $0x2a] sm:$0xff]
        %v2673 = vld [vmem:[%s2055 + $0x32] sm:$0xff]
        %v2674 = vld [vmem:[%s2055 + $0x3a] sm:$0xff]
        %v2675 = vld [vmem:[%s2055 + $0x42] sm:$0xff]
        %v2676 = vld [vmem:[%s2055 + $0x52] sm:$0xff]
        %v2677 = vld [vmem:[%s2055 + $0x5a] sm:$0xff]
        %v2678 = vld [vmem:[%s2055 + $0x62] sm:$0xff]
        %v2679 = vld [vmem:[%s2055 + $0x6a] sm:$0xff]
        %v2680 = vld [vmem:[%s2055 + $0x7a] sm:$0xff]
        %v2681 = vld [vmem:[%s2055 + $0x82] sm:$0xff]
        %v2682 = vld [vmem:[%s2055 + $0x8a] sm:$0xff]
        %v2683 = vld [vmem:[%s2055 + $0x92] sm:$0xff]
        %v2684 = vld [vmem:[%s2055 + $0xa2] sm:$0xff]
        %v2685 = vld [vmem:[%s2055 + $0xaa] sm:$0xff]
        %v2686 = vld [vmem:[%s2055 + $0xb2] sm:$0xff]
        %v2687 = vld [vmem:[%s2055 + $0xba] sm:$0xff]
        %v2688 = vld [vmem:[%s2055 + $0xca] sm:$0xff]
        %v2689 = vld [vmem:[%s2055 + $0xd2] sm:$0xff]
        %v2690 = vld [vmem:[%s2055 + $0xda] sm:$0xff]
        %v2691 = vld [vmem:[%s2055 + $0xe2] sm:$0xff]
        %v2692 = vld [vmem:[%s2055 + $0xf2] sm:$0xff]
        %v2693 = vld [vmem:[%s2055 + $0xfa] sm:$0xff]
        %v2694 = vld [vmem:[%s2055 + $0x102] sm:$0xff]
        %v2695 = vld [vmem:[%s2055 + $0x10a] sm:$0xff]
        %v2696 = vld [vmem:[%s2055 + $0x11a] sm:$0xff]
        %v2697 = vld [vmem:[%s2055 + $0x122] sm:$0xff]
        %v2698 = vld [vmem:[%s2055 + $0x12a] sm:$0xff]
        %v2699 = vld [vmem:[%s2055 + $0x132] sm:$0xff]
        %s2700 = scalar_lea.vmem %s1, 1024
        %v2701 = vld [vmem:[%s2700] sm:$0xff]
        %v2702 = vld [vmem:[%s2700 + $0x8] sm:$0xff]
        %v2703 = vld [vmem:[%s2700 + $0x10] sm:$0xff]
        %v2704 = vld [vmem:[%s2700 + $0x18] sm:$0xff]
        %v2705 = vld [vmem:[%s2700 + $0x20] sm:$0xff]
        %v2706 = vld [vmem:[%s2700 + $0x28] sm:$0xff]
        %v2707 = vld [vmem:[%s2700 + $0x30] sm:$0xff]
        %v2708 = vld [vmem:[%s2700 + $0x38] sm:$0xff]
        %v2709 = vld [vmem:[%s2700 + $0x40] sm:$0xff]
        %v2710 = vld [vmem:[%s2700 + $0x48] sm:$0xff]
        %v2711 = vld [vmem:[%s2700 + $0x50] sm:$0xff]
        %v2712 = vld [vmem:[%s2700 + $0x58] sm:$0xff]
        %v2713 = vld [vmem:[%s2700 + $0x60] sm:$0xff]
        %v2714 = vld [vmem:[%s2700 + $0x68] sm:$0xff]
        %v2715 = vld [vmem:[%s2700 + $0x70] sm:$0xff]
        %v2716 = vld [vmem:[%s2700 + $0x78] sm:$0xff]
        %2717 = vmatprep.subr.mxu0 0.0
        %2718 = vmatpush1.msra.mxu0 %v2701
        %2719 = vmatprep.subr.mxu0 0.0
        %2720 = vmatpush1.msra.mxu0 %v2702
        %2721 = vmatprep.subr.mxu0 0.0
        %2722 = vmatpush1.msra.mxu0 %v2703
        %2723 = vmatprep.subr.mxu0 0.0
        %2724 = vmatpush1.msra.mxu0 %v2704
        %2725 = vmatprep.subr.mxu0 0.0
        %2726 = vmatpush1.msra.mxu0 %v2705
        %2727 = vmatprep.subr.mxu0 0.0
        %2728 = vmatpush1.msra.mxu0 %v2706
        %2729 = vmatprep.subr.mxu0 0.0
        %2730 = vmatpush1.msra.mxu0 %v2707
        %2731 = vmatprep.subr.mxu0 0.0
        %2732 = vmatpush1.msra.mxu0 %v2708
        %2733 = vmatprep.subr.mxu0 0.0
        %2734 = vmatpush1.msra.mxu0 %v2709
        %2735 = vmatprep.subr.mxu0 0.0
        %2736 = vmatpush1.msra.mxu0 %v2710
        %2737 = vmatprep.subr.mxu0 0.0
        %2738 = vmatpush1.msra.mxu0 %v2711
        %2739 = vmatprep.subr.mxu0 0.0
        %2740 = vmatpush1.msra.mxu0 %v2712
        %2741 = vmatprep.subr.mxu0 0.0
        %2742 = vmatpush1.msra.mxu0 %v2713
        %2743 = vmatprep.subr.mxu0 0.0
        %2744 = vmatpush1.msra.mxu0 %v2714
        %2745 = vmatprep.subr.mxu0 0.0
        %2746 = vmatpush1.msra.mxu0 %v2715
        %2747 = vmatprep.subr.mxu0 0.0
        %2748 = vmatpush1.msra.mxu0 %v2716
        %2749 = vmatprep.subr.mxu0 0.0
        %2750 = vmatpush1.msra.mxu0 0.0
        %2751 = vmatprep.subr.mxu0 0.0
        %2752 = vmatpush1.msra.mxu0 0.0
        %2753 = vmatprep.subr.mxu0 0.0
        %2754 = vmatpush1.msra.mxu0 0.0
        %2755 = vmatprep.subr.mxu0 0.0
        %2756 = vmatpush1.msra.mxu0 0.0
        %2757 = vmatprep.subr.mxu0 0.0
        %2758 = vmatpush1.msra.mxu0 0.0
        %2759 = vmatprep.subr.mxu0 0.0
        %2760 = vmatpush1.msra.mxu0 0.0
        %2761 = vmatprep.subr.mxu0 0.0
        %2762 = vmatpush1.msra.mxu0 0.0
        %2763 = vmatprep.subr.mxu0 0.0
        %2764 = vmatpush1.msra.mxu0 0.0
        %2765 = vmatprep.subr.mxu0 0.0
        %2766 = vmatpush1.msra.mxu0 0.0
        %2767 = vmatprep.subr.mxu0 0.0
        %2768 = vmatpush1.msra.mxu0 0.0
        %2769 = vmatprep.subr.mxu0 0.0
        %2770 = vmatpush1.msra.mxu0 0.0
        %2771 = vmatprep.subr.mxu0 0.0
        %2772 = vmatpush1.msra.mxu0 0.0
        %2773 = vmatprep.subr.mxu0 0.0
        %2774 = vmatpush1.msra.mxu0 0.0
        %2775 = vmatprep.subr.mxu0 0.0
        %2776 = vmatpush1.msra.mxu0 0.0
        %2777 = vmatprep.subr.mxu0 0.0
        %2778 = vmatpush1.msra.mxu0 0.0
        %2779 = vmatprep.subr.mxu0 0.0
        %2780 = vmatpush1.msra.mxu0 0.0
        %2781 = vmatprep.mubr.f32.mxu0 0.0
        %2782 = vmatmul.mubr.f32.gmra.mrb[0].mxu0 %v2668
        %v2783 = vpop.f32.mrb[0].mxu0
        %v2784 = vadd.f32 0.0, %v2783
        %v2785 = vpop.f32.mrb[0].mxu0
        %2786 = vmatprep.mubr.f32.mxu0 0.0
        %2787 = vmatmul.mubr.f32.gmra.mrb[0].mxu0 %v2669
        %v2788 = vpop.f32.mrb[0].mxu0
        %v2789 = vadd.f32 0.0, %v2788
        %v2790 = vpop.f32.mrb[0].mxu0
        %2791 = vmatprep.mubr.f32.mxu0 0.0
        %2792 = vmatmul.mubr.f32.gmra.mrb[0].mxu0 %v2670
        %v2793 = vpop.f32.mrb[0].mxu0
        %v2794 = vadd.f32 0.0, %v2793
        %v2795 = vpop.f32.mrb[0].mxu0
        %2796 = vmatprep.mubr.f32.mxu0 0.0
        %2797 = vmatmul.mubr.f32.gmra.mrb[0].mxu0 %v2671
        %v2798 = vpop.f32.mrb[0].mxu0
        %v2799 = vadd.f32 0.0, %v2798
        %v2800 = vpop.f32.mrb[0].mxu0
        %2801 = vmatprep.mubr.f32.mxu0 0.0
        %2802 = vmatmul.mubr.f32.gmra.mrb[0].mxu0 %v2672
        %v2803 = vpop.f32.mrb[0].mxu0
        %v2804 = vadd.f32 0.0, %v2803
        %v2805 = vpop.f32.mrb[0].mxu0
        %2806 = vmatprep.mubr.f32.mxu0 0.0
        %2807 = vmatmul.mubr.f32.gmra.mrb[0].mxu0 %v2673
        %v2808 = vpop.f32.mrb[0].mxu0
        %v2809 = vadd.f32 0.0, %v2808
        %v2810 = vpop.f32.mrb[0].mxu0
        %2811 = vmatprep.mubr.f32.mxu0 0.0
        %2812 = vmatmul.mubr.f32.gmra.mrb[0].mxu0 %v2674
        %v2813 = vpop.f32.mrb[0].mxu0
        %v2814 = vadd.f32 0.0, %v2813
        %v2815 = vpop.f32.mrb[0].mxu0
        %2816 = vmatprep.mubr.f32.mxu0 0.0
        %2817 = vmatmul.mubr.f32.gmra.mrb[0].mxu0 %v2675
        %v2818 = vpop.f32.mrb[0].mxu0
        %v2819 = vadd.f32 0.0, %v2818
        %v2820 = vpop.f32.mrb[0].mxu0
        %2821 = vmatprep.mubr.f32.mxu0 0.0
        %2822 = vmatmul.mubr.f32.gmra.mrb[0].mxu0 %v2676
        %v2823 = vpop.f32.mrb[0].mxu0
        %v2824 = vadd.f32 0.0, %v2823
        %v2825 = vpop.f32.mrb[0].mxu0
        %2826 = vmatprep.mubr.f32.mxu0 0.0
        %2827 = vmatmul.mubr.f32.gmra.mrb[0].mxu0 %v2677
        %v2828 = vpop.f32.mrb[0].mxu0
        %v2829 = vadd.f32 0.0, %v2828
        %v2830 = vpop.f32.mrb[0].mxu0
        %2831 = vmatprep.mubr.f32.mxu0 0.0
        %2832 = vmatmul.mubr.f32.gmra.mrb[0].mxu0 %v2678
        %v2833 = vpop.f32.mrb[0].mxu0
        %v2834 = vadd.f32 0.0, %v2833
        %v2835 = vpop.f32.mrb[0].mxu0
        %2836 = vmatprep.mubr.f32.mxu0 0.0
        %2837 = vmatmul.mubr.f32.gmra.mrb[0].mxu0 %v2679
        %v2838 = vpop.f32.mrb[0].mxu0
        %v2839 = vadd.f32 0.0, %v2838
        %v2840 = vpop.f32.mrb[0].mxu0
        %2841 = vmatprep.mubr.f32.mxu0 0.0
        %2842 = vmatmul.mubr.f32.gmra.mrb[0].mxu0 %v2680
        %v2843 = vpop.f32.mrb[0].mxu0
        %v2844 = vadd.f32 0.0, %v2843
        %v2845 = vpop.f32.mrb[0].mxu0
        %2846 = vmatprep.mubr.f32.mxu0 0.0
        %2847 = vmatmul.mubr.f32.gmra.mrb[0].mxu0 %v2681
        %v2848 = vpop.f32.mrb[0].mxu0
        %v2849 = vadd.f32 0.0, %v2848
        %v2850 = vpop.f32.mrb[0].mxu0
        %2851 = vmatprep.mubr.f32.mxu0 0.0
        %2852 = vmatmul.mubr.f32.gmra.mrb[0].mxu0 %v2682
        %v2853 = vpop.f32.mrb[0].mxu0
        %v2854 = vadd.f32 0.0, %v2853
        %v2855 = vpop.f32.mrb[0].mxu0
        %2856 = vmatprep.mubr.f32.mxu0 0.0
        %2857 = vmatmul.mubr.f32.gmra.mrb[0].mxu0 %v2683
        %v2858 = vpop.f32.mrb[0].mxu0
        %v2859 = vadd.f32 0.0, %v2858
        %v2860 = vpop.f32.mrb[0].mxu0
        %2861 = vmatprep.mubr.f32.mxu0 0.0
        %2862 = vmatmul.mubr.f32.gmra.mrb[0].mxu0 %v2684
        %v2863 = vpop.f32.mrb[0].mxu0
        %v2864 = vadd.f32 0.0, %v2863
        %v2865 = vpop.f32.mrb[0].mxu0
        %2866 = vmatprep.mubr.f32.mxu0 0.0
        %2867 = vmatmul.mubr.f32.gmra.mrb[0].mxu0 %v2685
        %v2868 = vpop.f32.mrb[0].mxu0
        %v2869 = vadd.f32 0.0, %v2868
        %v2870 = vpop.f32.mrb[0].mxu0
        %2871 = vmatprep.mubr.f32.mxu0 0.0
        %2872 = vmatmul.mubr.f32.gmra.mrb[0].mxu0 %v2686
        %v2873 = vpop.f32.mrb[0].mxu0
        %v2874 = vadd.f32 0.0, %v2873
        %v2875 = vpop.f32.mrb[0].mxu0
        %2876 = vmatprep.mubr.f32.mxu0 0.0
        %2877 = vmatmul.mubr.f32.gmra.mrb[0].mxu0 %v2687
        %v2878 = vpop.f32.mrb[0].mxu0
        %v2879 = vadd.f32 0.0, %v2878
        %v2880 = vpop.f32.mrb[0].mxu0
        %2881 = vmatprep.mubr.f32.mxu0 0.0
        %2882 = vmatmul.mubr.f32.gmra.mrb[0].mxu0 %v2688
        %v2883 = vpop.f32.mrb[0].mxu0
        %v2884 = vadd.f32 0.0, %v2883
        %v2885 = vpop.f32.mrb[0].mxu0
        %2886 = vmatprep.mubr.f32.mxu0 0.0
        %2887 = vmatmul.mubr.f32.gmra.mrb[0].mxu0 %v2689
        %v2888 = vpop.f32.mrb[0].mxu0
        %v2889 = vadd.f32 0.0, %v2888
        %v2890 = vpop.f32.mrb[0].mxu0
        %2891 = vmatprep.mubr.f32.mxu0 0.0
        %2892 = vmatmul.mubr.f32.gmra.mrb[0].mxu0 %v2690
        %v2893 = vpop.f32.mrb[0].mxu0
        %v2894 = vadd.f32 0.0, %v2893
        %v2895 = vpop.f32.mrb[0].mxu0
        %2896 = vmatprep.mubr.f32.mxu0 0.0
        %2897 = vmatmul.mubr.f32.gmra.mrb[0].mxu0 %v2691
        %v2898 = vpop.f32.mrb[0].mxu0
        %v2899 = vadd.f32 0.0, %v2898
        %v2900 = vpop.f32.mrb[0].mxu0
        %2901 = vmatprep.mubr.f32.mxu0 0.0
        %2902 = vmatmul.mubr.f32.gmra.mrb[0].mxu0 %v2692
        %v2903 = vpop.f32.mrb[0].mxu0
        %v2904 = vadd.f32 0.0, %v2903
        %v2905 = vpop.f32.mrb[0].mxu0
        %2906 = vmatprep.mubr.f32.mxu0 0.0
        %2907 = vmatmul.mubr.f32.gmra.mrb[0].mxu0 %v2693
        %v2908 = vpop.f32.mrb[0].mxu0
        %v2909 = vadd.f32 0.0, %v2908
        %v2910 = vpop.f32.mrb[0].mxu0
        %2911 = vmatprep.mubr.f32.mxu0 0.0
        %2912 = vmatmul.mubr.f32.gmra.mrb[0].mxu0 %v2694
        %v2913 = vpop.f32.mrb[0].mxu0
        %v2914 = vadd.f32 0.0, %v2913
        %v2915 = vpop.f32.mrb[0].mxu0
        %2916 = vmatprep.mubr.f32.mxu0 0.0
        %2917 = vmatmul.mubr.f32.gmra.mrb[0].mxu0 %v2695
        %v2918 = vpop.f32.mrb[0].mxu0
        %v2919 = vadd.f32 0.0, %v2918
        %v2920 = vpop.f32.mrb[0].mxu0
        %2921 = vmatprep.mubr.f32.mxu0 0.0
        %2922 = vmatmul.mubr.f32.gmra.mrb[0].mxu0 %v2696
        %v2923 = vpop.f32.mrb[0].mxu0
        %v2924 = vadd.f32 0.0, %v2923
        %v2925 = vpop.f32.mrb[0].mxu0
        %2926 = vmatprep.mubr.f32.mxu0 0.0
        %2927 = vmatmul.mubr.f32.gmra.mrb[0].mxu0 %v2697
        %v2928 = vpop.f32.mrb[0].mxu0
        %v2929 = vadd.f32 0.0, %v2928
        %v2930 = vpop.f32.mrb[0].mxu0
        %2931 = vmatprep.mubr.f32.mxu0 0.0
        %2932 = vmatmul.mubr.f32.gmra.mrb[0].mxu0 %v2698
        %v2933 = vpop.f32.mrb[0].mxu0
        %v2934 = vadd.f32 0.0, %v2933
        %v2935 = vpop.f32.mrb[0].mxu0
        %2936 = vmatprep.mubr.f32.mxu0 0.0
        %2937 = vmatmul.mubr.f32.gmra.mrb[0].mxu0 %v2699
        %v2938 = vpop.f32.mrb[0].mxu0
        %v2939 = vadd.f32 0.0, %v2938
        %v2940 = vpop.f32.mrb[0].mxu0
        %2941 = vdwg.mxu0
        %v2942 = vadd.f32 %v2636, %v2784
        %v2943 = vadd.f32 %v2637, %v2789
        %v2944 = vadd.f32 %v2638, %v2794
        %v2945 = vadd.f32 %v2639, %v2799
        %v2946 = vadd.f32 %v2640, %v2804
        %v2947 = vadd.f32 %v2641, %v2809
        %v2948 = vadd.f32 %v2642, %v2814
        %v2949 = vadd.f32 %v2643, %v2819
        %v2950 = vadd.f32 %v2644, %v2824
        %v2951 = vadd.f32 %v2645, %v2829
        %v2952 = vadd.f32 %v2646, %v2834
        %v2953 = vadd.f32 %v2647, %v2839
        %v2954 = vadd.f32 %v2648, %v2844
        %v2955 = vadd.f32 %v2649, %v2849
        %v2956 = vadd.f32 %v2650, %v2854
        %v2957 = vadd.f32 %v2651, %v2859
        %v2958 = vadd.f32 %v2652, %v2864
        %v2959 = vadd.f32 %v2653, %v2869
        %v2960 = vadd.f32 %v2654, %v2874
        %v2961 = vadd.f32 %v2655, %v2879
        %v2962 = vadd.f32 %v2656, %v2884
        %v2963 = vadd.f32 %v2657, %v2889
        %v2964 = vadd.f32 %v2658, %v2894
        %v2965 = vadd.f32 %v2659, %v2899
        %v2966 = vadd.f32 %v2660, %v2904
        %v2967 = vadd.f32 %v2661, %v2909
        %v2968 = vadd.f32 %v2662, %v2914
        %v2969 = vadd.f32 %v2663, %v2919
        %v2970 = vadd.f32 %v2664, %v2924
        %v2971 = vadd.f32 %v2665, %v2929
        %v2972 = vadd.f32 %v2666, %v2934
        %v2973 = vadd.f32 %v2667, %v2939
        %v2974 = vld [vmem:[%s2] sm:$0x1]
        %v2976 = vlaneseq
        %v2977 = vshrl.u32 %v2976, 7
        %v2978 = vsub.s32 0, %v2977
        %v2979 = vrot.slane %v2974, %v2978
        %v2981 = vadd.f32 %v2942, %v2979
        %v2982 = vadd.f32 %v2943, %v2979
        %v2983 = vadd.f32 %v2944, %v2979
        %v2984 = vadd.f32 %v2945, %v2979
        %v2985 = vadd.f32 %v2946, %v2979
        %v2986 = vadd.f32 %v2947, %v2979
        %v2987 = vadd.f32 %v2948, %v2979
        %v2988 = vadd.f32 %v2949, %v2979
        %v2989 = vadd.f32 %v2950, %v2979
        %v2990 = vadd.f32 %v2951, %v2979
        %v2991 = vadd.f32 %v2952, %v2979
        %v2992 = vadd.f32 %v2953, %v2979
        %v2993 = vadd.f32 %v2954, %v2979
        %v2994 = vadd.f32 %v2955, %v2979
        %v2995 = vadd.f32 %v2956, %v2979
        %v2996 = vadd.f32 %v2957, %v2979
        %v2997 = vadd.f32 %v2958, %v2979
        %v2998 = vadd.f32 %v2959, %v2979
        %v2999 = vadd.f32 %v2960, %v2979
        %v3000 = vadd.f32 %v2961, %v2979
        %v3001 = vadd.f32 %v2962, %v2979
        %v3002 = vadd.f32 %v2963, %v2979
        %v3003 = vadd.f32 %v2964, %v2979
        %v3004 = vadd.f32 %v2965, %v2979
        %v3005 = vadd.f32 %v2966, %v2979
        %v3006 = vadd.f32 %v2967, %v2979
        %v3007 = vadd.f32 %v2968, %v2979
        %v3008 = vadd.f32 %v2969, %v2979
        %v3009 = vadd.f32 %v2970, %v2979
        %v3010 = vadd.f32 %v2971, %v2979
        %v3011 = vadd.f32 %v2972, %v2979
        %v3012 = vadd.f32 %v2973, %v2979
        %vm3013 = vcmp.gt.f32.partialorder %v2981, 0.0
        %vm3014 = vcmp.gt.f32.partialorder %v2982, 0.0
        %vm3015 = vcmp.gt.f32.partialorder %v2983, 0.0
        %vm3016 = vcmp.gt.f32.partialorder %v2984, 0.0
        %vm3017 = vcmp.gt.f32.partialorder %v2985, 0.0
        %vm3018 = vcmp.gt.f32.partialorder %v2986, 0.0
        %vm3019 = vcmp.gt.f32.partialorder %v2987, 0.0
        %vm3020 = vcmp.gt.f32.partialorder %v2988, 0.0
        %vm3021 = vcmp.gt.f32.partialorder %v2989, 0.0
        %vm3022 = vcmp.gt.f32.partialorder %v2990, 0.0
        %vm3023 = vcmp.gt.f32.partialorder %v2991, 0.0
        %vm3024 = vcmp.gt.f32.partialorder %v2992, 0.0
        %vm3025 = vcmp.gt.f32.partialorder %v2993, 0.0
        %vm3026 = vcmp.gt.f32.partialorder %v2994, 0.0
        %vm3027 = vcmp.gt.f32.partialorder %v2995, 0.0
        %vm3028 = vcmp.gt.f32.partialorder %v2996, 0.0
        %vm3029 = vcmp.gt.f32.partialorder %v2997, 0.0
        %vm3030 = vcmp.gt.f32.partialorder %v2998, 0.0
        %vm3031 = vcmp.gt.f32.partialorder %v2999, 0.0
        %vm3032 = vcmp.gt.f32.partialorder %v3000, 0.0
        %vm3033 = vcmp.gt.f32.partialorder %v3001, 0.0
        %vm3034 = vcmp.gt.f32.partialorder %v3002, 0.0
        %vm3035 = vcmp.gt.f32.partialorder %v3003, 0.0
        %vm3036 = vcmp.gt.f32.partialorder %v3004, 0.0
        %vm3037 = vcmp.gt.f32.partialorder %v3005, 0.0
        %vm3038 = vcmp.gt.f32.partialorder %v3006, 0.0
        %vm3039 = vcmp.gt.f32.partialorder %v3007, 0.0
        %vm3040 = vcmp.gt.f32.partialorder %v3008, 0.0
        %vm3041 = vcmp.gt.f32.partialorder %v3009, 0.0
        %vm3042 = vcmp.gt.f32.partialorder %v3010, 0.0
        %vm3043 = vcmp.gt.f32.partialorder %v3011, 0.0
        %vm3044 = vcmp.gt.f32.partialorder %v3012, 0.0
        %s3045 = sld [smem:[#allocation2]]
        %v3046 = vstv %s3045
        %v3047 = vmul.f32 %v2981, %v3046
        %v3048 = vmul.f32 %v2982, %v3046
        %v3049 = vmul.f32 %v2983, %v3046
        %v3050 = vmul.f32 %v2984, %v3046
        %v3051 = vmul.f32 %v2985, %v3046
        %v3052 = vmul.f32 %v2986, %v3046
        %v3053 = vmul.f32 %v2987, %v3046
        %v3054 = vmul.f32 %v2988, %v3046
        %v3055 = vmul.f32 %v2989, %v3046
        %v3056 = vmul.f32 %v2990, %v3046
        %v3057 = vmul.f32 %v2991, %v3046
        %v3058 = vmul.f32 %v2992, %v3046
        %v3059 = vmul.f32 %v2993, %v3046
        %v3060 = vmul.f32 %v2994, %v3046
        %v3061 = vmul.f32 %v2995, %v3046
        %v3062 = vmul.f32 %v2996, %v3046
        %v3063 = vmul.f32 %v2997, %v3046
        %v3064 = vmul.f32 %v2998, %v3046
        %v3065 = vmul.f32 %v2999, %v3046
        %v3066 = vmul.f32 %v3000, %v3046
        %v3067 = vmul.f32 %v3001, %v3046
        %v3068 = vmul.f32 %v3002, %v3046
        %v3069 = vmul.f32 %v3003, %v3046
        %v3070 = vmul.f32 %v3004, %v3046
        %v3071 = vmul.f32 %v3005, %v3046
        %v3072 = vmul.f32 %v3006, %v3046
        %v3073 = vmul.f32 %v3007, %v3046
        %v3074 = vmul.f32 %v3008, %v3046
        %v3075 = vmul.f32 %v3009, %v3046
        %v3076 = vmul.f32 %v3010, %v3046
        %v3077 = vmul.f32 %v3011, %v3046
        %v3078 = vmul.f32 %v3012, %v3046
        %v3079 = vsel %vm3013, %v2981, %v3047
        %v3080 = vsel %vm3014, %v2982, %v3048
        %v3081 = vsel %vm3015, %v2983, %v3049
        %v3082 = vsel %vm3016, %v2984, %v3050
        %v3083 = vsel %vm3017, %v2985, %v3051
        %v3084 = vsel %vm3018, %v2986, %v3052
        %v3085 = vsel %vm3019, %v2987, %v3053
        %v3086 = vsel %vm3020, %v2988, %v3054
        %v3087 = vsel %vm3021, %v2989, %v3055
        %v3088 = vsel %vm3022, %v2990, %v3056
        %v3089 = vsel %vm3023, %v2991, %v3057
        %v3090 = vsel %vm3024, %v2992, %v3058
        %v3091 = vsel %vm3025, %v2993, %v3059
        %v3092 = vsel %vm3026, %v2994, %v3060
        %v3093 = vsel %vm3027, %v2995, %v3061
        %v3094 = vsel %vm3028, %v2996, %v3062
        %v3095 = vsel %vm3029, %v2997, %v3063
        %v3096 = vsel %vm3030, %v2998, %v3064
        %v3097 = vsel %vm3031, %v2999, %v3065
        %v3098 = vsel %vm3032, %v3000, %v3066
        %v3099 = vsel %vm3033, %v3001, %v3067
        %v3100 = vsel %vm3034, %v3002, %v3068
        %v3101 = vsel %vm3035, %v3003, %v3069
        %v3102 = vsel %vm3036, %v3004, %v3070
        %v3103 = vsel %vm3037, %v3005, %v3071
        %v3104 = vsel %vm3038, %v3006, %v3072
        %v3105 = vsel %vm3039, %v3007, %v3073
        %v3106 = vsel %vm3040, %v3008, %v3074
        %v3107 = vsel %vm3041, %v3009, %v3075
        %v3108 = vsel %vm3042, %v3010, %v3076
        %v3109 = vsel %vm3043, %v3011, %v3077
        %v3110 = vsel %vm3044, %v3012, %v3078
        %vm3111 = vcmask 261120
        %3112 = vst.msk [vmem:[%s205 + $0x8] sm:$0xff] %vm3111, %v3079
        %3113 = vst.msk [vmem:[%s205 + $0x18] sm:$0xff] %vm3111, %v3080
        %3114 = vst.msk [vmem:[%s205 + $0x28] sm:$0xff] %vm3111, %v3081
        %3115 = vst.msk [vmem:[%s205 + $0x38] sm:$0xff] %vm3111, %v3082
        %3116 = vst.msk [vmem:[%s205 + $0x48] sm:$0xff] %vm3111, %v3083
        %3117 = vst.msk [vmem:[%s205 + $0x58] sm:$0xff] %vm3111, %v3084
        %3118 = vst.msk [vmem:[%s205 + $0x68] sm:$0xff] %vm3111, %v3085
        %3119 = vst.msk [vmem:[%s205 + $0x78] sm:$0xff] %vm3111, %v3086
        %3120 = vst.msk [vmem:[%s205 + $0x88] sm:$0xff] %vm3111, %v3087
        %3121 = vst.msk [vmem:[%s205 + $0x98] sm:$0xff] %vm3111, %v3088
        %3122 = vst.msk [vmem:[%s205 + $0xa8] sm:$0xff] %vm3111, %v3089
        %3123 = vst.msk [vmem:[%s205 + $0xb8] sm:$0xff] %vm3111, %v3090
        %3124 = vst.msk [vmem:[%s205 + $0xc8] sm:$0xff] %vm3111, %v3091
        %3125 = vst.msk [vmem:[%s205 + $0xd8] sm:$0xff] %vm3111, %v3092
        %3126 = vst.msk [vmem:[%s205 + $0xe8] sm:$0xff] %vm3111, %v3093
        %3127 = vst.msk [vmem:[%s205 + $0xf8] sm:$0xff] %vm3111, %v3094
        %3128 = vst.msk [vmem:[%s205 + $0x108] sm:$0xff] %vm3111, %v3095
        %3129 = vst.msk [vmem:[%s205 + $0x118] sm:$0xff] %vm3111, %v3096
        %3130 = vst.msk [vmem:[%s205 + $0x128] sm:$0xff] %vm3111, %v3097
        %3131 = vst.msk [vmem:[%s205 + $0x138] sm:$0xff] %vm3111, %v3098
        %3132 = vst.msk [vmem:[%s205 + $0x148] sm:$0xff] %vm3111, %v3099
        %3133 = vst.msk [vmem:[%s205 + $0x158] sm:$0xff] %vm3111, %v3100
        %3134 = vst.msk [vmem:[%s205 + $0x168] sm:$0xff] %vm3111, %v3101
        %3135 = vst.msk [vmem:[%s205 + $0x178] sm:$0xff] %vm3111, %v3102
        %3136 = vst.msk [vmem:[%s205 + $0x188] sm:$0xff] %vm3111, %v3103
        %3137 = vst.msk [vmem:[%s205 + $0x198] sm:$0xff] %vm3111, %v3104
        %3138 = vst.msk [vmem:[%s205 + $0x1a8] sm:$0xff] %vm3111, %v3105
        %3139 = vst.msk [vmem:[%s205 + $0x1b8] sm:$0xff] %vm3111, %v3106
        %3140 = vst.msk [vmem:[%s205 + $0x1c8] sm:$0xff] %vm3111, %v3107
        %3141 = vst.msk [vmem:[%s205 + $0x1d8] sm:$0xff] %vm3111, %v3108
        %3142 = vst.msk [vmem:[%s205 + $0x1e8] sm:$0xff] %vm3111, %v3109
        %3143 = vst.msk [vmem:[%s205 + $0x1f8] sm:$0xff] %vm3111, %v3110
        %s3144 = sand.u32 %s130, 1
        %s3145 = scalar_lea.sflag [#allocation4], %s3144
        %s3146 = sand.u32 %s130, 1
        %s3147 = smul.addr %s3146, 512
        %s3148 = scalar_lea.vmem [#allocation3], %s3147
        // Predicated region
        $region37: #{tpu_custom_call.1} parent=35 // pred_check
          %p3149 = pneg %p140
        $region38: #{tpu_custom_call.1} parent=35 // pred_check_branch
          %3151 = sbr.rel (%p3149) target = $region40
        $region39: #{tpu_custom_call.1} parent=35 // pred_region
          %s3152 = smul.u32 8, %s24
          %s3154 = ssub.s32 8192, 8192
          %3155 = vsyncadd %s3145, %s3154
          %s3156 = smul.addr %s3152, 8
          %s3157 = smul.addr %s23, 256
          %s3158 = sadd.s32 %s3156, %s3157
          %s3159 = smul.addr %s3158, 128
          %s3160 = scalar_lea.hbm %s4, %s3159
          %s3161 = sshll.u32 %s3148, 4
          %s3162 = int_to_ptr.vmem [resolvable:$true] %s3161
          %3167 = dma.vmem_to_hbm [thread:$0]  %s3162, 8192, %s3160, %s3145, 256, 256, 16
        $region40: #{tpu_custom_call.1} parent=35 // pred_fallthru
          _
      $region36: #{tpu_custom_call.1} parent=5 // pred_fallthru
        _
      %p3168 = scmp.le.s32.totalorder 2, %s14
      // Predicated region
      $region41: #{tpu_custom_call.1} parent=5 // pred_check
        %p3169 = pneg %p3168
      $region42: #{tpu_custom_call.1} parent=5 // pred_check_branch
        %3171 = sbr.rel (%p3169) target = $region44
      $region43: #{tpu_custom_call.1} parent=5 // pred_region
        %s3172 = ssub.s32 %s14, 2
        // Predicated region
        $region45: #{tpu_custom_call.1} parent=43 // pred_check
          %p3173 = pneg %p146
        $region46: #{tpu_custom_call.1} parent=43 // pred_check_branch
          %3175 = sbr.rel (%p3173) target = $region48
        $region47: #{tpu_custom_call.1} parent=43 // pred_region
          %s3176 = sand.u32 %s131, 1
          %s3177 = scalar_lea.sflag [#allocation4], %s3176
          %s3178 = sand.u32 %s131, 1
          %s3179 = smul.addr %s3178, 512
          %s3180 = scalar_lea.vmem [#allocation3], %s3179
          %3181 = dma.done %s3177, 8192
        $region48: #{tpu_custom_call.1} parent=43 // pred_fallthru
          _
      $region44: #{tpu_custom_call.1} parent=5 // pred_fallthru
        _
    $region6: #{tpu_custom_call.1} parent=1 // loop_footer
      %s18 = sadd.s32 1, %s14
    $region7: #{tpu_custom_call.1} parent=1 // loop_footer_branch
      %13 = sbr.rel target = $region3
    $region8: #{tpu_custom_call.1} parent=1 // loop_exit
      _
    %3182 = vsyncpa [#allocation4], 1
    %s3183 = scalar_lea.sflag [#allocation4], 1
    %3184 = vsyncpa %s3183, 1

</llo_original>
